<compile_context>
chip_gen: v7x
topology: tpu7x:2x2x1
jax: 0.10.0
libtpu: 0.0.40
codegen_flags: <defaults>
</compile_context>

<pallas_src>
import functools
import math

import jax
import jax.numpy as jnp
from jax.experimental import pallas as pl
from jax.experimental.pallas import tpu as pltpu

_VMEM_BUDGET = 24 * 1024 * 1024  # per-call double-buffered working set (fits v5e/v6e/v7x)


# --------------------------------------------------------------------------- helpers
def _pick_tile(dim, target, align):
    """Largest tile <= target that divides `dim` and is a multiple of `align`
    (or the full dim when dim <= target)."""
    if dim <= target:
        return dim
    t = (target // align) * align
    while t >= align:
        if dim % t == 0:
            return t
        t -= align
    return dim


def _halve(t, dim, align):
    h = t // 2
    if h >= align and h % align == 0 and dim % h == 0:
        return h
    return t


def _rows_tile(m, target):
    """Row tile; if the row axis would collapse to one block, split it in two
    so both v7x TensorCores get work on the 'parallel' axis."""
    tm = _pick_tile(m, target, 8)
    if m // tm < 2 and m >= 16 and (m // 2) % 8 == 0:
        tm = m // 2
    return tm


def _head_group_size(heads, dim_per_head):
    """Smallest number of whole heads whose packed column width is a multiple
    of 128 -> lane-dense, (8,128)-aligned attention blocks and unmasked stores."""
    for hpg in range(1, heads + 1):
        if heads % hpg == 0 and (hpg * dim_per_head) % 128 == 0:
            return hpg
    raise NotImplementedError(
        "head_count * dim_per_head layout must allow a 128-aligned head group")


def _compiler_params(dim_sems, vmem_need_bytes):
    limit = int(min(max(int(vmem_need_bytes) + (8 << 20), 32 << 20), 96 << 20))
    return pltpu.CompilerParams(dimension_semantics=dim_sems,
                                vmem_limit_bytes=limit)


def _gelu(x):
    # tanh-approximate GELU (the module's act_fn is fixed to this choice here).
    c = math.sqrt(2.0 / math.pi)
    return 0.5 * x * (1.0 + jnp.tanh(c * (x + 0.044715 * x * x * x)))


def _layernorm_rows(y, gamma, beta, eps):
    """Spec LayerNorm: unbiased std (divide by D-1), eps added to std — matches
    the hand-rolled LayerNorm class in the reference module."""
    d = y.shape[-1]
    mean = jnp.mean(y, axis=-1, keepdims=True)
    diff = y - mean
    var = jnp.sum(diff * diff, axis=-1, keepdims=True) / (d - 1)
    return gamma * diff / (jnp.sqrt(var) + eps) + beta


# --------------------------------------------------------------------------- QKV projection
def _linear_kernel(x_ref, w_ref, b_ref, o_ref, acc_ref):
    k = pl.program_id(2)

    @pl.when(k == 0)
    def _():
        # Fold the bias into the accumulator init (no separate epilogue add).
        acc_ref[...] = jnp.broadcast_to(b_ref[...].astype(jnp.float32), acc_ref.shape)

    acc_ref[...] += jnp.dot(x_ref[...], w_ref[...], preferred_element_type=jnp.float32)

    @pl.when(k == pl.num_programs(2) - 1)
    def _():
        o_ref[...] = acc_ref[...].astype(o_ref.dtype)


def qkv_projection(x, w, b):
    """y = x @ [Wq|Wk|Wv] + b  -> packed (B*S, 3*D) buffer."""
    M, K = x.shape
    N = w.shape[1]
    itemsize = x.dtype.itemsize
    tm = _rows_tile(M, 512)
    tn = _pick_tile(N, 512, 128)
    tk = _pick_tile(K, 512, 128)

    def fp(tm_, tn_, tk_):
        return 2 * (tm_ * tk_ + tk_ * tn_ + tn_ + tm_ * tn_) * itemsize + tm_ * tn_ * 4

    while fp(tm, tn, tk) > _VMEM_BUDGET:
        if _halve(tk, K, 128) != tk:
            tk = _halve(tk, K, 128)
        elif _halve(tn, N, 128) != tn:
            tn = _halve(tn, N, 128)
        elif _halve(tm, M, 8) != tm:
            tm = _halve(tm, M, 8)
        else:
            break

    grid = (M // tm, N // tn, K // tk)
    return pl.pallas_call(
        _linear_kernel,
        out_shape=jax.ShapeDtypeStruct((M, N), x.dtype),
        grid_spec=pltpu.PrefetchScalarGridSpec(
            num_scalar_prefetch=0,
            grid=grid,
            in_specs=[
                pl.BlockSpec((tm, tk), lambda i, j, k: (i, k)),
                pl.BlockSpec((tk, tn), lambda i, j, k: (k, j)),
                pl.BlockSpec((1, tn), lambda i, j, k: (0, j)),
            ],
            out_specs=pl.BlockSpec((tm, tn), lambda i, j, k: (i, j)),
            scratch_shapes=[pltpu.VMEM((tm, tn), jnp.float32)],
        ),
        compiler_params=_compiler_params(("parallel", "parallel", "arbitrary"),
                                         fp(tm, tn, tk)),
    )(x, w, b)


# --------------------------------------------------------------------------- attention
def _attn_kernel(q_ref, k_ref, v_ref, o_ref, m_sc, l_sc, acc_sc, *, heads_per_group):
    ki = pl.program_id(3)
    gw = q_ref.shape[-1]
    dh = gw // heads_per_group

    @pl.when(ki == 0)
    def _():
        m_sc[...] = jnp.full(m_sc.shape, -jnp.inf, dtype=m_sc.dtype)
        l_sc[...] = jnp.zeros(l_sc.shape, dtype=l_sc.dtype)
        acc_sc[...] = jnp.zeros(acc_sc.shape, dtype=acc_sc.dtype)

    # Online softmax per head.  The 1/sqrt(dh) scale is already folded into the
    # Q projection weights, so there is no per-step (tq, tk) multiply here.
    for h in range(heads_per_group):
        sl = slice(h * dh, (h + 1) * dh)
        s = jnp.einsum("qd,kd->qk", q_ref[:, sl], k_ref[:, sl],
                       preferred_element_type=jnp.float32)
        m_prev = m_sc[h]
        m_new = jnp.maximum(m_prev, s.max(-1, keepdims=True))
        alpha = jnp.exp(m_prev - m_new)
        p = jnp.exp(s - m_new)
        l_sc[h] = alpha * l_sc[h] + p.sum(-1, keepdims=True)
        acc_sc[h] = alpha * acc_sc[h] + jnp.einsum(
            "qk,kd->qd", p.astype(v_ref.dtype), v_ref[:, sl],
            preferred_element_type=jnp.float32)
        m_sc[h] = m_new

    @pl.when(ki == pl.num_programs(3) - 1)
    def _():
        for h in range(heads_per_group):
            sl = slice(h * dh, (h + 1) * dh)
            inv = pl.reciprocal(l_sc[h], approx=False)
            o_ref[:, sl] = (acc_sc[h] * inv).astype(o_ref.dtype)


def attention(qkv, batch, seq, d_model, heads):
    """Flash attention directly on the packed (B*S, 3*D) qkv buffer.

    Q/K/V and the head group are selected with BlockSpec column offsets
    (0, D, 2*D plus a head-group offset), so no JAX-level slicing or head
    transposes and no extra HBM round trips; the context is written back
    already in (B*S, D) layout.
    """
    # TODO(synk): attention mask (masked_fill) path not implemented; mask=None assumed.
    M = batch * seq
    D = d_model
    dh = D // heads
    hpg = _head_group_size(heads, dh)
    gw = hpg * dh                    # packed head-group width (multiple of 128)
    ng = D // gw                     # number of head groups
    itemsize = qkv.dtype.itemsize

    tq = _pick_tile(seq, 256, 8)
    tk = _pick_tile(seq, 256, 8)

    def fp(tq_, tk_):
        blocks = 2 * tq_ * gw + 2 * tk_ * gw
        scratch = hpg * tq_ * (dh + 2) * 4
        return 2 * blocks * itemsize + scratch

    while fp(tq, tk) > _VMEM_BUDGET:
        if _halve(tk, seq, 8) != tk:
            tk = _halve(tk, seq, 8)
        elif _halve(tq, seq, 8) != tq:
            tq = _halve(tq, seq, 8)
        else:
            break

    nq, nk = seq // tq, seq // tk
    grid = (batch, ng, nq, nk)
    kernel = functools.partial(_attn_kernel, heads_per_group=hpg)

    return pl.pallas_call(
        kernel,
        out_shape=jax.ShapeDtypeStruct((M, D), qkv.dtype),
        grid_spec=pltpu.PrefetchScalarGridSpec(
            num_scalar_prefetch=0,
            grid=grid,
            in_specs=[
                pl.BlockSpec((tq, gw), lambda b, g, qi, ki: (b * nq + qi, g)),
                pl.BlockSpec((tk, gw), lambda b, g, qi, ki: (b * nk + ki, ng + g)),
                pl.BlockSpec((tk, gw), lambda b, g, qi, ki: (b * nk + ki, 2 * ng + g)),
            ],
            out_specs=pl.BlockSpec((tq, gw), lambda b, g, qi, ki: (b * nq + qi, g)),
            scratch_shapes=[
                pltpu.VMEM((hpg, tq, 1), jnp.float32),
                pltpu.VMEM((hpg, tq, 1), jnp.float32),
                pltpu.VMEM((hpg, tq, dh), jnp.float32),
            ],
        ),
        compiler_params=_compiler_params(
            ("parallel", "parallel", "parallel", "arbitrary"), fp(tq, tk)),
    )(qkv, qkv, qkv)


# --------------------------------------------------------------------------- ctx projection + residual + LN
def _proj_ln_kernel(ctx_ref, w_ref, b_ref, res_ref, g_ref, bln_ref, o_ref, acc_ref, *, eps):
    k = pl.program_id(1)

    @pl.when(k == 0)
    def _():
        acc_ref[...] = jnp.broadcast_to(b_ref[...].astype(jnp.float32), acc_ref.shape)

    acc_ref[...] += jnp.dot(ctx_ref[...], w_ref[...], preferred_element_type=jnp.float32)

    @pl.when(k == pl.num_programs(1) - 1)
    def _():
        y = acc_ref[...] + res_ref[...].astype(jnp.float32)
        out = _layernorm_rows(y, g_ref[...].astype(jnp.float32),
                              bln_ref[...].astype(jnp.float32), eps)
        o_ref[...] = out.astype(o_ref.dtype)


def proj_residual_ln(ctx, w, b, res, gamma, beta, eps):
    """res1 = LayerNorm(res + ctx @ w + b): residual + LN fused into the
    k==last epilogue; the output row (tn == D) stays fully resident."""
    M, K = ctx.shape
    D = w.shape[1]
    itemsize = ctx.dtype.itemsize
    tm = _rows_tile(M, 256)
    tk = _pick_tile(K, 512, 128)

    def fp(tm_, tk_):
        return 2 * (tm_ * tk_ + tk_ * D + 2 * tm_ * D + 3 * D) * itemsize + tm_ * D * 4

    while fp(tm, tk) > _VMEM_BUDGET:
        if _halve(tk, K, 128) != tk:
            tk = _halve(tk, K, 128)
        elif _halve(tm, M, 8) != tm:
            tm = _halve(tm, M, 8)
        else:
            break

    grid = (M // tm, K // tk)
    kernel = functools.partial(_proj_ln_kernel, eps=eps)
    return pl.pallas_call(
        kernel,
        out_shape=jax.ShapeDtypeStruct((M, D), ctx.dtype),
        grid_spec=pltpu.PrefetchScalarGridSpec(
            num_scalar_prefetch=0,
            grid=grid,
            in_specs=[
                pl.BlockSpec((tm, tk), lambda i, k: (i, k)),
                pl.BlockSpec((tk, D), lambda i, k: (k, 0)),
                pl.BlockSpec((1, D), lambda i, k: (0, 0)),
                pl.BlockSpec((tm, D), lambda i, k: (i, 0)),
                pl.BlockSpec((1, D), lambda i, k: (0, 0)),
                pl.BlockSpec((1, D), lambda i, k: (0, 0)),
            ],
            out_specs=pl.BlockSpec((tm, D), lambda i, k: (i, 0)),
            scratch_shapes=[pltpu.VMEM((tm, D), jnp.float32)],
        ),
        compiler_params=_compiler_params(("parallel", "arbitrary"), fp(tm, tk)),
    )(ctx, w, b, res, gamma, beta)


# --------------------------------------------------------------------------- fused FFN + residual + LN
def _ffn_ln_kernel(x_ref, w1_ref, b1_ref, w2_ref, b2_ref, g_ref, bln_ref, o_ref,
                   acc_ref, *, eps):
    f = pl.program_id(1)

    @pl.when(f == 0)
    def _():
        acc_ref[...] = jnp.broadcast_to(b2_ref[...].astype(jnp.float32), acc_ref.shape)

    x = x_ref[...]
    h = jnp.dot(x, w1_ref[...], preferred_element_type=jnp.float32)
    h = _gelu(h + b1_ref[...].astype(jnp.float32))
    # Cast the intermediate back to the activation dtype so the second matmul
    # runs at native MXU precision (bf16 in / f32 accumulate when x is bf16).
    acc_ref[...] += jnp.dot(h.astype(x.dtype), w2_ref[...],
                            preferred_element_type=jnp.float32)

    @pl.when(f == pl.num_programs(1) - 1)
    def _():
        y = acc_ref[...] + x_ref[...].astype(jnp.float32)  # residual is the same input block
        out = _layernorm_rows(y, g_ref[...].astype(jnp.float32),
                              bln_ref[...].astype(jnp.float32), eps)
        o_ref[...] = out.astype(o_ref.dtype)


def ffn_residual_ln(x, w1, b1, w2, b2, gamma, beta, eps):
    """out = LayerNorm(x + gelu(x @ w1 + b1) @ w2 + b2).
    d_ff is the reduction grid axis, so the (tm, tf) intermediate never leaves
    VMEM; residual + LN run in the f==last epilogue."""
    # TODO(synk): for very large d_model, the D axis of w1/w2 should also be tiled.
    M, D = x.shape
    F = w1.shape[1]
    itemsize = x.dtype.itemsize
    tm = _rows_tile(M, 256)
    tf = _pick_tile(F, 512, 128)

    def fp(tm_, tf_):
        return 2 * (2 * tm_ * D + 2 * D * tf_ + tf_ + 3 * D) * itemsize + tm_ * D * 4

    while fp(tm, tf) > _VMEM_BUDGET:
        if _halve(tf, F, 128) != tf:
            tf = _halve(tf, F, 128)
        elif _halve(tm, M, 8) != tm:
            tm = _halve(tm, M, 8)
        else:
            break

    grid = (M // tm, F // tf)
    kernel = functools.partial(_ffn_ln_kernel, eps=eps)
    return pl.pallas_call(
        kernel,
        out_shape=jax.ShapeDtypeStruct((M, D), x.dtype),
        grid_spec=pltpu.PrefetchScalarGridSpec(
            num_scalar_prefetch=0,
            grid=grid,
            in_specs=[
                pl.BlockSpec((tm, D), lambda i, f: (i, 0)),
                pl.BlockSpec((D, tf), lambda i, f: (0, f)),
                pl.BlockSpec((1, tf), lambda i, f: (0, f)),
                pl.BlockSpec((tf, D), lambda i, f: (f, 0)),
                pl.BlockSpec((1, D), lambda i, f: (0, 0)),
                pl.BlockSpec((1, D), lambda i, f: (0, 0)),
                pl.BlockSpec((1, D), lambda i, f: (0, 0)),
            ],
            out_specs=pl.BlockSpec((tm, D), lambda i, f: (i, 0)),
            scratch_shapes=[pltpu.VMEM((tm, D), jnp.float32)],
        ),
        compiler_params=_compiler_params(("parallel", "arbitrary"), fp(tm, tf)),
    )(x, w1, b1, w2, b2, gamma, beta)


# --------------------------------------------------------------------------- full block forward
def prepare_params(raw, head_count):
    """Build the fused kernel parameter dict from per-matrix weights.
    Weights are stored (dim_in, dim_out); the softmax scale 1/sqrt(Dh) is
    folded into the Q columns of the packed QKV projection (one-time prep)."""
    D = raw["wq"].shape[0]
    dh = D // head_count
    scale = 1.0 / math.sqrt(float(dh))
    return {
        "w_qkv": jnp.concatenate([raw["wq"] * scale, raw["wk"], raw["wv"]], axis=1),
        "b_qkv": jnp.concatenate([raw["bq"] * scale, raw["bk"], raw["bv"]])[None, :],
        "w_ctx": raw["w_ctx"], "b_ctx": raw["b_ctx"][None, :],
        "w_ff1": raw["w_ff1"], "b_ff1": raw["b_ff1"][None, :],
        "w_ff2": raw["w_ff2"], "b_ff2": raw["b_ff2"][None, :],
        "ln1_g": raw["ln1_g"][None, :], "ln1_b": raw["ln1_b"][None, :],
        "ln2_g": raw["ln2_g"][None, :], "ln2_b": raw["ln2_b"][None, :],
    }


def transformer_encoder_block(inp, params, head_count, eps=1e-6, mask=None):
    """Forward of TransformerEncoderBlock (inference: dropout = identity)."""
    if mask is not None:
        # TODO(synk): masked_fill attention path not implemented.
        raise NotImplementedError("mask is not supported by this Pallas kernel")
    B, S, D = inp.shape
    x = inp.reshape(B * S, D)

    qkv = qkv_projection(x, params["w_qkv"], params["b_qkv"])            # (B*S, 3D)
    ctx = attention(qkv, B, S, D, head_count)                            # (B*S, D)
    res1 = proj_residual_ln(ctx, params["w_ctx"], params["b_ctx"], x,
                            params["ln1_g"], params["ln1_b"], eps)       # (B*S, D)
    out = ffn_residual_ln(res1, params["w_ff1"], params["b_ff1"],
                          params["w_ff2"], params["b_ff2"],
                          params["ln2_g"], params["ln2_b"], eps)         # (B*S, D)
    return out.reshape(B, S, D)


# --------------------------------------------------------------------------- pure-JAX reference
def _ref_forward(inp, rp, head_count, eps):
    B, S, D = inp.shape
    H, dh = head_count, D // head_count
    x = inp.reshape(B * S, D)
    q = x @ rp["wq"] + rp["bq"]
    k = x @ rp["wk"] + rp["bk"]
    v = x @ rp["wv"] + rp["bv"]

    def heads(t):
        return t.reshape(B, S, H, dh).transpose(0, 2, 1, 3)

    q, k, v = heads(q), heads(k), heads(v)
    s = jnp.einsum("bhqd,bhkd->bhqk", q, k) / math.sqrt(float(dh))
    attn = jax.nn.softmax(s, axis=-1)
    ctx = jnp.einsum("bhqk,bhkd->bhqd", attn, v)
    ctx = ctx.transpose(0, 2, 1, 3).reshape(B * S, D)
    ctx = ctx @ rp["w_ctx"] + rp["b_ctx"]

    def ln(y, g, b):
        mean = y.mean(-1, keepdims=True)
        var = ((y - mean) ** 2).sum(-1, keepdims=True) / (y.shape[-1] - 1)
        return g * (y - mean) / (jnp.sqrt(var) + eps) + b

    res1 = ln(x + ctx, rp["ln1_g"], rp["ln1_b"])
    h = _gelu(res1 @ rp["w_ff1"] + rp["b_ff1"])
    ffn = h @ rp["w_ff2"] + rp["b_ff2"]
    res2 = ln(ffn + res1, rp["ln2_g"], rp["ln2_b"])
    return res2.reshape(B, S, D)


# --------------------------------------------------------------------------- example run
if __name__ == "__main__":
    # Small but lane-dense example: dim_proj=128, heads=4 (dim_per_head=32), dim_FNN=256.
    B, S, D, H, F = 2, 8, 128, 4, 256
    eps = 1e-6

    key = jax.random.PRNGKey(0)
    keys = jax.random.split(key, 13)

    def linear_params(kw, kb, din, dout):
        bound = 1.0 / math.sqrt(din)
        w = jax.random.uniform(kw, (din, dout), jnp.float32, minval=-bound, maxval=bound)
        b = jax.random.uniform(kb, (dout,), jnp.float32, minval=-bound, maxval=bound)
        return w, b

    wq, bq = linear_params(keys[0], keys[1], D, D)
    wk, bk = linear_params(keys[2], keys[3], D, D)
    wv, bv = linear_params(keys[4], keys[5], D, D)
    w_ctx, b_ctx = linear_params(keys[6], keys[7], D, D)
    w_ff1, b_ff1 = linear_params(keys[8], keys[9], D, F)
    w_ff2, b_ff2 = linear_params(keys[10], keys[11], F, D)

    raw = {
        "wq": wq, "bq": bq, "wk": wk, "bk": bk, "wv": wv, "bv": bv,
        "w_ctx": w_ctx, "b_ctx": b_ctx,
        "w_ff1": w_ff1, "b_ff1": b_ff1, "w_ff2": w_ff2, "b_ff2": b_ff2,
        "ln1_g": jnp.ones((D,), jnp.float32), "ln1_b": jnp.zeros((D,), jnp.float32),
        "ln2_g": jnp.ones((D,), jnp.float32), "ln2_b": jnp.zeros((D,), jnp.float32),
    }
    params = prepare_params(raw, H)
    inp = jax.random.normal(keys[12], (B, S, D), jnp.float32)

    fwd = jax.jit(functools.partial(transformer_encoder_block, head_count=H, eps=eps))
    out = jax.block_until_ready(fwd(inp, params))

    ref = _ref_forward(inp, raw, H, eps)
    assert out.shape == (B, S, D)
    max_err = float(jnp.max(jnp.abs(out - ref)))
    assert jnp.allclose(out, ref, atol=1e-4, rtol=1e-4), max_err

    print("KERNEL_OK")
</pallas_src>

<mosaic_0001>
module attributes {stable_mosaic.version = 11 : i64} {
  func.func @_proj_ln_kernel(%arg0: i32, %arg1: i32, %arg2: memref<8x128xf32, #tpu.memory_space<vmem>>, %arg3: memref<128x128xf32, #tpu.memory_space<vmem>>, %arg4: memref<1x128xf32, #tpu.memory_space<vmem>>, %arg5: memref<8x128xf32, #tpu.memory_space<vmem>>, %arg6: memref<1x128xf32, #tpu.memory_space<vmem>>, %arg7: memref<1x128xf32, #tpu.memory_space<vmem>>, %arg8: memref<8x128xf32, #tpu.memory_space<vmem>>, %arg9: memref<8x128xf32, #tpu.memory_space<vmem>>) attributes {dimension_semantics = [#tpu.dimension_semantics<parallel>, #tpu.dimension_semantics<arbitrary>], iteration_bounds = array<i64: 2, 1>, scalar_prefetch = 0 : i64, scratch_operands = 1 : i64, tpu.core_type = #tpu.core_type<tc>, window_params = [{transform_indices = @transform_0, window_bounds = array<i64: 8, 128>}, {transform_indices = @transform_1, window_bounds = array<i64: 128, 128>}, {pipeline_mode = #tpu.pipeline_mode<synchronous>, transform_indices = @transform_2, window_bounds = array<i64: 1, 128>}, {transform_indices = @transform_3, window_bounds = array<i64: 8, 128>}, {pipeline_mode = #tpu.pipeline_mode<synchronous>, transform_indices = @transform_4, window_bounds = array<i64: 1, 128>}, {pipeline_mode = #tpu.pipeline_mode<synchronous>, transform_indices = @transform_5, window_bounds = array<i64: 1, 128>}, {transform_indices = @transform_6, window_bounds = array<i64: 8, 128>}]} {
    %c0_i32 = arith.constant 0 : i32
    %0 = arith.cmpi eq, %arg1, %c0_i32 : i32
    %1 = arith.extui %0 : i1 to i32
    %c0_i32_0 = arith.constant 0 : i32
    %2 = arith.cmpi ne, %1, %c0_i32_0 : i32
    scf.if %2 {
      %c0_10 = arith.constant 0 : index
      %c0_11 = arith.constant 0 : index
      %12 = vector.load %arg4[%c0_10, %c0_11] : memref<1x128xf32, #tpu.memory_space<vmem>>, vector<1x128xf32>
      %13 = vector.shape_cast %12 : vector<1x128xf32> to vector<1x128xf32>
      %14 = vector.broadcast %13 : vector<1x128xf32> to vector<8x128xf32>
      %c0_12 = arith.constant 0 : index
      %c0_13 = arith.constant 0 : index
      %15 = vector.load %arg9[%c0_12, %c0_13] : memref<8x128xf32, #tpu.memory_space<vmem>>, vector<8x128xf32>
      tpu.vector_store %arg9[%c0_12, %c0_13], %14 {strides = array<i32>} : memref<8x128xf32, #tpu.memory_space<vmem>>, vector<8x128xf32>,
    } else {
    }
    %c0 = arith.constant 0 : index
    %c0_1 = arith.constant 0 : index
    %3 = vector.load %arg9[%c0, %c0_1] : memref<8x128xf32, #tpu.memory_space<vmem>>, vector<8x128xf32>
    %c0_2 = arith.constant 0 : index
    %c0_3 = arith.constant 0 : index
    %4 = vector.load %arg2[%c0_2, %c0_3] : memref<8x128xf32, #tpu.memory_space<vmem>>, vector<8x128xf32>
    %c0_4 = arith.constant 0 : index
    %c0_5 = arith.constant 0 : index
    %5 = vector.load %arg3[%c0_4, %c0_5] : memref<128x128xf32, #tpu.memory_space<vmem>>, vector<128x128xf32>
    %cst = arith.constant dense<0.000000e+00> : vector<8x128xf32>
    %6 = tpu.matmul %4, %5, %cst {dimension_numbers = #tpu.dot_dimension_numbers<[1], [0], [0], [1], [0, 0, 1, 1], [], []>} : vector<8x128xf32>, vector<128x128xf32>, vector<8x128xf32> -> vector<8x128xf32>
    %7 = arith.addf %3, %6 : vector<8x128xf32>
    %c0_6 = arith.constant 0 : index
    %c0_7 = arith.constant 0 : index
    %8 = vector.load %arg9[%c0_6, %c0_7] : memref<8x128xf32, #tpu.memory_space<vmem>>, vector<8x128xf32>
    tpu.vector_store %arg9[%c0_6, %c0_7], %7 {strides = array<i32>} : memref<8x128xf32, #tpu.memory_space<vmem>>, vector<8x128xf32>,
    %c0_i32_8 = arith.constant 0 : i32
    %9 = arith.cmpi eq, %arg1, %c0_i32_8 : i32
    %10 = arith.extui %9 : i1 to i32
    %c0_i32_9 = arith.constant 0 : i32
    %11 = arith.cmpi ne, %10, %c0_i32_9 : i32
    scf.if %11 {
      %c0_10 = arith.constant 0 : index
      %c0_11 = arith.constant 0 : index
      %12 = vector.load %arg9[%c0_10, %c0_11] : memref<8x128xf32, #tpu.memory_space<vmem>>, vector<8x128xf32>
      %c0_12 = arith.constant 0 : index
      %c0_13 = arith.constant 0 : index
      %13 = vector.load %arg5[%c0_12, %c0_13] : memref<8x128xf32, #tpu.memory_space<vmem>>, vector<8x128xf32>
      %14 = arith.addf %12, %13 : vector<8x128xf32>
      %c0_14 = arith.constant 0 : index
      %c0_15 = arith.constant 0 : index
      %15 = vector.load %arg6[%c0_14, %c0_15] : memref<1x128xf32, #tpu.memory_space<vmem>>, vector<1x128xf32>
      %c0_16 = arith.constant 0 : index
      %c0_17 = arith.constant 0 : index
      %16 = vector.load %arg7[%c0_16, %c0_17] : memref<1x128xf32, #tpu.memory_space<vmem>>, vector<1x128xf32>
      %cst_18 = arith.constant dense<0.000000e+00> : vector<8xf32>
      %17 = vector.multi_reduction <add>, %14, %cst_18 [1] : vector<8x128xf32> to vector<8xf32>
      %18 = vector.shape_cast %17 : vector<8xf32> to vector<8x1xf32>
      %cst_19 = arith.constant 1.280000e+02 : f32
      %19 = vector.broadcast %cst_19 : f32 to vector<8x1xf32>
      %20 = arith.divf %18, %19 : vector<8x1xf32>
      %21 = vector.broadcast %20 : vector<8x1xf32> to vector<8x128xf32>
      %22 = arith.subf %14, %21 : vector<8x128xf32>
      %23 = arith.mulf %22, %22 : vector<8x128xf32>
      %cst_20 = arith.constant dense<0.000000e+00> : vector<8xf32>
      %24 = vector.multi_reduction <add>, %23, %cst_20 [1] : vector<8x128xf32> to vector<8xf32>
      %25 = vector.shape_cast %24 : vector<8xf32> to vector<8x1xf32>
      %cst_21 = arith.constant 1.270000e+02 : f32
      %26 = vector.broadcast %cst_21 : f32 to vector<8x1xf32>
      %27 = arith.divf %25, %26 : vector<8x1xf32>
      %28 = vector.broadcast %15 : vector<1x128xf32> to vector<8x128xf32>
      %29 = arith.mulf %28, %22 : vector<8x128xf32>
      %30 = math.sqrt %27 : vector<8x1xf32>
      %cst_22 = arith.constant 9.99999997E-7 : f32
      %31 = vector.broadcast %cst_22 : f32 to vector<8x1xf32>
      %32 = arith.addf %30, %31 : vector<8x1xf32>
      %33 = vector.broadcast %32 : vector<8x1xf32> to vector<8x128xf32>
      %34 = arith.divf %29, %33 : vector<8x128xf32>
      %35 = vector.broadcast %16 : vector<1x128xf32> to vector<8x128xf32>
      %36 = arith.addf %34, %35 : vector<8x128xf32>
      %c0_23 = arith.constant 0 : index
      %c0_24 = arith.constant 0 : index
      %37 = vector.load %arg8[%c0_23, %c0_24] : memref<8x128xf32, #tpu.memory_space<vmem>>, vector<8x128xf32>
      tpu.vector_store %arg8[%c0_23, %c0_24], %36 {strides = array<i32>} : memref<8x128xf32, #tpu.memory_space<vmem>>, vector<8x128xf32>,
    } else {
    }
    return
  }
  func.func @transform_0(%arg0: i32, %arg1: i32) -> (i32, i32) {
    %c0_i32 = arith.constant 0 : i32
    return %arg0, %arg1 : i32, i32
  }
  func.func @transform_1(%arg0: i32, %arg1: i32) -> (i32, i32) {
    %c0_i32 = arith.constant 0 : i32
    %c0_i32_0 = arith.constant 0 : i32
    return %arg1, %c0_i32 : i32, i32
  }
  func.func @transform_2(%arg0: i32, %arg1: i32) -> (i32, i32) {
    %c0_i32 = arith.constant 0 : i32
    %c0_i32_0 = arith.constant 0 : i32
    %c0_i32_1 = arith.constant 0 : i32
    return %c0_i32, %c0_i32_0 : i32, i32
  }
  func.func @transform_3(%arg0: i32, %arg1: i32) -> (i32, i32) {
    %c0_i32 = arith.constant 0 : i32
    %c0_i32_0 = arith.constant 0 : i32
    return %arg0, %c0_i32 : i32, i32
  }
  func.func @transform_4(%arg0: i32, %arg1: i32) -> (i32, i32) {
    %c0_i32 = arith.constant 0 : i32
    %c0_i32_0 = arith.constant 0 : i32
    %c0_i32_1 = arith.constant 0 : i32
    return %c0_i32, %c0_i32_0 : i32, i32
  }
  func.func @transform_5(%arg0: i32, %arg1: i32) -> (i32, i32) {
    %c0_i32 = arith.constant 0 : i32
    %c0_i32_0 = arith.constant 0 : i32
    %c0_i32_1 = arith.constant 0 : i32
    return %c0_i32, %c0_i32_0 : i32, i32
  }
  func.func @transform_6(%arg0: i32, %arg1: i32) -> (i32, i32) {
    %c0_i32 = arith.constant 0 : i32
    %c0_i32_0 = arith.constant 0 : i32
    return %arg0, %c0_i32 : i32, i32
  }
}

module attributes {stable_mosaic.version = 11 : i64} {
  func.func @_ffn_ln_kernel(%arg0: i32, %arg1: i32, %arg2: memref<8x128xf32, #tpu.memory_space<vmem>>, %arg3: memref<128x256xf32, #tpu.memory_space<vmem>>, %arg4: memref<1x256xf32, #tpu.memory_space<vmem>>, %arg5: memref<256x128xf32, #tpu.memory_space<vmem>>, %arg6: memref<1x128xf32, #tpu.memory_space<vmem>>, %arg7: memref<1x128xf32, #tpu.memory_space<vmem>>, %arg8: memref<1x128xf32, #tpu.memory_space<vmem>>, %arg9: memref<8x128xf32, #tpu.memory_space<vmem>>, %arg10: memref<8x128xf32, #tpu.memory_space<vmem>>) attributes {dimension_semantics = [#tpu.dimension_semantics<parallel>, #tpu.dimension_semantics<arbitrary>], iteration_bounds = array<i64: 2, 1>, scalar_prefetch = 0 : i64, scratch_operands = 1 : i64, tpu.core_type = #tpu.core_type<tc>, window_params = [{transform_indices = @transform_0, window_bounds = array<i64: 8, 128>}, {transform_indices = @transform_1, window_bounds = array<i64: 128, 256>}, {transform_indices = @transform_2, window_bounds = array<i64: 1, 256>}, {transform_indices = @transform_3, window_bounds = array<i64: 256, 128>}, {pipeline_mode = #tpu.pipeline_mode<synchronous>, transform_indices = @transform_4, window_bounds = array<i64: 1, 128>}, {pipeline_mode = #tpu.pipeline_mode<synchronous>, transform_indices = @transform_5, window_bounds = array<i64: 1, 128>}, {pipeline_mode = #tpu.pipeline_mode<synchronous>, transform_indices = @transform_6, window_bounds = array<i64: 1, 128>}, {transform_indices = @transform_7, window_bounds = array<i64: 8, 128>}]} {
    %c0_i32 = arith.constant 0 : i32
    %0 = arith.cmpi eq, %arg1, %c0_i32 : i32
    %1 = arith.extui %0 : i1 to i32
    %c0_i32_0 = arith.constant 0 : i32
    %2 = arith.cmpi ne, %1, %c0_i32_0 : i32
    scf.if %2 {
      %c0_19 = arith.constant 0 : index
      %c0_20 = arith.constant 0 : index
      %30 = vector.load %arg6[%c0_19, %c0_20] : memref<1x128xf32, #tpu.memory_space<vmem>>, vector<1x128xf32>
      %31 = vector.shape_cast %30 : vector<1x128xf32> to vector<1x128xf32>
      %32 = vector.broadcast %31 : vector<1x128xf32> to vector<8x128xf32>
      %c0_21 = arith.constant 0 : index
      %c0_22 = arith.constant 0 : index
      %33 = vector.load %arg10[%c0_21, %c0_22] : memref<8x128xf32, #tpu.memory_space<vmem>>, vector<8x128xf32>
      tpu.vector_store %arg10[%c0_21, %c0_22], %32 {strides = array<i32>} : memref<8x128xf32, #tpu.memory_space<vmem>>, vector<8x128xf32>,
    } else {
    }
    %c0 = arith.constant 0 : index
    %c0_1 = arith.constant 0 : index
    %3 = vector.load %arg2[%c0, %c0_1] : memref<8x128xf32, #tpu.memory_space<vmem>>, vector<8x128xf32>
    %c0_2 = arith.constant 0 : index
    %c0_3 = arith.constant 0 : index
    %4 = vector.load %arg3[%c0_2, %c0_3] : memref<128x256xf32, #tpu.memory_space<vmem>>, vector<128x256xf32>
    %cst = arith.constant dense<0.000000e+00> : vector<8x256xf32>
    %5 = tpu.matmul %3, %4, %cst {dimension_numbers = #tpu.dot_dimension_numbers<[1], [0], [0], [1], [0, 0, 1, 1], [], []>} : vector<8x128xf32>, vector<128x256xf32>, vector<8x256xf32> -> vector<8x256xf32>
    %c0_4 = arith.constant 0 : index
    %c0_5 = arith.constant 0 : index
    %6 = vector.load %arg4[%c0_4, %c0_5] : memref<1x256xf32, #tpu.memory_space<vmem>>, vector<1x256xf32>
    %7 = vector.broadcast %6 : vector<1x256xf32> to vector<8x256xf32>
    %8 = arith.addf %5, %7 : vector<8x256xf32>
    %cst_6 = arith.constant 5.000000e-01 : f32
    %9 = vector.broadcast %cst_6 : f32 to vector<8x256xf32>
    %10 = arith.mulf %9, %8 : vector<8x256xf32>
    %cst_7 = arith.constant 4.471500e-02 : f32
    %11 = vector.broadcast %cst_7 : f32 to vector<8x256xf32>
    %12 = arith.mulf %11, %8 : vector<8x256xf32>
    %13 = arith.mulf %12, %8 : vector<8x256xf32>
    %14 = arith.mulf %13, %8 : vector<8x256xf32>
    %15 = arith.addf %8, %14 : vector<8x256xf32>
    %cst_8 = arith.constant 0.797884583 : f32
    %16 = vector.broadcast %cst_8 : f32 to vector<8x256xf32>
    %17 = arith.mulf %16, %15 : vector<8x256xf32>
    %18 = math.tanh %17 : vector<8x256xf32>
    %cst_9 = arith.constant 1.000000e+00 : f32
    %19 = vector.broadcast %cst_9 : f32 to vector<8x256xf32>
    %20 = arith.addf %19, %18 : vector<8x256xf32>
    %21 = arith.mulf %10, %20 : vector<8x256xf32>
    %c0_10 = arith.constant 0 : index
    %c0_11 = arith.constant 0 : index
    %22 = vector.load %arg10[%c0_10, %c0_11] : memref<8x128xf32, #tpu.memory_space<vmem>>, vector<8x128xf32>
    %c0_12 = arith.constant 0 : index
    %c0_13 = arith.constant 0 : index
    %23 = vector.load %arg5[%c0_12, %c0_13] : memref<256x128xf32, #tpu.memory_space<vmem>>, vector<256x128xf32>
    %cst_14 = arith.constant dense<0.000000e+00> : vector<8x128xf32>
    %24 = tpu.matmul %21, %23, %cst_14 {dimension_numbers = #tpu.dot_dimension_numbers<[1], [0], [0], [1], [0, 0, 1, 1], [], []>} : vector<8x256xf32>, vector<256x128xf32>, vector<8x128xf32> -> vector<8x128xf32>
    %25 = arith.addf %22, %24 : vector<8x128xf32>
    %c0_15 = arith.constant 0 : index
    %c0_16 = arith.constant 0 : index
    %26 = vector.load %arg10[%c0_15, %c0_16] : memref<8x128xf32, #tpu.memory_space<vmem>>, vector<8x128xf32>
    tpu.vector_store %arg10[%c0_15, %c0_16], %25 {strides = array<i32>} : memref<8x128xf32, #tpu.memory_space<vmem>>, vector<8x128xf32>,
    %c0_i32_17 = arith.constant 0 : i32
    %27 = arith.cmpi eq, %arg1, %c0_i32_17 : i32
    %28 = arith.extui %27 : i1 to i32
    %c0_i32_18 = arith.constant 0 : i32
    %29 = arith.cmpi ne, %28, %c0_i32_18 : i32
    scf.if %29 {
      %c0_19 = arith.constant 0 : index
      %c0_20 = arith.constant 0 : index
      %30 = vector.load %arg10[%c0_19, %c0_20] : memref<8x128xf32, #tpu.memory_space<vmem>>, vector<8x128xf32>
      %c0_21 = arith.constant 0 : index
      %c0_22 = arith.constant 0 : index
      %31 = vector.load %arg2[%c0_21, %c0_22] : memref<8x128xf32, #tpu.memory_space<vmem>>, vector<8x128xf32>
      %32 = arith.addf %30, %31 : vector<8x128xf32>
      %c0_23 = arith.constant 0 : index
      %c0_24 = arith.constant 0 : index
      %33 = vector.load %arg7[%c0_23, %c0_24] : memref<1x128xf32, #tpu.memory_space<vmem>>, vector<1x128xf32>
      %c0_25 = arith.constant 0 : index
      %c0_26 = arith.constant 0 : index
      %34 = vector.load %arg8[%c0_25, %c0_26] : memref<1x128xf32, #tpu.memory_space<vmem>>, vector<1x128xf32>
      %cst_27 = arith.constant dense<0.000000e+00> : vector<8xf32>
      %35 = vector.multi_reduction <add>, %32, %cst_27 [1] : vector<8x128xf32> to vector<8xf32>
      %36 = vector.shape_cast %35 : vector<8xf32> to vector<8x1xf32>
      %cst_28 = arith.constant 1.280000e+02 : f32
      %37 = vector.broadcast %cst_28 : f32 to vector<8x1xf32>
      %38 = arith.divf %36, %37 : vector<8x1xf32>
      %39 = vector.broadcast %38 : vector<8x1xf32> to vector<8x128xf32>
      %40 = arith.subf %32, %39 : vector<8x128xf32>
      %41 = arith.mulf %40, %40 : vector<8x128xf32>
      %cst_29 = arith.constant dense<0.000000e+00> : vector<8xf32>
      %42 = vector.multi_reduction <add>, %41, %cst_29 [1] : vector<8x128xf32> to vector<8xf32>
      %43 = vector.shape_cast %42 : vector<8xf32> to vector<8x1xf32>
      %cst_30 = arith.constant 1.270000e+02 : f32
      %44 = vector.broadcast %cst_30 : f32 to vector<8x1xf32>
      %45 = arith.divf %43, %44 : vector<8x1xf32>
      %46 = vector.broadcast %33 : vector<1x128xf32> to vector<8x128xf32>
      %47 = arith.mulf %46, %40 : vector<8x128xf32>
      %48 = math.sqrt %45 : vector<8x1xf32>
      %cst_31 = arith.constant 9.99999997E-7 : f32
      %49 = vector.broadcast %cst_31 : f32 to vector<8x1xf32>
      %50 = arith.addf %48, %49 : vector<8x1xf32>
      %51 = vector.broadcast %50 : vector<8x1xf32> to vector<8x128xf32>
      %52 = arith.divf %47, %51 : vector<8x128xf32>
      %53 = vector.broadcast %34 : vector<1x128xf32> to vector<8x128xf32>
      %54 = arith.addf %52, %53 : vector<8x128xf32>
      %c0_32 = arith.constant 0 : index
      %c0_33 = arith.constant 0 : index
      %55 = vector.load %arg9[%c0_32, %c0_33] : memref<8x128xf32, #tpu.memory_space<vmem>>, vector<8x128xf32>
      tpu.vector_store %arg9[%c0_32, %c0_33], %54 {strides = array<i32>} : memref<8x128xf32, #tpu.memory_space<vmem>>, vector<8x128xf32>,
    } else {
    }
    return
  }
  func.func @transform_0(%arg0: i32, %arg1: i32) -> (i32, i32) {
    %c0_i32 = arith.constant 0 : i32
    %c0_i32_0 = arith.constant 0 : i32
    return %arg0, %c0_i32 : i32, i32
  }
  func.func @transform_1(%arg0: i32, %arg1: i32) -> (i32, i32) {
    %c0_i32 = arith.constant 0 : i32
    %c0_i32_0 = arith.constant 0 : i32
    return %c0_i32, %arg1 : i32, i32
  }
  func.func @transform_2(%arg0: i32, %arg1: i32) -> (i32, i32) {
    %c0_i32 = arith.constant 0 : i32
    %c0_i32_0 = arith.constant 0 : i32
    return %c0_i32, %arg1 : i32, i32
  }
  func.func @transform_3(%arg0: i32, %arg1: i32) -> (i32, i32) {
    %c0_i32 = arith.constant 0 : i32
    %c0_i32_0 = arith.constant 0 : i32
    return %arg1, %c0_i32 : i32, i32
  }
  func.func @transform_4(%arg0: i32, %arg1: i32) -> (i32, i32) {
    %c0_i32 = arith.constant 0 : i32
    %c0_i32_0 = arith.constant 0 : i32
    %c0_i32_1 = arith.constant 0 : i32
    return %c0_i32, %c0_i32_0 : i32, i32
  }
  func.func @transform_5(%arg0: i32, %arg1: i32) -> (i32, i32) {
    %c0_i32 = arith.constant 0 : i32
    %c0_i32_0 = arith.constant 0 : i32
    %c0_i32_1 = arith.constant 0 : i32
    return %c0_i32, %c0_i32_0 : i32, i32
  }
  func.func @transform_6(%arg0: i32, %arg1: i32) -> (i32, i32) {
    %c0_i32 = arith.constant 0 : i32
    %c0_i32_0 = arith.constant 0 : i32
    %c0_i32_1 = arith.constant 0 : i32
    return %c0_i32, %c0_i32_0 : i32, i32
  }
  func.func @transform_7(%arg0: i32, %arg1: i32) -> (i32, i32) {
    %c0_i32 = arith.constant 0 : i32
    %c0_i32_0 = arith.constant 0 : i32
    return %arg0, %c0_i32 : i32, i32
  }
}

module attributes {stable_mosaic.version = 11 : i64} {
  func.func @_linear_kernel(%arg0: i32, %arg1: i32, %arg2: i32, %arg3: memref<8x128xf32, #tpu.memory_space<vmem>>, %arg4: memref<128x384xf32, #tpu.memory_space<vmem>>, %arg5: memref<1x384xf32, #tpu.memory_space<vmem>>, %arg6: memref<8x384xf32, #tpu.memory_space<vmem>>, %arg7: memref<8x384xf32, #tpu.memory_space<vmem>>) attributes {dimension_semantics = [#tpu.dimension_semantics<parallel>, #tpu.dimension_semantics<parallel>, #tpu.dimension_semantics<arbitrary>], iteration_bounds = array<i64: 2, 1, 1>, scalar_prefetch = 0 : i64, scratch_operands = 1 : i64, tpu.core_type = #tpu.core_type<tc>, window_params = [{transform_indices = @transform_0, window_bounds = array<i64: 8, 128>}, {transform_indices = @transform_1, window_bounds = array<i64: 128, 384>}, {transform_indices = @transform_2, window_bounds = array<i64: 1, 384>}, {transform_indices = @transform_3, window_bounds = array<i64: 8, 384>}]} {
    %c0_i32 = arith.constant 0 : i32
    %0 = arith.cmpi eq, %arg2, %c0_i32 : i32
    %1 = arith.extui %0 : i1 to i32
    %c0_i32_0 = arith.constant 0 : i32
    %2 = arith.cmpi ne, %1, %c0_i32_0 : i32
    scf.if %2 {
      %c0_10 = arith.constant 0 : index
      %c0_11 = arith.constant 0 : index
      %12 = vector.load %arg5[%c0_10, %c0_11] : memref<1x384xf32, #tpu.memory_space<vmem>>, vector<1x384xf32>
      %13 = vector.shape_cast %12 : vector<1x384xf32> to vector<1x384xf32>
      %14 = vector.broadcast %13 : vector<1x384xf32> to vector<8x384xf32>
      %c0_12 = arith.constant 0 : index
      %c0_13 = arith.constant 0 : index
      %15 = vector.load %arg7[%c0_12, %c0_13] : memref<8x384xf32, #tpu.memory_space<vmem>>, vector<8x384xf32>
      tpu.vector_store %arg7[%c0_12, %c0_13], %14 {strides = array<i32>} : memref<8x384xf32, #tpu.memory_space<vmem>>, vector<8x384xf32>,
    } else {
    }
    %c0 = arith.constant 0 : index
    %c0_1 = arith.constant 0 : index
    %3 = vector.load %arg7[%c0, %c0_1] : memref<8x384xf32, #tpu.memory_space<vmem>>, vector<8x384xf32>
    %c0_2 = arith.constant 0 : index
    %c0_3 = arith.constant 0 : index
    %4 = vector.load %arg3[%c0_2, %c0_3] : memref<8x128xf32, #tpu.memory_space<vmem>>, vector<8x128xf32>
    %c0_4 = arith.constant 0 : index
    %c0_5 = arith.constant 0 : index
    %5 = vector.load %arg4[%c0_4, %c0_5] : memref<128x384xf32, #tpu.memory_space<vmem>>, vector<128x384xf32>
    %cst = arith.constant dense<0.000000e+00> : vector<8x384xf32>
    %6 = tpu.matmul %4, %5, %cst {dimension_numbers = #tpu.dot_dimension_numbers<[1], [0], [0], [1], [0, 0, 1, 1], [], []>} : vector<8x128xf32>, vector<128x384xf32>, vector<8x384xf32> -> vector<8x384xf32>
    %7 = arith.addf %3, %6 : vector<8x384xf32>
    %c0_6 = arith.constant 0 : index
    %c0_7 = arith.constant 0 : index
    %8 = vector.load %arg7[%c0_6, %c0_7] : memref<8x384xf32, #tpu.memory_space<vmem>>, vector<8x384xf32>
    tpu.vector_store %arg7[%c0_6, %c0_7], %7 {strides = array<i32>} : memref<8x384xf32, #tpu.memory_space<vmem>>, vector<8x384xf32>,
    %c0_i32_8 = arith.constant 0 : i32
    %9 = arith.cmpi eq, %arg2, %c0_i32_8 : i32
    %10 = arith.extui %9 : i1 to i32
    %c0_i32_9 = arith.constant 0 : i32
    %11 = arith.cmpi ne, %10, %c0_i32_9 : i32
    scf.if %11 {
      %c0_10 = arith.constant 0 : index
      %c0_11 = arith.constant 0 : index
      %12 = vector.load %arg7[%c0_10, %c0_11] : memref<8x384xf32, #tpu.memory_space<vmem>>, vector<8x384xf32>
      %c0_12 = arith.constant 0 : index
      %c0_13 = arith.constant 0 : index
      %13 = vector.load %arg6[%c0_12, %c0_13] : memref<8x384xf32, #tpu.memory_space<vmem>>, vector<8x384xf32>
      tpu.vector_store %arg6[%c0_12, %c0_13], %12 {strides = array<i32>} : memref<8x384xf32, #tpu.memory_space<vmem>>, vector<8x384xf32>,
    } else {
    }
    return
  }
  func.func @transform_0(%arg0: i32, %arg1: i32, %arg2: i32) -> (i32, i32) {
    %c0_i32 = arith.constant 0 : i32
    return %arg0, %arg2 : i32, i32
  }
  func.func @transform_1(%arg0: i32, %arg1: i32, %arg2: i32) -> (i32, i32) {
    %c0_i32 = arith.constant 0 : i32
    return %arg2, %arg1 : i32, i32
  }
  func.func @transform_2(%arg0: i32, %arg1: i32, %arg2: i32) -> (i32, i32) {
    %c0_i32 = arith.constant 0 : i32
    %c0_i32_0 = arith.constant 0 : i32
    return %c0_i32, %arg1 : i32, i32
  }
  func.func @transform_3(%arg0: i32, %arg1: i32, %arg2: i32) -> (i32, i32) {
    %c0_i32 = arith.constant 0 : i32
    return %arg0, %arg1 : i32, i32
  }
}

module attributes {stable_mosaic.version = 11 : i64} {
  func.func @_attn_kernel(%arg0: i32, %arg1: i32, %arg2: i32, %arg3: i32, %arg4: memref<8x128xf32, #tpu.memory_space<vmem>>, %arg5: memref<8x128xf32, #tpu.memory_space<vmem>>, %arg6: memref<8x128xf32, #tpu.memory_space<vmem>>, %arg7: memref<8x128xf32, #tpu.memory_space<vmem>>, %arg8: memref<4x8x1xf32, #tpu.memory_space<vmem>>, %arg9: memref<4x8x1xf32, #tpu.memory_space<vmem>>, %arg10: memref<4x8x32xf32, #tpu.memory_space<vmem>>) attributes {dimension_semantics = [#tpu.dimension_semantics<parallel>, #tpu.dimension_semantics<parallel>, #tpu.dimension_semantics<parallel>, #tpu.dimension_semantics<arbitrary>], iteration_bounds = array<i64: 2, 1, 1, 1>, scalar_prefetch = 0 : i64, scratch_operands = 3 : i64, tpu.core_type = #tpu.core_type<tc>, window_params = [{transform_indices = @transform_0, window_bounds = array<i64: 8, 128>}, {transform_indices = @transform_1, window_bounds = array<i64: 8, 128>}, {transform_indices = @transform_2, window_bounds = array<i64: 8, 128>}, {transform_indices = @transform_3, window_bounds = array<i64: 8, 128>}]} {
    %c0_i32 = arith.constant 0 : i32
    %0 = arith.cmpi eq, %arg3, %c0_i32 : i32
    %1 = arith.extui %0 : i1 to i32
    %c0_i32_0 = arith.constant 0 : i32
    %2 = arith.cmpi ne, %1, %c0_i32_0 : i32
    scf.if %2 {
      %cst_107 = arith.constant 0xFF800000 : f32
      %146 = vector.broadcast %cst_107 : f32 to vector<4x8x1xf32>
      %c0_108 = arith.constant 0 : index
      %c0_109 = arith.constant 0 : index
      %c0_110 = arith.constant 0 : index
      %147 = vector.load %arg8[%c0_108, %c0_109, %c0_110] : memref<4x8x1xf32, #tpu.memory_space<vmem>>, vector<4x8x1xf32>
      tpu.vector_store %arg8[%c0_108, %c0_109, %c0_110], %146 {strides = array<i32>} : memref<4x8x1xf32, #tpu.memory_space<vmem>>, vector<4x8x1xf32>,
      %cst_111 = arith.constant 0.000000e+00 : f32
      %148 = vector.broadcast %cst_111 : f32 to vector<4x8x1xf32>
      %c0_112 = arith.constant 0 : index
      %c0_113 = arith.constant 0 : index
      %c0_114 = arith.constant 0 : index
      %149 = vector.load %arg9[%c0_112, %c0_113, %c0_114] : memref<4x8x1xf32, #tpu.memory_space<vmem>>, vector<4x8x1xf32>
      tpu.vector_store %arg9[%c0_112, %c0_113, %c0_114], %148 {strides = array<i32>} : memref<4x8x1xf32, #tpu.memory_space<vmem>>, vector<4x8x1xf32>,
      %cst_115 = arith.constant 0.000000e+00 : f32
      %150 = vector.broadcast %cst_115 : f32 to vector<4x8x32xf32>
      %c0_116 = arith.constant 0 : index
      %c0_117 = arith.constant 0 : index
      %c0_118 = arith.constant 0 : index
      %151 = vector.load %arg10[%c0_116, %c0_117, %c0_118] : memref<4x8x32xf32, #tpu.memory_space<vmem>>, vector<4x8x32xf32>
      tpu.vector_store %arg10[%c0_116, %c0_117, %c0_118], %150 {strides = array<i32>} : memref<4x8x32xf32, #tpu.memory_space<vmem>>, vector<4x8x32xf32>,
    } else {
    }
    %c0 = arith.constant 0 : index
    %c0_1 = arith.constant 0 : index
    %3 = vector.load %arg4[%c0, %c0_1] : memref<8x128xf32, #tpu.memory_space<vmem>>, vector<8x32xf32>
    %c0_2 = arith.constant 0 : index
    %c0_3 = arith.constant 0 : index
    %4 = vector.load %arg5[%c0_2, %c0_3] : memref<8x128xf32, #tpu.memory_space<vmem>>, vector<8x32xf32>
    "tpu.trace_start"() <{level = 10 : i32, message = "qd,kd->qk"}> : () -> ()
    %cst = arith.constant dense<0.000000e+00> : vector<8x8xf32>
    %5 = tpu.matmul %3, %4, %cst {dimension_numbers = #tpu.dot_dimension_numbers<[1], [1], [0], [0], [0, 0, 1, 0], [], []>} : vector<8x32xf32>, vector<8x32xf32>, vector<8x8xf32> -> vector<8x8xf32>
    "tpu.trace_stop"() : () -> ()
    %c0_4 = arith.constant 0 : index
    %c0_5 = arith.constant 0 : index
    %c0_6 = arith.constant 0 : index
    %6 = vector.load %arg8[%c0_4, %c0_5, %c0_6] : memref<4x8x1xf32, #tpu.memory_space<vmem>>, vector<1x8x1xf32>
    %7 = vector.shape_cast %6 : vector<1x8x1xf32> to vector<8x1xf32>
    %cst_7 = arith.constant dense<0xFF800000> : vector<8xf32>
    %8 = vector.multi_reduction <maximumf>, %5, %cst_7 [1] : vector<8x8xf32> to vector<8xf32>
    %9 = vector.shape_cast %8 : vector<8xf32> to vector<8x1xf32>
    %10 = arith.maximumf %7, %9 : vector<8x1xf32>
    %11 = arith.subf %7, %10 : vector<8x1xf32>
    %12 = math.exp %11 : vector<8x1xf32>
    %13 = vector.broadcast %10 : vector<8x1xf32> to vector<8x8xf32>
    %14 = arith.subf %5, %13 : vector<8x8xf32>
    %15 = math.exp %14 : vector<8x8xf32>
    %c0_8 = arith.constant 0 : index
    %c0_9 = arith.constant 0 : index
    %c0_10 = arith.constant 0 : index
    %16 = vector.load %arg9[%c0_8, %c0_9, %c0_10] : memref<4x8x1xf32, #tpu.memory_space<vmem>>, vector<1x8x1xf32>
    %17 = vector.shape_cast %16 : vector<1x8x1xf32> to vector<8x1xf32>
    %18 = arith.mulf %12, %17 : vector<8x1xf32>
    %cst_11 = arith.constant dense<0.000000e+00> : vector<8xf32>
    %19 = vector.multi_reduction <add>, %15, %cst_11 [1] : vector<8x8xf32> to vector<8xf32>
    %20 = vector.shape_cast %19 : vector<8xf32> to vector<8x1xf32>
    %21 = arith.addf %18, %20 : vector<8x1xf32>
    %c0_12 = arith.constant 0 : index
    %c0_13 = arith.constant 0 : index
    %c0_14 = arith.constant 0 : index
    %22 = vector.load %arg9[%c0_12, %c0_13, %c0_14] : memref<4x8x1xf32, #tpu.memory_space<vmem>>, vector<1x8x1xf32>
    %23 = vector.shape_cast %22 : vector<1x8x1xf32> to vector<8x1xf32>
    %24 = vector.shape_cast %21 : vector<8x1xf32> to vector<1x8x1xf32>
    tpu.vector_store %arg9[%c0_12, %c0_13, %c0_14], %24 {strides = array<i32>} : memref<4x8x1xf32, #tpu.memory_space<vmem>>, vector<1x8x1xf32>,
    %c0_15 = arith.constant 0 : index
    %c0_16 = arith.constant 0 : index
    %c0_17 = arith.constant 0 : index
    %25 = vector.load %arg10[%c0_15, %c0_16, %c0_17] : memref<4x8x32xf32, #tpu.memory_space<vmem>>, vector<1x8x32xf32>
    %26 = vector.shape_cast %25 : vector<1x8x32xf32> to vector<8x32xf32>
    %27 = vector.broadcast %12 : vector<8x1xf32> to vector<8x32xf32>
    %28 = arith.mulf %27, %26 : vector<8x32xf32>
    %c0_18 = arith.constant 0 : index
    %c0_19 = arith.constant 0 : index
    %29 = vector.load %arg6[%c0_18, %c0_19] : memref<8x128xf32, #tpu.memory_space<vmem>>, vector<8x32xf32>
    "tpu.trace_start"() <{level = 10 : i32, message = "qk,kd->qd"}> : () -> ()
    %cst_20 = arith.constant dense<0.000000e+00> : vector<8x32xf32>
    %30 = tpu.matmul %15, %29, %cst_20 {dimension_numbers = #tpu.dot_dimension_numbers<[1], [0], [0], [1], [0, 0, 1, 1], [], []>} : vector<8x8xf32>, vector<8x32xf32>, vector<8x32xf32> -> vector<8x32xf32>
    "tpu.trace_stop"() : () -> ()
    %31 = arith.addf %28, %30 : vector<8x32xf32>
    %c0_21 = arith.constant 0 : index
    %c0_22 = arith.constant 0 : index
    %c0_23 = arith.constant 0 : index
    %32 = vector.load %arg10[%c0_21, %c0_22, %c0_23] : memref<4x8x32xf32, #tpu.memory_space<vmem>>, vector<1x8x32xf32>
    %33 = vector.shape_cast %32 : vector<1x8x32xf32> to vector<8x32xf32>
    %34 = vector.shape_cast %31 : vector<8x32xf32> to vector<1x8x32xf32>
    tpu.vector_store %arg10[%c0_21, %c0_22, %c0_23], %34 {strides = array<i32>} : memref<4x8x32xf32, #tpu.memory_space<vmem>>, vector<1x8x32xf32>,
    %c0_24 = arith.constant 0 : index
    %c0_25 = arith.constant 0 : index
    %c0_26 = arith.constant 0 : index
    %35 = vector.load %arg8[%c0_24, %c0_25, %c0_26] : memref<4x8x1xf32, #tpu.memory_space<vmem>>, vector<1x8x1xf32>
    %36 = vector.shape_cast %35 : vector<1x8x1xf32> to vector<8x1xf32>
    %37 = vector.shape_cast %10 : vector<8x1xf32> to vector<1x8x1xf32>
    tpu.vector_store %arg8[%c0_24, %c0_25, %c0_26], %37 {strides = array<i32>} : memref<4x8x1xf32, #tpu.memory_space<vmem>>, vector<1x8x1xf32>,
    %c0_27 = arith.constant 0 : index
    %c32 = arith.constant 32 : index
    %38 = vector.load %arg4[%c0_27, %c32] : memref<8x128xf32, #tpu.memory_space<vmem>>, vector<8x32xf32>
    %c0_28 = arith.constant 0 : index
    %c32_29 = arith.constant 32 : index
    %39 = vector.load %arg5[%c0_28, %c32_29] : memref<8x128xf32, #tpu.memory_space<vmem>>, vector<8x32xf32>
    "tpu.trace_start"() <{level = 10 : i32, message = "qd,kd->qk"}> : () -> ()
    %cst_30 = arith.constant dense<0.000000e+00> : vector<8x8xf32>
    %40 = tpu.matmul %38, %39, %cst_30 {dimension_numbers = #tpu.dot_dimension_numbers<[1], [1], [0], [0], [0, 0, 1, 0], [], []>} : vector<8x32xf32>, vector<8x32xf32>, vector<8x8xf32> -> vector<8x8xf32>
    "tpu.trace_stop"() : () -> ()
    %c1 = arith.constant 1 : index
    %c0_31 = arith.constant 0 : index
    %c0_32 = arith.constant 0 : index
    %41 = vector.load %arg8[%c1, %c0_31, %c0_32] : memref<4x8x1xf32, #tpu.memory_space<vmem>>, vector<1x8x1xf32>
    %42 = vector.shape_cast %41 : vector<1x8x1xf32> to vector<8x1xf32>
    %cst_33 = arith.constant dense<0xFF800000> : vector<8xf32>
    %43 = vector.multi_reduction <maximumf>, %40, %cst_33 [1] : vector<8x8xf32> to vector<8xf32>
    %44 = vector.shape_cast %43 : vector<8xf32> to vector<8x1xf32>
    %45 = arith.maximumf %42, %44 : vector<8x1xf32>
    %46 = arith.subf %42, %45 : vector<8x1xf32>
    %47 = math.exp %46 : vector<8x1xf32>
    %48 = vector.broadcast %45 : vector<8x1xf32> to vector<8x8xf32>
    %49 = arith.subf %40, %48 : vector<8x8xf32>
    %50 = math.exp %49 : vector<8x8xf32>
    %c1_34 = arith.constant 1 : index
    %c0_35 = arith.constant 0 : index
    %c0_36 = arith.constant 0 : index
    %51 = vector.load %arg9[%c1_34, %c0_35, %c0_36] : memref<4x8x1xf32, #tpu.memory_space<vmem>>, vector<1x8x1xf32>
    %52 = vector.shape_cast %51 : vector<1x8x1xf32> to vector<8x1xf32>
    %53 = arith.mulf %47, %52 : vector<8x1xf32>
    %cst_37 = arith.constant dense<0.000000e+00> : vector<8xf32>
    %54 = vector.multi_reduction <add>, %50, %cst_37 [1] : vector<8x8xf32> to vector<8xf32>
    %55 = vector.shape_cast %54 : vector<8xf32> to vector<8x1xf32>
    %56 = arith.addf %53, %55 : vector<8x1xf32>
    %c1_38 = arith.constant 1 : index
    %c0_39 = arith.constant 0 : index
    %c0_40 = arith.constant 0 : index
    %57 = vector.load %arg9[%c1_38, %c0_39, %c0_40] : memref<4x8x1xf32, #tpu.memory_space<vmem>>, vector<1x8x1xf32>
    %58 = vector.shape_cast %57 : vector<1x8x1xf32> to vector<8x1xf32>
    %59 = vector.shape_cast %56 : vector<8x1xf32> to vector<1x8x1xf32>
    tpu.vector_store %arg9[%c1_38, %c0_39, %c0_40], %59 {strides = array<i32>} : memref<4x8x1xf32, #tpu.memory_space<vmem>>, vector<1x8x1xf32>,
    %c1_41 = arith.constant 1 : index
    %c0_42 = arith.constant 0 : index
    %c0_43 = arith.constant 0 : index
    %60 = vector.load %arg10[%c1_41, %c0_42, %c0_43] : memref<4x8x32xf32, #tpu.memory_space<vmem>>, vector<1x8x32xf32>
    %61 = vector.shape_cast %60 : vector<1x8x32xf32> to vector<8x32xf32>
    %62 = vector.broadcast %47 : vector<8x1xf32> to vector<8x32xf32>
    %63 = arith.mulf %62, %61 : vector<8x32xf32>
    %c0_44 = arith.constant 0 : index
    %c32_45 = arith.constant 32 : index
    %64 = vector.load %arg6[%c0_44, %c32_45] : memref<8x128xf32, #tpu.memory_space<vmem>>, vector<8x32xf32>
    "tpu.trace_start"() <{level = 10 : i32, message = "qk,kd->qd"}> : () -> ()
    %cst_46 = arith.constant dense<0.000000e+00> : vector<8x32xf32>
    %65 = tpu.matmul %50, %64, %cst_46 {dimension_numbers = #tpu.dot_dimension_numbers<[1], [0], [0], [1], [0, 0, 1, 1], [], []>} : vector<8x8xf32>, vector<8x32xf32>, vector<8x32xf32> -> vector<8x32xf32>
    "tpu.trace_stop"() : () -> ()
    %66 = arith.addf %63, %65 : vector<8x32xf32>
    %c1_47 = arith.constant 1 : index
    %c0_48 = arith.constant 0 : index
    %c0_49 = arith.constant 0 : index
    %67 = vector.load %arg10[%c1_47, %c0_48, %c0_49] : memref<4x8x32xf32, #tpu.memory_space<vmem>>, vector<1x8x32xf32>
    %68 = vector.shape_cast %67 : vector<1x8x32xf32> to vector<8x32xf32>
    %69 = vector.shape_cast %66 : vector<8x32xf32> to vector<1x8x32xf32>
    tpu.vector_store %arg10[%c1_47, %c0_48, %c0_49], %69 {strides = array<i32>} : memref<4x8x32xf32, #tpu.memory_space<vmem>>, vector<1x8x32xf32>,
    %c1_50 = arith.constant 1 : index
    %c0_51 = arith.constant 0 : index
    %c0_52 = arith.constant 0 : index
    %70 = vector.load %arg8[%c1_50, %c0_51, %c0_52] : memref<4x8x1xf32, #tpu.memory_space<vmem>>, vector<1x8x1xf32>
    %71 = vector.shape_cast %70 : vector<1x8x1xf32> to vector<8x1xf32>
    %72 = vector.shape_cast %45 : vector<8x1xf32> to vector<1x8x1xf32>
    tpu.vector_store %arg8[%c1_50, %c0_51, %c0_52], %72 {strides = array<i32>} : memref<4x8x1xf32, #tpu.memory_space<vmem>>, vector<1x8x1xf32>,
    %c0_53 = arith.constant 0 : index
    %c64 = arith.constant 64 : index
    %73 = vector.load %arg4[%c0_53, %c64] : memref<8x128xf32, #tpu.memory_space<vmem>>, vector<8x32xf32>
    %c0_54 = arith.constant 0 : index
    %c64_55 = arith.constant 64 : index
    %74 = vector.load %arg5[%c0_54, %c64_55] : memref<8x128xf32, #tpu.memory_space<vmem>>, vector<8x32xf32>
    "tpu.trace_start"() <{level = 10 : i32, message = "qd,kd->qk"}> : () -> ()
    %cst_56 = arith.constant dense<0.000000e+00> : vector<8x8xf32>
    %75 = tpu.matmul %73, %74, %cst_56 {dimension_numbers = #tpu.dot_dimension_numbers<[1], [1], [0], [0], [0, 0, 1, 0], [], []>} : vector<8x32xf32>, vector<8x32xf32>, vector<8x8xf32> -> vector<8x8xf32>
    "tpu.trace_stop"() : () -> ()
    %c2 = arith.constant 2 : index
    %c0_57 = arith.constant 0 : index
    %c0_58 = arith.constant 0 : index
    %76 = vector.load %arg8[%c2, %c0_57, %c0_58] : memref<4x8x1xf32, #tpu.memory_space<vmem>>, vector<1x8x1xf32>
    %77 = vector.shape_cast %76 : vector<1x8x1xf32> to vector<8x1xf32>
    %cst_59 = arith.constant dense<0xFF800000> : vector<8xf32>
    %78 = vector.multi_reduction <maximumf>, %75, %cst_59 [1] : vector<8x8xf32> to vector<8xf32>
    %79 = vector.shape_cast %78 : vector<8xf32> to vector<8x1xf32>
    %80 = arith.maximumf %77, %79 : vector<8x1xf32>
    %81 = arith.subf %77, %80 : vector<8x1xf32>
    %82 = math.exp %81 : vector<8x1xf32>
    %83 = vector.broadcast %80 : vector<8x1xf32> to vector<8x8xf32>
    %84 = arith.subf %75, %83 : vector<8x8xf32>
    %85 = math.exp %84 : vector<8x8xf32>
    %c2_60 = arith.constant 2 : index
    %c0_61 = arith.constant 0 : index
    %c0_62 = arith.constant 0 : index
    %86 = vector.load %arg9[%c2_60, %c0_61, %c0_62] : memref<4x8x1xf32, #tpu.memory_space<vmem>>, vector<1x8x1xf32>
    %87 = vector.shape_cast %86 : vector<1x8x1xf32> to vector<8x1xf32>
    %88 = arith.mulf %82, %87 : vector<8x1xf32>
    %cst_63 = arith.constant dense<0.000000e+00> : vector<8xf32>
    %89 = vector.multi_reduction <add>, %85, %cst_63 [1] : vector<8x8xf32> to vector<8xf32>
    %90 = vector.shape_cast %89 : vector<8xf32> to vector<8x1xf32>
    %91 = arith.addf %88, %90 : vector<8x1xf32>
    %c2_64 = arith.constant 2 : index
    %c0_65 = arith.constant 0 : index
    %c0_66 = arith.constant 0 : index
    %92 = vector.load %arg9[%c2_64, %c0_65, %c0_66] : memref<4x8x1xf32, #tpu.memory_space<vmem>>, vector<1x8x1xf32>
    %93 = vector.shape_cast %92 : vector<1x8x1xf32> to vector<8x1xf32>
    %94 = vector.shape_cast %91 : vector<8x1xf32> to vector<1x8x1xf32>
    tpu.vector_store %arg9[%c2_64, %c0_65, %c0_66], %94 {strides = array<i32>} : memref<4x8x1xf32, #tpu.memory_space<vmem>>, vector<1x8x1xf32>,
    %c2_67 = arith.constant 2 : index
    %c0_68 = arith.constant 0 : index
    %c0_69 = arith.constant 0 : index
    %95 = vector.load %arg10[%c2_67, %c0_68, %c0_69] : memref<4x8x32xf32, #tpu.memory_space<vmem>>, vector<1x8x32xf32>
    %96 = vector.shape_cast %95 : vector<1x8x32xf32> to vector<8x32xf32>
    %97 = vector.broadcast %82 : vector<8x1xf32> to vector<8x32xf32>
    %98 = arith.mulf %97, %96 : vector<8x32xf32>
    %c0_70 = arith.constant 0 : index
    %c64_71 = arith.constant 64 : index
    %99 = vector.load %arg6[%c0_70, %c64_71] : memref<8x128xf32, #tpu.memory_space<vmem>>, vector<8x32xf32>
    "tpu.trace_start"() <{level = 10 : i32, message = "qk,kd->qd"}> : () -> ()
    %cst_72 = arith.constant dense<0.000000e+00> : vector<8x32xf32>
    %100 = tpu.matmul %85, %99, %cst_72 {dimension_numbers = #tpu.dot_dimension_numbers<[1], [0], [0], [1], [0, 0, 1, 1], [], []>} : vector<8x8xf32>, vector<8x32xf32>, vector<8x32xf32> -> vector<8x32xf32>
    "tpu.trace_stop"() : () -> ()
    %101 = arith.addf %98, %100 : vector<8x32xf32>
    %c2_73 = arith.constant 2 : index
    %c0_74 = arith.constant 0 : index
    %c0_75 = arith.constant 0 : index
    %102 = vector.load %arg10[%c2_73, %c0_74, %c0_75] : memref<4x8x32xf32, #tpu.memory_space<vmem>>, vector<1x8x32xf32>
    %103 = vector.shape_cast %102 : vector<1x8x32xf32> to vector<8x32xf32>
    %104 = vector.shape_cast %101 : vector<8x32xf32> to vector<1x8x32xf32>
    tpu.vector_store %arg10[%c2_73, %c0_74, %c0_75], %104 {strides = array<i32>} : memref<4x8x32xf32, #tpu.memory_space<vmem>>, vector<1x8x32xf32>,
    %c2_76 = arith.constant 2 : index
    %c0_77 = arith.constant 0 : index
    %c0_78 = arith.constant 0 : index
    %105 = vector.load %arg8[%c2_76, %c0_77, %c0_78] : memref<4x8x1xf32, #tpu.memory_space<vmem>>, vector<1x8x1xf32>
    %106 = vector.shape_cast %105 : vector<1x8x1xf32> to vector<8x1xf32>
    %107 = vector.shape_cast %80 : vector<8x1xf32> to vector<1x8x1xf32>
    tpu.vector_store %arg8[%c2_76, %c0_77, %c0_78], %107 {strides = array<i32>} : memref<4x8x1xf32, #tpu.memory_space<vmem>>, vector<1x8x1xf32>,
    %c0_79 = arith.constant 0 : index
    %c96 = arith.constant 96 : index
    %108 = vector.load %arg4[%c0_79, %c96] : memref<8x128xf32, #tpu.memory_space<vmem>>, vector<8x32xf32>
    %c0_80 = arith.constant 0 : index
    %c96_81 = arith.constant 96 : index
    %109 = vector.load %arg5[%c0_80, %c96_81] : memref<8x128xf32, #tpu.memory_space<vmem>>, vector<8x32xf32>
    "tpu.trace_start"() <{level = 10 : i32, message = "qd,kd->qk"}> : () -> ()
    %cst_82 = arith.constant dense<0.000000e+00> : vector<8x8xf32>
    %110 = tpu.matmul %108, %109, %cst_82 {dimension_numbers = #tpu.dot_dimension_numbers<[1], [1], [0], [0], [0, 0, 1, 0], [], []>} : vector<8x32xf32>, vector<8x32xf32>, vector<8x8xf32> -> vector<8x8xf32>
    "tpu.trace_stop"() : () -> ()
    %c3 = arith.constant 3 : index
    %c0_83 = arith.constant 0 : index
    %c0_84 = arith.constant 0 : index
    %111 = vector.load %arg8[%c3, %c0_83, %c0_84] : memref<4x8x1xf32, #tpu.memory_space<vmem>>, vector<1x8x1xf32>
    %112 = vector.shape_cast %111 : vector<1x8x1xf32> to vector<8x1xf32>
    %cst_85 = arith.constant dense<0xFF800000> : vector<8xf32>
    %113 = vector.multi_reduction <maximumf>, %110, %cst_85 [1] : vector<8x8xf32> to vector<8xf32>
    %114 = vector.shape_cast %113 : vector<8xf32> to vector<8x1xf32>
    %115 = arith.maximumf %112, %114 : vector<8x1xf32>
    %116 = arith.subf %112, %115 : vector<8x1xf32>
    %117 = math.exp %116 : vector<8x1xf32>
    %118 = vector.broadcast %115 : vector<8x1xf32> to vector<8x8xf32>
    %119 = arith.subf %110, %118 : vector<8x8xf32>
    %120 = math.exp %119 : vector<8x8xf32>
    %c3_86 = arith.constant 3 : index
    %c0_87 = arith.constant 0 : index
    %c0_88 = arith.constant 0 : index
    %121 = vector.load %arg9[%c3_86, %c0_87, %c0_88] : memref<4x8x1xf32, #tpu.memory_space<vmem>>, vector<1x8x1xf32>
    %122 = vector.shape_cast %121 : vector<1x8x1xf32> to vector<8x1xf32>
    %123 = arith.mulf %117, %122 : vector<8x1xf32>
    %cst_89 = arith.constant dense<0.000000e+00> : vector<8xf32>
    %124 = vector.multi_reduction <add>, %120, %cst_89 [1] : vector<8x8xf32> to vector<8xf32>
    %125 = vector.shape_cast %124 : vector<8xf32> to vector<8x1xf32>
    %126 = arith.addf %123, %125 : vector<8x1xf32>
    %c3_90 = arith.constant 3 : index
    %c0_91 = arith.constant 0 : index
    %c0_92 = arith.constant 0 : index
    %127 = vector.load %arg9[%c3_90, %c0_91, %c0_92] : memref<4x8x1xf32, #tpu.memory_space<vmem>>, vector<1x8x1xf32>
    %128 = vector.shape_cast %127 : vector<1x8x1xf32> to vector<8x1xf32>
    %129 = vector.shape_cast %126 : vector<8x1xf32> to vector<1x8x1xf32>
    tpu.vector_store %arg9[%c3_90, %c0_91, %c0_92], %129 {strides = array<i32>} : memref<4x8x1xf32, #tpu.memory_space<vmem>>, vector<1x8x1xf32>,
    %c3_93 = arith.constant 3 : index
    %c0_94 = arith.constant 0 : index
    %c0_95 = arith.constant 0 : index
    %130 = vector.load %arg10[%c3_93, %c0_94, %c0_95] : memref<4x8x32xf32, #tpu.memory_space<vmem>>, vector<1x8x32xf32>
    %131 = vector.shape_cast %130 : vector<1x8x32xf32> to vector<8x32xf32>
    %132 = vector.broadcast %117 : vector<8x1xf32> to vector<8x32xf32>
    %133 = arith.mulf %132, %131 : vector<8x32xf32>
    %c0_96 = arith.constant 0 : index
    %c96_97 = arith.constant 96 : index
    %134 = vector.load %arg6[%c0_96, %c96_97] : memref<8x128xf32, #tpu.memory_space<vmem>>, vector<8x32xf32>
    "tpu.trace_start"() <{level = 10 : i32, message = "qk,kd->qd"}> : () -> ()
    %cst_98 = arith.constant dense<0.000000e+00> : vector<8x32xf32>
    %135 = tpu.matmul %120, %134, %cst_98 {dimension_numbers = #tpu.dot_dimension_numbers<[1], [0], [0], [1], [0, 0, 1, 1], [], []>} : vector<8x8xf32>, vector<8x32xf32>, vector<8x32xf32> -> vector<8x32xf32>
    "tpu.trace_stop"() : () -> ()
    %136 = arith.addf %133, %135 : vector<8x32xf32>
    %c3_99 = arith.constant 3 : index
    %c0_100 = arith.constant 0 : index
    %c0_101 = arith.constant 0 : index
    %137 = vector.load %arg10[%c3_99, %c0_100, %c0_101] : memref<4x8x32xf32, #tpu.memory_space<vmem>>, vector<1x8x32xf32>
    %138 = vector.shape_cast %137 : vector<1x8x32xf32> to vector<8x32xf32>
    %139 = vector.shape_cast %136 : vector<8x32xf32> to vector<1x8x32xf32>
    tpu.vector_store %arg10[%c3_99, %c0_100, %c0_101], %139 {strides = array<i32>} : memref<4x8x32xf32, #tpu.memory_space<vmem>>, vector<1x8x32xf32>,
    %c3_102 = arith.constant 3 : index
    %c0_103 = arith.constant 0 : index
    %c0_104 = arith.constant 0 : index
    %140 = vector.load %arg8[%c3_102, %c0_103, %c0_104] : memref<4x8x1xf32, #tpu.memory_space<vmem>>, vector<1x8x1xf32>
    %141 = vector.shape_cast %140 : vector<1x8x1xf32> to vector<8x1xf32>
    %142 = vector.shape_cast %115 : vector<8x1xf32> to vector<1x8x1xf32>
    tpu.vector_store %arg8[%c3_102, %c0_103, %c0_104], %142 {strides = array<i32>} : memref<4x8x1xf32, #tpu.memory_space<vmem>>, vector<1x8x1xf32>,
    %c0_i32_105 = arith.constant 0 : i32
    %143 = arith.cmpi eq, %arg3, %c0_i32_105 : i32
    %144 = arith.extui %143 : i1 to i32
    %c0_i32_106 = arith.constant 0 : i32
    %145 = arith.cmpi ne, %144, %c0_i32_106 : i32
    scf.if %145 {
      %c0_107 = arith.constant 0 : index
      %c0_108 = arith.constant 0 : index
      %c0_109 = arith.constant 0 : index
      %146 = vector.load %arg9[%c0_107, %c0_108, %c0_109] : memref<4x8x1xf32, #tpu.memory_space<vmem>>, vector<1x8x1xf32>
      %147 = vector.shape_cast %146 : vector<1x8x1xf32> to vector<8x1xf32>
      %148 = tpu.reciprocal %147 : vector<8x1xf32> -> vector<8x1xf32>
      %c0_110 = arith.constant 0 : index
      %c0_111 = arith.constant 0 : index
      %c0_112 = arith.constant 0 : index
      %149 = vector.load %arg10[%c0_110, %c0_111, %c0_112] : memref<4x8x32xf32, #tpu.memory_space<vmem>>, vector<1x8x32xf32>
      %150 = vector.shape_cast %149 : vector<1x8x32xf32> to vector<8x32xf32>
      %151 = vector.broadcast %148 : vector<8x1xf32> to vector<8x32xf32>
      %152 = arith.mulf %150, %151 : vector<8x32xf32>
      %c0_113 = arith.constant 0 : index
      %c0_114 = arith.constant 0 : index
      %153 = vector.load %arg7[%c0_113, %c0_114] : memref<8x128xf32, #tpu.memory_space<vmem>>, vector<8x32xf32>
      tpu.vector_store %arg7[%c0_113, %c0_114], %152 {strides = array<i32>} : memref<8x128xf32, #tpu.memory_space<vmem>>, vector<8x32xf32>,
      %c1_115 = arith.constant 1 : index
      %c0_116 = arith.constant 0 : index
      %c0_117 = arith.constant 0 : index
      %154 = vector.load %arg9[%c1_115, %c0_116, %c0_117] : memref<4x8x1xf32, #tpu.memory_space<vmem>>, vector<1x8x1xf32>
      %155 = vector.shape_cast %154 : vector<1x8x1xf32> to vector<8x1xf32>
      %156 = tpu.reciprocal %155 : vector<8x1xf32> -> vector<8x1xf32>
      %c1_118 = arith.constant 1 : index
      %c0_119 = arith.constant 0 : index
      %c0_120 = arith.constant 0 : index
      %157 = vector.load %arg10[%c1_118, %c0_119, %c0_120] : memref<4x8x32xf32, #tpu.memory_space<vmem>>, vector<1x8x32xf32>
      %158 = vector.shape_cast %157 : vector<1x8x32xf32> to vector<8x32xf32>
      %159 = vector.broadcast %156 : vector<8x1xf32> to vector<8x32xf32>
      %160 = arith.mulf %158, %159 : vector<8x32xf32>
      %c0_121 = arith.constant 0 : index
      %c32_122 = arith.constant 32 : index
      %161 = vector.load %arg7[%c0_121, %c32_122] : memref<8x128xf32, #tpu.memory_space<vmem>>, vector<8x32xf32>
      tpu.vector_store %arg7[%c0_121, %c32_122], %160 {strides = array<i32>} : memref<8x128xf32, #tpu.memory_space<vmem>>, vector<8x32xf32>,
      %c2_123 = arith.constant 2 : index
      %c0_124 = arith.constant 0 : index
      %c0_125 = arith.constant 0 : index
      %162 = vector.load %arg9[%c2_123, %c0_124, %c0_125] : memref<4x8x1xf32, #tpu.memory_space<vmem>>, vector<1x8x1xf32>
      %163 = vector.shape_cast %162 : vector<1x8x1xf32> to vector<8x1xf32>
      %164 = tpu.reciprocal %163 : vector<8x1xf32> -> vector<8x1xf32>
      %c2_126 = arith.constant 2 : index
      %c0_127 = arith.constant 0 : index
      %c0_128 = arith.constant 0 : index
      %165 = vector.load %arg10[%c2_126, %c0_127, %c0_128] : memref<4x8x32xf32, #tpu.memory_space<vmem>>, vector<1x8x32xf32>
      %166 = vector.shape_cast %165 : vector<1x8x32xf32> to vector<8x32xf32>
      %167 = vector.broadcast %164 : vector<8x1xf32> to vector<8x32xf32>
      %168 = arith.mulf %166, %167 : vector<8x32xf32>
      %c0_129 = arith.constant 0 : index
      %c64_130 = arith.constant 64 : index
      %169 = vector.load %arg7[%c0_129, %c64_130] : memref<8x128xf32, #tpu.memory_space<vmem>>, vector<8x32xf32>
      tpu.vector_store %arg7[%c0_129, %c64_130], %168 {strides = array<i32>} : memref<8x128xf32, #tpu.memory_space<vmem>>, vector<8x32xf32>,
      %c3_131 = arith.constant 3 : index
      %c0_132 = arith.constant 0 : index
      %c0_133 = arith.constant 0 : index
      %170 = vector.load %arg9[%c3_131, %c0_132, %c0_133] : memref<4x8x1xf32, #tpu.memory_space<vmem>>, vector<1x8x1xf32>
      %171 = vector.shape_cast %170 : vector<1x8x1xf32> to vector<8x1xf32>
      %172 = tpu.reciprocal %171 : vector<8x1xf32> -> vector<8x1xf32>
      %c3_134 = arith.constant 3 : index
      %c0_135 = arith.constant 0 : index
      %c0_136 = arith.constant 0 : index
      %173 = vector.load %arg10[%c3_134, %c0_135, %c0_136] : memref<4x8x32xf32, #tpu.memory_space<vmem>>, vector<1x8x32xf32>
      %174 = vector.shape_cast %173 : vector<1x8x32xf32> to vector<8x32xf32>
      %175 = vector.broadcast %172 : vector<8x1xf32> to vector<8x32xf32>
      %176 = arith.mulf %174, %175 : vector<8x32xf32>
      %c0_137 = arith.constant 0 : index
      %c96_138 = arith.constant 96 : index
      %177 = vector.load %arg7[%c0_137, %c96_138] : memref<8x128xf32, #tpu.memory_space<vmem>>, vector<8x32xf32>
      tpu.vector_store %arg7[%c0_137, %c96_138], %176 {strides = array<i32>} : memref<8x128xf32, #tpu.memory_space<vmem>>, vector<8x32xf32>,
    } else {
    }
    return
  }
  func.func @transform_0(%arg0: i32, %arg1: i32, %arg2: i32, %arg3: i32) -> (i32, i32) {
    %c1_i32 = arith.constant 1 : i32
    %0 = arith.muli %arg0, %c1_i32 : i32
    %1 = arith.addi %0, %arg2 : i32
    %c0_i32 = arith.constant 0 : i32
    return %1, %arg1 : i32, i32
  }
  func.func @transform_1(%arg0: i32, %arg1: i32, %arg2: i32, %arg3: i32) -> (i32, i32) {
    %c1_i32 = arith.constant 1 : i32
    %0 = arith.muli %arg0, %c1_i32 : i32
    %1 = arith.addi %0, %arg3 : i32
    %c1_i32_0 = arith.constant 1 : i32
    %2 = arith.addi %c1_i32_0, %arg1 : i32
    %c0_i32 = arith.constant 0 : i32
    return %1, %2 : i32, i32
  }
  func.func @transform_2(%arg0: i32, %arg1: i32, %arg2: i32, %arg3: i32) -> (i32, i32) {
    %c1_i32 = arith.constant 1 : i32
    %0 = arith.muli %arg0, %c1_i32 : i32
    %1 = arith.addi %0, %arg3 : i32
    %c2_i32 = arith.constant 2 : i32
    %2 = arith.addi %c2_i32, %arg1 : i32
    %c0_i32 = arith.constant 0 : i32
    return %1, %2 : i32, i32
  }
  func.func @transform_3(%arg0: i32, %arg1: i32, %arg2: i32, %arg3: i32) -> (i32, i32) {
    %c1_i32 = arith.constant 1 : i32
    %0 = arith.muli %arg0, %c1_i32 : i32
    %1 = arith.addi %0, %arg2 : i32
    %c0_i32 = arith.constant 0 : i32
    return %1, %arg1 : i32, i32
  }
}

</mosaic_0001>

<llo_original>
// kernel: transformer_encoder_block.6
$region0: #{transformer_encoder_block.6}
  #allocation0 [shape = 'u32[]', space=smem, size = 0x4, offset = 0x4, fixed_abs, tag = 'smem constant byte address 0x4 - core index']
  #allocation1 [shape = 'u32[144,128]{1,0:T(1,128)}', space=vmem, size = 0x12000, scoped, tag = 'internal scratch']
  #allocation2 [shape = 'f32[8,128]{1,0:T(8,128)}', space=vmem, size = 0x1000, scoped, tag = 'scratch operand']
  %s0 = inlined_call_operand.vmem [shape: f32[16,128], index: 0, kind: input, shape index: {}]
  %s1 = inlined_call_operand.vmem [shape: f32[128,128], index: 1, kind: input, shape index: {}]
  %s2 = inlined_call_operand.vmem [shape: f32[1,128], index: 2, kind: input, shape index: {}]
  %s3 = inlined_call_operand.vmem [shape: f32[16,128], index: 3, kind: input, shape index: {}]
  %s4 = inlined_call_operand.vmem [shape: f32[1,128], index: 4, kind: input, shape index: {}]
  %s5 = inlined_call_operand.vmem [shape: f32[1,128], index: 5, kind: input, shape index: {}]
  %s6 = inlined_call_operand.vmem [shape: f32[16,128], index: 6, kind: output, shape index: {}]
  %s7 = sld [smem:[#allocation0]]
  $region65: #{transformer_encoder_block.6} parent=0
    _
  %s9 = ssub.s32 1, %s7
  %s10 = scalar_select 0, %s9, %s7
  loop: start=0, step=1, limit=4
  $region2: #{transformer_encoder_block.6} parent=0 // loop_pre_header
    _
  $region3: #{transformer_encoder_block.6} parent=0 // loop_header
    %s12 = sphi 0, %s16
    %p13 = scmp.ge.s32.totalorder %s12, 4
    %s19 = sphi 0, %s31
    %s20 = sphi 0, %s27
    %s21 = sphi 0, %s19
    %s22 = sphi 0, %s20
    %s23 = sphi 0, %s21
    %s24 = sphi 0, %s22
    %s36 = sphi 0, %s38
    %s39 = sphi 0, %s36
    %s40 = sphi 0, %s39
    %s56 = sphi 0, %s40
    %s62 = sphi 0, %s64
    %s65 = sphi 0, %s62
    %s66 = sphi 0, %s65
    %s82 = sphi 0, %s66
    %s86 = sphi 0, %s86
    %s88 = sphi 0, %s86
    %s89 = sphi 0, %s88
    %s103 = sphi 0, %s89
    %s109 = sphi 0, %s111
    %s112 = sphi 0, %s109
    %s113 = sphi 0, %s112
    %s129 = sphi 0, %s113
    %s133 = sphi 0, %s133
    %s135 = sphi 0, %s133
    %s136 = sphi 0, %s135
    %s150 = sphi 0, %s136
    %s154 = sphi 0, %s154
    %s156 = sphi 0, %s154
    %s157 = sphi 0, %s156
    %s171 = sphi 0, %s157
    %s177 = sphi 0, %s179
    %s180 = sphi 0, %s177
    %s181 = sphi 0, %s180
    %s197 = sphi 0, %s181
  $region4: #{transformer_encoder_block.6} parent=0 // loop_header_branch
    %15 = sbr.rel (%p13) target = $region8
  $region5: #{transformer_encoder_block.6} parent=0 // loop_body
    %s17 = ssub.s32 %s12, 1
    %s18 = ssub.s32 %s12, 2
    %s25 = sadd.s32 1, %s20
    %p26 = scmp.ge.s32.totalorder %s25, 1
    %s27 = scalar_select %p26, 0, %s25
    %s28 = sadd.s32 1, %s19
    %s29 = scalar_select %p26, %s28, %s19
    %p30 = scmp.ge.s32.totalorder %s29, 2
    %s31 = scalar_select %p30, 0, %s29
    %s32 = ssub.s32 %s19, %s31
    %s33 = ssub.s32 %s20, %s27
    %s34 = sor.u32 %s32, %s33
    %p35 = scmp.eq.s32.totalorder %s34, 0
    %s37 = sadd.s32 %s36, 1
    %s38 = scalar_select %p35, %s36, %s37
    %p41 = pneg %p35
    %p42 = scmp.eq.s32.totalorder %s12, 1
    %p43 = por %p41, %p42
    %p44 = scmp.ne.s32.totalorder %s36, %s39
    %p45 = scmp.eq.s32.totalorder %s12, 0
    %p46 = por %p44, %p45
    %p47 = scmp.ne.s32.totalorder %s36, %s39
    %p48 = scmp.eq.s32.totalorder %s17, 1
    %p49 = por %p47, %p48
    %p50 = scmp.ne.s32.totalorder %s39, %s40
    %p51 = scmp.eq.s32.totalorder %s17, 0
    %p52 = por %p50, %p51
    %p53 = scmp.ne.s32.totalorder %s39, %s40
    %p54 = scmp.eq.s32.totalorder %s18, 1
    %p55 = por %p53, %p54
    %p57 = scmp.ne.s32.totalorder %s40, %s56
    %p58 = scmp.eq.s32.totalorder %s18, 0
    %p59 = por %p57, %p58
    %s60 = ssub.s32 %s20, %s27
    %p61 = scmp.eq.s32.totalorder %s60, 0
    %s63 = sadd.s32 %s62, 1
    %s64 = scalar_select %p61, %s62, %s63
    %p67 = pneg %p61
    %p68 = scmp.eq.s32.totalorder %s12, 1
    %p69 = por %p67, %p68
    %p70 = scmp.ne.s32.totalorder %s62, %s65
    %p71 = scmp.eq.s32.totalorder %s12, 0
    %p72 = por %p70, %p71
    %p73 = scmp.ne.s32.totalorder %s62, %s65
    %p74 = scmp.eq.s32.totalorder %s17, 1
    %p75 = por %p73, %p74
    %p76 = scmp.ne.s32.totalorder %s65, %s66
    %p77 = scmp.eq.s32.totalorder %s17, 0
    %p78 = por %p76, %p77
    %p79 = scmp.ne.s32.totalorder %s65, %s66
    %p80 = scmp.eq.s32.totalorder %s18, 1
    %p81 = por %p79, %p80
    %p83 = scmp.ne.s32.totalorder %s66, %s82
    %p84 = scmp.eq.s32.totalorder %s18, 0
    %p85 = por %p83, %p84
    %s87 = sadd.s32 %s86, 1
    %p90 = scmp.eq.s32.totalorder %s12, 1
    %p91 = scmp.ne.s32.totalorder %s86, %s88
    %p92 = scmp.eq.s32.totalorder %s12, 0
    %p93 = por %p91, %p92
    %p94 = scmp.ne.s32.totalorder %s86, %s88
    %p95 = scmp.eq.s32.totalorder %s17, 1
    %p96 = por %p94, %p95
    %p97 = scmp.ne.s32.totalorder %s88, %s89
    %p98 = scmp.eq.s32.totalorder %s17, 0
    %p99 = por %p97, %p98
    %p100 = scmp.ne.s32.totalorder %s88, %s89
    %p101 = scmp.eq.s32.totalorder %s18, 1
    %p102 = por %p100, %p101
    %p104 = scmp.ne.s32.totalorder %s89, %s103
    %p105 = scmp.eq.s32.totalorder %s18, 0
    %p106 = por %p104, %p105
    %s107 = ssub.s32 %s19, %s31
    %p108 = scmp.eq.s32.totalorder %s107, 0
    %s110 = sadd.s32 %s109, 1
    %s111 = scalar_select %p108, %s109, %s110
    %p114 = pneg %p108
    %p115 = scmp.eq.s32.totalorder %s12, 1
    %p116 = por %p114, %p115
    %p117 = scmp.ne.s32.totalorder %s109, %s112
    %p118 = scmp.eq.s32.totalorder %s12, 0
    %p119 = por %p117, %p118
    %p120 = scmp.ne.s32.totalorder %s109, %s112
    %p121 = scmp.eq.s32.totalorder %s17, 1
    %p122 = por %p120, %p121
    %p123 = scmp.ne.s32.totalorder %s112, %s113
    %p124 = scmp.eq.s32.totalorder %s17, 0
    %p125 = por %p123, %p124
    %p126 = scmp.ne.s32.totalorder %s112, %s113
    %p127 = scmp.eq.s32.totalorder %s18, 1
    %p128 = por %p126, %p127
    %p130 = scmp.ne.s32.totalorder %s113, %s129
    %p131 = scmp.eq.s32.totalorder %s18, 0
    %p132 = por %p130, %p131
    %s134 = sadd.s32 %s133, 1
    %p137 = scmp.eq.s32.totalorder %s12, 1
    %p138 = scmp.ne.s32.totalorder %s133, %s135
    %p139 = scmp.eq.s32.totalorder %s12, 0
    %p140 = por %p138, %p139
    %p141 = scmp.ne.s32.totalorder %s133, %s135
    %p142 = scmp.eq.s32.totalorder %s17, 1
    %p143 = por %p141, %p142
    %p144 = scmp.ne.s32.totalorder %s135, %s136
    %p145 = scmp.eq.s32.totalorder %s17, 0
    %p146 = por %p144, %p145
    %p147 = scmp.ne.s32.totalorder %s135, %s136
    %p148 = scmp.eq.s32.totalorder %s18, 1
    %p149 = por %p147, %p148
    %p151 = scmp.ne.s32.totalorder %s136, %s150
    %p152 = scmp.eq.s32.totalorder %s18, 0
    %p153 = por %p151, %p152
    %s155 = sadd.s32 %s154, 1
    %p158 = scmp.eq.s32.totalorder %s12, 1
    %p159 = scmp.ne.s32.totalorder %s154, %s156
    %p160 = scmp.eq.s32.totalorder %s12, 0
    %p161 = por %p159, %p160
    %p162 = scmp.ne.s32.totalorder %s154, %s156
    %p163 = scmp.eq.s32.totalorder %s17, 1
    %p164 = por %p162, %p163
    %p165 = scmp.ne.s32.totalorder %s156, %s157
    %p166 = scmp.eq.s32.totalorder %s17, 0
    %p167 = por %p165, %p166
    %p168 = scmp.ne.s32.totalorder %s156, %s157
    %p169 = scmp.eq.s32.totalorder %s18, 1
    %p170 = por %p168, %p169
    %p172 = scmp.ne.s32.totalorder %s157, %s171
    %p173 = scmp.eq.s32.totalorder %s18, 0
    %p174 = por %p172, %p173
    %s175 = ssub.s32 %s19, %s31
    %p176 = scmp.eq.s32.totalorder %s175, 0
    %s178 = sadd.s32 %s177, 1
    %s179 = scalar_select %p176, %s177, %s178
    %p182 = pneg %p176
    %p183 = scmp.eq.s32.totalorder %s12, 1
    %p184 = por %p182, %p183
    %p185 = scmp.ne.s32.totalorder %s177, %s180
    %p186 = scmp.eq.s32.totalorder %s12, 0
    %p187 = por %p185, %p186
    %p188 = scmp.ne.s32.totalorder %s177, %s180
    %p189 = scmp.eq.s32.totalorder %s17, 1
    %p190 = por %p188, %p189
    %p191 = scmp.ne.s32.totalorder %s180, %s181
    %p192 = scmp.eq.s32.totalorder %s17, 0
    %p193 = por %p191, %p192
    %p194 = scmp.ne.s32.totalorder %s180, %s181
    %p195 = scmp.eq.s32.totalorder %s18, 1
    %p196 = por %p194, %p195
    %p198 = scmp.ne.s32.totalorder %s181, %s197
    %p199 = scmp.eq.s32.totalorder %s18, 0
    %p200 = por %p198, %p199
    %p201 = scmp.le.s32.totalorder 1, %s12
    %p202 = scmp.lt.s32.totalorder %s12, 3
    %p203 = pnand %p201, %p202
    %p204 = pneg %p203
    // Predicated region
    $region9: #{transformer_encoder_block.6} parent=5 // pred_check
      _
    $region10: #{transformer_encoder_block.6} parent=5 // pred_check_branch
      %206 = sbr.rel (%p203) target = $region12
    $region11: #{transformer_encoder_block.6} parent=5 // pred_region
      %s207 = ssub.s32 %s12, 1
      // Predicated region
      $region13: #{transformer_encoder_block.6} parent=11 // pred_check
        %p208 = pneg %p78
      $region14: #{transformer_encoder_block.6} parent=11 // pred_check_branch
        %210 = sbr.rel (%p208) target = $region16
      $region15: #{transformer_encoder_block.6} parent=11 // pred_region
        %s211 = smul.u32 16, %s22
        %p212 = scmp.lt.s32.totalorder %s211, 15
        %s213 = scalar_select %p212, %s211, 15
        %s214 = smul.addr %s213, 8
        %s215 = scalar_lea.vmem %s1, %s214
        %s216 = smul.u32 16, %s22
      $region16: #{transformer_encoder_block.6} parent=11 // pred_fallthru
        _
      // Predicated region
      $region17: #{transformer_encoder_block.6} parent=11 // pred_check
        %p217 = pneg %p99
      $region18: #{transformer_encoder_block.6} parent=11 // pred_check_branch
        %219 = sbr.rel (%p217) target = $region20
      $region19: #{transformer_encoder_block.6} parent=11 // pred_region
        _
      $region20: #{transformer_encoder_block.6} parent=11 // pred_fallthru
        _
      // Predicated region
      $region21: #{transformer_encoder_block.6} parent=11 // pred_check
        %p220 = pneg %p146
      $region22: #{transformer_encoder_block.6} parent=11 // pred_check_branch
        %222 = sbr.rel (%p220) target = $region24
      $region23: #{transformer_encoder_block.6} parent=11 // pred_region
        _
      $region24: #{transformer_encoder_block.6} parent=11 // pred_fallthru
        _
      // Predicated region
      $region25: #{transformer_encoder_block.6} parent=11 // pred_check
        %p223 = pneg %p167
      $region26: #{transformer_encoder_block.6} parent=11 // pred_check_branch
        %225 = sbr.rel (%p223) target = $region28
      $region27: #{transformer_encoder_block.6} parent=11 // pred_region
        _
      $region28: #{transformer_encoder_block.6} parent=11 // pred_fallthru
        _
    $region12: #{transformer_encoder_block.6} parent=5 // pred_fallthru
      _
    %p226 = scmp.lt.s32.totalorder %s12, 2
    // Predicated region
    $region29: #{transformer_encoder_block.6} parent=5 // pred_check
      %p227 = pneg %p226
    $region30: #{transformer_encoder_block.6} parent=5 // pred_check_branch
      %229 = sbr.rel (%p227) target = $region32
    $region31: #{transformer_encoder_block.6} parent=5 // pred_region
      // Predicated region
      $region33: #{transformer_encoder_block.6} parent=31 // pred_check
        %p230 = pneg %p46
      $region34: #{transformer_encoder_block.6} parent=31 // pred_check_branch
        %232 = sbr.rel (%p230) target = $region36
      $region35: #{transformer_encoder_block.6} parent=31 // pred_region
        %p233 = scmp.lt.s32.totalorder %s19, 1
        %s234 = scalar_select %p233, %s19, 1
        %p235 = scmp.lt.s32.totalorder %s20, 0
        %s236 = scalar_select %p235, %s20, 0
        %s237 = sadd.s32 %s236, %s234
        %s238 = smul.addr %s237, 8
        %s239 = scalar_lea.vmem %s0, %s238
      $region36: #{transformer_encoder_block.6} parent=31 // pred_fallthru
        _
      // Predicated region
      $region37: #{transformer_encoder_block.6} parent=31 // pred_check
        %p240 = pneg %p119
      $region38: #{transformer_encoder_block.6} parent=31 // pred_check_branch
        %242 = sbr.rel (%p240) target = $region40
      $region39: #{transformer_encoder_block.6} parent=31 // pred_region
        %p243 = scmp.lt.s32.totalorder %s19, 1
        %s244 = scalar_select %p243, %s19, 1
        %s245 = smul.addr %s244, 8
        %s246 = scalar_lea.vmem %s3, %s245
      $region40: #{transformer_encoder_block.6} parent=31 // pred_fallthru
        _
    $region32: #{transformer_encoder_block.6} parent=5 // pred_fallthru
      _
    %p247 = scmp.le.s32.totalorder 1, %s12
    %p248 = scmp.lt.s32.totalorder %s12, 3
    %p249 = pnand %p247, %p248
    %p250 = pneg %p249
    // Predicated region
    $region41: #{transformer_encoder_block.6} parent=5 // pred_check
      _
    $region42: #{transformer_encoder_block.6} parent=5 // pred_check_branch
      %252 = sbr.rel (%p249) target = $region44
    $region43: #{transformer_encoder_block.6} parent=5 // pred_region
      %s253 = ssub.s32 %s12, 1
      %p254 = scmp.lt.s32.totalorder %s21, 1
      %s255 = scalar_select %p254, %s21, 1
      %p256 = scmp.lt.s32.totalorder %s22, 0
      %s257 = scalar_select %p256, %s22, 0
      %s258 = sadd.s32 %s257, %s255
      %s259 = smul.addr %s258, 8
      %s260 = scalar_lea.vmem %s0, %s259
      %p261 = pneg %p52
      %p262 = pneg %p49
      %s263 = smul.u32 16, %s22
      %p264 = scmp.lt.s32.totalorder %s263, 15
      %s265 = scalar_select %p264, %s263, 15
      %s266 = smul.addr %s265, 8
      %s267 = scalar_lea.vmem %s1, %s266
      %p268 = pneg %p78
      %p269 = pneg %p75
      %p270 = pneg %p99
      %p271 = pneg %p96
      %p272 = scmp.lt.s32.totalorder %s21, 1
      %s273 = scalar_select %p272, %s21, 1
      %s274 = smul.addr %s273, 8
      %s275 = scalar_lea.vmem %s3, %s274
      %p276 = pneg %p125
      %p277 = pneg %p122
      %p278 = pneg %p146
      %p279 = pneg %p143
      %p280 = pneg %p167
      %p281 = pneg %p164
      %p282 = pneg %p193
      %p283 = pneg %p190
      %p284 = scmp.lt.s32.totalorder %s21, 1
      %s285 = scalar_select %p284, %s21, 1
      %s286 = smul.addr %s285, 8
      %s287 = scalar_lea.vmem %s6, %s286
      %p288 = scmp.lt.s32.totalorder %s21, 1
      %s289 = scalar_select %p288, %s21, 1
      %p290 = scmp.lt.s32.totalorder %s22, 0
      %s291 = scalar_select %p290, %s22, 0
      %s292 = sadd.s32 %s291, %s289
      %s293 = smul.addr %s292, 8
      %s294 = scalar_lea.vmem %s0, %s293
      %s295 = smul.u32 16, %s22
      %p296 = scmp.lt.s32.totalorder %s295, 15
      %s297 = scalar_select %p296, %s295, 15
      %s298 = smul.addr %s297, 8
      %s299 = scalar_lea.vmem %s1, %s298
      %s300 = smul.u32 16, %s22
      %p301 = scmp.lt.s32.totalorder %s21, 1
      %s302 = scalar_select %p301, %s21, 1
      %s303 = smul.addr %s302, 8
      %s304 = scalar_lea.vmem %s3, %s303
      %p305 = scmp.lt.s32.totalorder %s21, 1
      %s306 = scalar_select %p305, %s21, 1
      %s307 = smul.addr %s306, 8
      %s308 = scalar_lea.vmem %s6, %s307
      %p309 = scmp.eq.s32.totalorder %s22, 0
      // Predicated region
      $region45: #{transformer_encoder_block.6} parent=43 // pred_check
        %p310 = pneg %p309
      $region46: #{transformer_encoder_block.6} parent=43 // pred_check_branch
        %312 = sbr.rel (%p310) target = $region48
      $region47: #{transformer_encoder_block.6} parent=43 // pred_region
        %v313 = vld [vmem:[%s2] sm:$0x1]
        %v315 = vlaneseq
        %v316 = vshrl.u32 %v315, 7
        %v317 = vsub.s32 0, %v316
        %v318 = vrot.slane %v313, %v317
        %320 = vst [vmem:[#allocation2] sm:$0xff] %v318
      $region48: #{transformer_encoder_block.6} parent=43 // pred_fallthru
        _
      %v321 = vld [vmem:[#allocation2] sm:$0xff]
      %v322 = vld [vmem:[%s294] sm:$0xff]
      %v323 = vld [vmem:[%s299] sm:$0xff]
      %v324 = vld [vmem:[%s299 + $0x8] sm:$0xff]
      %v325 = vld [vmem:[%s299 + $0x10] sm:$0xff]
      %v326 = vld [vmem:[%s299 + $0x18] sm:$0xff]
      %v327 = vld [vmem:[%s299 + $0x20] sm:$0xff]
      %v328 = vld [vmem:[%s299 + $0x28] sm:$0xff]
      %v329 = vld [vmem:[%s299 + $0x30] sm:$0xff]
      %v330 = vld [vmem:[%s299 + $0x38] sm:$0xff]
      %v331 = vld [vmem:[%s299 + $0x40] sm:$0xff]
      %v332 = vld [vmem:[%s299 + $0x48] sm:$0xff]
      %v333 = vld [vmem:[%s299 + $0x50] sm:$0xff]
      %v334 = vld [vmem:[%s299 + $0x58] sm:$0xff]
      %v335 = vld [vmem:[%s299 + $0x60] sm:$0xff]
      %v336 = vld [vmem:[%s299 + $0x68] sm:$0xff]
      %v337 = vld [vmem:[%s299 + $0x70] sm:$0xff]
      %v338 = vld [vmem:[%s299 + $0x78] sm:$0xff]
      %339 = vmatprep.subr.mxu0 0.0
      %340 = vmatpush1.msra.mxu0 %v323
      %341 = vmatprep.subr.mxu0 0.0
      %342 = vmatpush1.msra.mxu0 %v324
      %343 = vmatprep.subr.mxu0 0.0
      %344 = vmatpush1.msra.mxu0 %v325
      %345 = vmatprep.subr.mxu0 0.0
      %346 = vmatpush1.msra.mxu0 %v326
      %347 = vmatprep.subr.mxu0 0.0
      %348 = vmatpush1.msra.mxu0 %v327
      %349 = vmatprep.subr.mxu0 0.0
      %350 = vmatpush1.msra.mxu0 %v328
      %351 = vmatprep.subr.mxu0 0.0
      %352 = vmatpush1.msra.mxu0 %v329
      %353 = vmatprep.subr.mxu0 0.0
      %354 = vmatpush1.msra.mxu0 %v330
      %355 = vmatprep.subr.mxu0 0.0
      %356 = vmatpush1.msra.mxu0 %v331
      %357 = vmatprep.subr.mxu0 0.0
      %358 = vmatpush1.msra.mxu0 %v332
      %359 = vmatprep.subr.mxu0 0.0
      %360 = vmatpush1.msra.mxu0 %v333
      %361 = vmatprep.subr.mxu0 0.0
      %362 = vmatpush1.msra.mxu0 %v334
      %363 = vmatprep.subr.mxu0 0.0
      %364 = vmatpush1.msra.mxu0 %v335
      %365 = vmatprep.subr.mxu0 0.0
      %366 = vmatpush1.msra.mxu0 %v336
      %367 = vmatprep.subr.mxu0 0.0
      %368 = vmatpush1.msra.mxu0 %v337
      %369 = vmatprep.subr.mxu0 0.0
      %370 = vmatpush1.msra.mxu0 %v338
      %371 = vmatprep.subr.mxu0 0.0
      %372 = vmatpush1.msra.mxu0 0.0
      %373 = vmatprep.subr.mxu0 0.0
      %374 = vmatpush1.msra.mxu0 0.0
      %375 = vmatprep.subr.mxu0 0.0
      %376 = vmatpush1.msra.mxu0 0.0
      %377 = vmatprep.subr.mxu0 0.0
      %378 = vmatpush1.msra.mxu0 0.0
      %379 = vmatprep.subr.mxu0 0.0
      %380 = vmatpush1.msra.mxu0 0.0
      %381 = vmatprep.subr.mxu0 0.0
      %382 = vmatpush1.msra.mxu0 0.0
      %383 = vmatprep.subr.mxu0 0.0
      %384 = vmatpush1.msra.mxu0 0.0
      %385 = vmatprep.subr.mxu0 0.0
      %386 = vmatpush1.msra.mxu0 0.0
      %387 = vmatprep.subr.mxu0 0.0
      %388 = vmatpush1.msra.mxu0 0.0
      %389 = vmatprep.subr.mxu0 0.0
      %390 = vmatpush1.msra.mxu0 0.0
      %391 = vmatprep.subr.mxu0 0.0
      %392 = vmatpush1.msra.mxu0 0.0
      %393 = vmatprep.subr.mxu0 0.0
      %394 = vmatpush1.msra.mxu0 0.0
      %395 = vmatprep.subr.mxu0 0.0
      %396 = vmatpush1.msra.mxu0 0.0
      %397 = vmatprep.subr.mxu0 0.0
      %398 = vmatpush1.msra.mxu0 0.0
      %399 = vmatprep.subr.mxu0 0.0
      %400 = vmatpush1.msra.mxu0 0.0
      %401 = vmatprep.subr.mxu0 0.0
      %402 = vmatpush1.msra.mxu0 0.0
      %403 = vmatprep.mubr.f32.mxu0 0.0
      %404 = vmatmul.mubr.f32.gmra.mrb[0].mxu0 %v322
      %v405 = vpop.f32.mrb[0].mxu0
      %v406 = vadd.f32 0.0, %v405
      %v407 = vpop.f32.mrb[0].mxu0
      %408 = vdwg.mxu0
      %v409 = vadd.f32 %v321, %v406
      %410 = vst [vmem:[#allocation2] sm:$0xff] %v409
      // Predicated region
      $region49: #{transformer_encoder_block.6} parent=43 // pred_check
        %p411 = pneg %p309
      $region50: #{transformer_encoder_block.6} parent=43 // pred_check_branch
        %413 = sbr.rel (%p411) target = $region52
      $region51: #{transformer_encoder_block.6} parent=43 // pred_region
        %v414 = vld [vmem:[#allocation2] sm:$0xff]
        %v415 = vld [vmem:[%s304] sm:$0xff]
        %v416 = vadd.f32 %v414, %v415
        %v417 = vld [vmem:[%s4] sm:$0x1]
        %v418 = vld [vmem:[%s5] sm:$0x1]
        %419 = vadd.xlane.f32.xlu0 %v416
        %v420 = vpop.xlane.xlu0 %419
        %v421 = vrcp.pop 128.0
        %v422 = vmul.f32 %v420, %v421
        %v423 = vsub.f32 %v416, %v422
        %v424 = vmul.f32 %v423, %v423
        %425 = vadd.xlane.f32.xlu0 %v424
        %v426 = vpop.xlane.xlu0 %425
        %v427 = vrcp.pop 127.0
        %v428 = vmul.f32 %v426, %v427
        %v430 = vlaneseq
        %v431 = vshrl.u32 %v430, 7
        %v432 = vsub.s32 0, %v431
        %v433 = vrot.slane %v417, %v432
        %v435 = vmul.f32 %v433, %v423
        %v436 = vrsqrt.pop %v428
        %v437 = vmul.f32 %v428, %v436
        %vm438 = vcmp.eq.f32.partialorder %v428, inf
        %v439 = vsel %vm438, %v428, %v437
        %vm440 = vcmp.eq.f32.partialorder %v428, 0.0
        %v441 = vand.u32 %v428, 2147483648
        %v442 = vsel %vm440, %v441, %v439
        %v443 = vadd.f32 %v442, 1e-06
        %v444 = vrcp.pop %v443
        %v445 = vmul.f32 %v435, %v444
        %v447 = vlaneseq
        %v448 = vshrl.u32 %v447, 7
        %v449 = vsub.s32 0, %v448
        %v450 = vrot.slane %v418, %v449
        %v452 = vadd.f32 %v445, %v450
        %453 = vst [vmem:[%s308] sm:$0xff] %v452
      $region52: #{transformer_encoder_block.6} parent=43 // pred_fallthru
        _
      %p454 = scmp.lt.s32.totalorder %s21, 1
      %s455 = scalar_select %p454, %s21, 1
      %s456 = smul.addr %s455, 8
      %s457 = scalar_lea.vmem %s6, %s456
      // Predicated region
      $region53: #{transformer_encoder_block.6} parent=43 // pred_check
        %p458 = pneg %p190
      $region54: #{transformer_encoder_block.6} parent=43 // pred_check_branch
        %460 = sbr.rel (%p458) target = $region56
      $region55: #{transformer_encoder_block.6} parent=43 // pred_region
        _
      $region56: #{transformer_encoder_block.6} parent=43 // pred_fallthru
        _
    $region44: #{transformer_encoder_block.6} parent=5 // pred_fallthru
      _
    %p461 = scmp.le.s32.totalorder 2, %s12
    // Predicated region
    $region57: #{transformer_encoder_block.6} parent=5 // pred_check
      %p462 = pneg %p461
    $region58: #{transformer_encoder_block.6} parent=5 // pred_check_branch
      %464 = sbr.rel (%p462) target = $region60
    $region59: #{transformer_encoder_block.6} parent=5 // pred_region
      %s465 = ssub.s32 %s12, 2
      // Predicated region
      $region61: #{transformer_encoder_block.6} parent=59 // pred_check
        %p466 = pneg %p196
      $region62: #{transformer_encoder_block.6} parent=59 // pred_check_branch
        %468 = sbr.rel (%p466) target = $region64
      $region63: #{transformer_encoder_block.6} parent=59 // pred_region
        %p469 = scmp.lt.s32.totalorder %s23, 1
        %s470 = scalar_select %p469, %s23, 1
        %s471 = smul.addr %s470, 8
        %s472 = scalar_lea.vmem %s6, %s471
      $region64: #{transformer_encoder_block.6} parent=59 // pred_fallthru
        _
    $region60: #{transformer_encoder_block.6} parent=5 // pred_fallthru
      _
  $region6: #{transformer_encoder_block.6} parent=0 // loop_footer
    %s16 = sadd.s32 1, %s12
  $region7: #{transformer_encoder_block.6} parent=0 // loop_footer_branch
    %11 = sbr.rel target = $region3
  $region8: #{transformer_encoder_block.6} parent=0 // loop_exit
    _

// kernel: transformer_encoder_block.7
$region0: #{transformer_encoder_block.7}
  #allocation0 [shape = 'u32[]', space=smem, size = 0x4, offset = 0x4, fixed_abs, tag = 'smem constant byte address 0x4 - core index']
  #allocation1 [shape = 'u32[144,128]{1,0:T(1,128)}', space=vmem, size = 0x12000, scoped, tag = 'internal scratch']
  #allocation2 [shape = 'f32[8,128]{1,0:T(8,128)}', space=vmem, size = 0x1000, scoped, tag = 'scratch operand']
  %s0 = inlined_call_operand.vmem [shape: f32[16,128], index: 0, kind: input, shape index: {}]
  %s1 = inlined_call_operand.vmem [shape: f32[128,256], index: 1, kind: input, shape index: {}]
  %s2 = inlined_call_operand.vmem [shape: f32[1,256], index: 2, kind: input, shape index: {}]
  %s3 = inlined_call_operand.vmem [shape: f32[256,128], index: 3, kind: input, shape index: {}]
  %s4 = inlined_call_operand.vmem [shape: f32[1,128], index: 4, kind: input, shape index: {}]
  %s5 = inlined_call_operand.vmem [shape: f32[1,128], index: 5, kind: input, shape index: {}]
  %s6 = inlined_call_operand.vmem [shape: f32[1,128], index: 6, kind: input, shape index: {}]
  %s7 = inlined_call_operand.hbm [shape: f32[16,128], index: 7, kind: output, shape index: {}]
  %s8 = sld [smem:[#allocation0]]
  $region69: #{transformer_encoder_block.7} parent=0
    _
  %s10 = ssub.s32 1, %s8
  %s11 = scalar_select 0, %s10, %s8
  $region1: #{transformer_encoder_block.7} parent=0
    #allocation3 [shape = 'u8[8192]{0}', space=vmem, size = 0x2000, scoped, tag = 'output window, operand 0']
    #allocation4 [shape = 's32[2]{0}', space=sflag, size = 0x8, scoped, tag = 'scoped memory for transformer_encoder_block.7']
    %12 = vsyncpa [#allocation4], 0
    %s13 = scalar_lea.sflag [#allocation4], 1
    %14 = vsyncpa %s13, 0
    loop: start=0, step=1, limit=4
    $region2: #{transformer_encoder_block.7} parent=1 // loop_pre_header
      _
    $region3: #{transformer_encoder_block.7} parent=1 // loop_header
      %s16 = sphi 0, %s20
      %p17 = scmp.ge.s32.totalorder %s16, 4
      %s23 = sphi 0, %s35
      %s24 = sphi 0, %s31
      %s25 = sphi 0, %s23
      %s26 = sphi 0, %s24
      %s27 = sphi 0, %s25
      %s28 = sphi 0, %s26
      %s38 = sphi 0, %s40
      %s41 = sphi 0, %s38
      %s42 = sphi 0, %s41
      %s58 = sphi 0, %s42
      %s64 = sphi 0, %s66
      %s67 = sphi 0, %s64
      %s68 = sphi 0, %s67
      %s84 = sphi 0, %s68
      %s90 = sphi 0, %s92
      %s93 = sphi 0, %s90
      %s94 = sphi 0, %s93
      %s110 = sphi 0, %s94
      %s116 = sphi 0, %s118
      %s119 = sphi 0, %s116
      %s120 = sphi 0, %s119
      %s136 = sphi 0, %s120
      %s140 = sphi 0, %s140
      %s142 = sphi 0, %s140
      %s143 = sphi 0, %s142
      %s157 = sphi 0, %s143
      %s161 = sphi 0, %s161
      %s163 = sphi 0, %s161
      %s164 = sphi 0, %s163
      %s178 = sphi 0, %s164
      %s182 = sphi 0, %s182
      %s184 = sphi 0, %s182
      %s185 = sphi 0, %s184
      %s199 = sphi 0, %s185
      %s205 = sphi 0, %s207
      %s208 = sphi 0, %s205
      %s209 = sphi 0, %s208
      %s225 = sphi 0, %s209
    $region4: #{transformer_encoder_block.7} parent=1 // loop_header_branch
      %19 = sbr.rel (%p17) target = $region8
    $region5: #{transformer_encoder_block.7} parent=1 // loop_body
      %s21 = ssub.s32 %s16, 1
      %s22 = ssub.s32 %s16, 2
      %s29 = sadd.s32 1, %s24
      %p30 = scmp.ge.s32.totalorder %s29, 1
      %s31 = scalar_select %p30, 0, %s29
      %s32 = sadd.s32 1, %s23
      %s33 = scalar_select %p30, %s32, %s23
      %p34 = scmp.ge.s32.totalorder %s33, 2
      %s35 = scalar_select %p34, 0, %s33
      %s36 = ssub.s32 %s23, %s35
      %p37 = scmp.eq.s32.totalorder %s36, 0
      %s39 = sadd.s32 %s38, 1
      %s40 = scalar_select %p37, %s38, %s39
      %p43 = pneg %p37
      %p44 = scmp.eq.s32.totalorder %s16, 1
      %p45 = por %p43, %p44
      %p46 = scmp.ne.s32.totalorder %s38, %s41
      %p47 = scmp.eq.s32.totalorder %s16, 0
      %p48 = por %p46, %p47
      %p49 = scmp.ne.s32.totalorder %s38, %s41
      %p50 = scmp.eq.s32.totalorder %s21, 1
      %p51 = por %p49, %p50
      %p52 = scmp.ne.s32.totalorder %s41, %s42
      %p53 = scmp.eq.s32.totalorder %s21, 0
      %p54 = por %p52, %p53
      %p55 = scmp.ne.s32.totalorder %s41, %s42
      %p56 = scmp.eq.s32.totalorder %s22, 1
      %p57 = por %p55, %p56
      %p59 = scmp.ne.s32.totalorder %s42, %s58
      %p60 = scmp.eq.s32.totalorder %s22, 0
      %p61 = por %p59, %p60
      %s62 = ssub.s32 %s24, %s31
      %p63 = scmp.eq.s32.totalorder %s62, 0
      %s65 = sadd.s32 %s64, 1
      %s66 = scalar_select %p63, %s64, %s65
      %p69 = pneg %p63
      %p70 = scmp.eq.s32.totalorder %s16, 1
      %p71 = por %p69, %p70
      %p72 = scmp.ne.s32.totalorder %s64, %s67
      %p73 = scmp.eq.s32.totalorder %s16, 0
      %p74 = por %p72, %p73
      %p75 = scmp.ne.s32.totalorder %s64, %s67
      %p76 = scmp.eq.s32.totalorder %s21, 1
      %p77 = por %p75, %p76
      %p78 = scmp.ne.s32.totalorder %s67, %s68
      %p79 = scmp.eq.s32.totalorder %s21, 0
      %p80 = por %p78, %p79
      %p81 = scmp.ne.s32.totalorder %s67, %s68
      %p82 = scmp.eq.s32.totalorder %s22, 1
      %p83 = por %p81, %p82
      %p85 = scmp.ne.s32.totalorder %s68, %s84
      %p86 = scmp.eq.s32.totalorder %s22, 0
      %p87 = por %p85, %p86
      %s88 = ssub.s32 %s24, %s31
      %p89 = scmp.eq.s32.totalorder %s88, 0
      %s91 = sadd.s32 %s90, 1
      %s92 = scalar_select %p89, %s90, %s91
      %p95 = pneg %p89
      %p96 = scmp.eq.s32.totalorder %s16, 1
      %p97 = por %p95, %p96
      %p98 = scmp.ne.s32.totalorder %s90, %s93
      %p99 = scmp.eq.s32.totalorder %s16, 0
      %p100 = por %p98, %p99
      %p101 = scmp.ne.s32.totalorder %s90, %s93
      %p102 = scmp.eq.s32.totalorder %s21, 1
      %p103 = por %p101, %p102
      %p104 = scmp.ne.s32.totalorder %s93, %s94
      %p105 = scmp.eq.s32.totalorder %s21, 0
      %p106 = por %p104, %p105
      %p107 = scmp.ne.s32.totalorder %s93, %s94
      %p108 = scmp.eq.s32.totalorder %s22, 1
      %p109 = por %p107, %p108
      %p111 = scmp.ne.s32.totalorder %s94, %s110
      %p112 = scmp.eq.s32.totalorder %s22, 0
      %p113 = por %p111, %p112
      %s114 = ssub.s32 %s24, %s31
      %p115 = scmp.eq.s32.totalorder %s114, 0
      %s117 = sadd.s32 %s116, 1
      %s118 = scalar_select %p115, %s116, %s117
      %p121 = pneg %p115
      %p122 = scmp.eq.s32.totalorder %s16, 1
      %p123 = por %p121, %p122
      %p124 = scmp.ne.s32.totalorder %s116, %s119
      %p125 = scmp.eq.s32.totalorder %s16, 0
      %p126 = por %p124, %p125
      %p127 = scmp.ne.s32.totalorder %s116, %s119
      %p128 = scmp.eq.s32.totalorder %s21, 1
      %p129 = por %p127, %p128
      %p130 = scmp.ne.s32.totalorder %s119, %s120
      %p131 = scmp.eq.s32.totalorder %s21, 0
      %p132 = por %p130, %p131
      %p133 = scmp.ne.s32.totalorder %s119, %s120
      %p134 = scmp.eq.s32.totalorder %s22, 1
      %p135 = por %p133, %p134
      %p137 = scmp.ne.s32.totalorder %s120, %s136
      %p138 = scmp.eq.s32.totalorder %s22, 0
      %p139 = por %p137, %p138
      %s141 = sadd.s32 %s140, 1
      %p144 = scmp.eq.s32.totalorder %s16, 1
      %p145 = scmp.ne.s32.totalorder %s140, %s142
      %p146 = scmp.eq.s32.totalorder %s16, 0
      %p147 = por %p145, %p146
      %p148 = scmp.ne.s32.totalorder %s140, %s142
      %p149 = scmp.eq.s32.totalorder %s21, 1
      %p150 = por %p148, %p149
      %p151 = scmp.ne.s32.totalorder %s142, %s143
      %p152 = scmp.eq.s32.totalorder %s21, 0
      %p153 = por %p151, %p152
      %p154 = scmp.ne.s32.totalorder %s142, %s143
      %p155 = scmp.eq.s32.totalorder %s22, 1
      %p156 = por %p154, %p155
      %p158 = scmp.ne.s32.totalorder %s143, %s157
      %p159 = scmp.eq.s32.totalorder %s22, 0
      %p160 = por %p158, %p159
      %s162 = sadd.s32 %s161, 1
      %p165 = scmp.eq.s32.totalorder %s16, 1
      %p166 = scmp.ne.s32.totalorder %s161, %s163
      %p167 = scmp.eq.s32.totalorder %s16, 0
      %p168 = por %p166, %p167
      %p169 = scmp.ne.s32.totalorder %s161, %s163
      %p170 = scmp.eq.s32.totalorder %s21, 1
      %p171 = por %p169, %p170
      %p172 = scmp.ne.s32.totalorder %s163, %s164
      %p173 = scmp.eq.s32.totalorder %s21, 0
      %p174 = por %p172, %p173
      %p175 = scmp.ne.s32.totalorder %s163, %s164
      %p176 = scmp.eq.s32.totalorder %s22, 1
      %p177 = por %p175, %p176
      %p179 = scmp.ne.s32.totalorder %s164, %s178
      %p180 = scmp.eq.s32.totalorder %s22, 0
      %p181 = por %p179, %p180
      %s183 = sadd.s32 %s182, 1
      %p186 = scmp.eq.s32.totalorder %s16, 1
      %p187 = scmp.ne.s32.totalorder %s182, %s184
      %p188 = scmp.eq.s32.totalorder %s16, 0
      %p189 = por %p187, %p188
      %p190 = scmp.ne.s32.totalorder %s182, %s184
      %p191 = scmp.eq.s32.totalorder %s21, 1
      %p192 = por %p190, %p191
      %p193 = scmp.ne.s32.totalorder %s184, %s185
      %p194 = scmp.eq.s32.totalorder %s21, 0
      %p195 = por %p193, %p194
      %p196 = scmp.ne.s32.totalorder %s184, %s185
      %p197 = scmp.eq.s32.totalorder %s22, 1
      %p198 = por %p196, %p197
      %p200 = scmp.ne.s32.totalorder %s185, %s199
      %p201 = scmp.eq.s32.totalorder %s22, 0
      %p202 = por %p200, %p201
      %s203 = ssub.s32 %s23, %s35
      %p204 = scmp.eq.s32.totalorder %s203, 0
      %s206 = sadd.s32 %s205, 1
      %s207 = scalar_select %p204, %s205, %s206
      %p210 = pneg %p204
      %p211 = scmp.eq.s32.totalorder %s16, 1
      %p212 = por %p210, %p211
      %p213 = scmp.ne.s32.totalorder %s205, %s208
      %p214 = scmp.eq.s32.totalorder %s16, 0
      %p215 = por %p213, %p214
      %p216 = scmp.ne.s32.totalorder %s205, %s208
      %p217 = scmp.eq.s32.totalorder %s21, 1
      %p218 = por %p216, %p217
      %p219 = scmp.ne.s32.totalorder %s208, %s209
      %p220 = scmp.eq.s32.totalorder %s21, 0
      %p221 = por %p219, %p220
      %p222 = scmp.ne.s32.totalorder %s208, %s209
      %p223 = scmp.eq.s32.totalorder %s22, 1
      %p224 = por %p222, %p223
      %p226 = scmp.ne.s32.totalorder %s209, %s225
      %p227 = scmp.eq.s32.totalorder %s22, 0
      %p228 = por %p226, %p227
      %p229 = scmp.le.s32.totalorder 1, %s16
      %p230 = scmp.lt.s32.totalorder %s16, 3
      %p231 = pnand %p229, %p230
      %p232 = pneg %p231
      // Predicated region
      $region9: #{transformer_encoder_block.7} parent=5 // pred_check
        _
      $region10: #{transformer_encoder_block.7} parent=5 // pred_check_branch
        %234 = sbr.rel (%p231) target = $region12
      $region11: #{transformer_encoder_block.7} parent=5 // pred_region
        %s235 = ssub.s32 %s16, 1
        // Predicated region
        $region13: #{transformer_encoder_block.7} parent=11 // pred_check
          %p236 = pneg %p80
        $region14: #{transformer_encoder_block.7} parent=11 // pred_check_branch
          %238 = sbr.rel (%p236) target = $region16
        $region15: #{transformer_encoder_block.7} parent=11 // pred_region
          %s239 = smul.u32 2, %s26
          %p240 = scmp.lt.s32.totalorder %s239, 1
          %s241 = scalar_select %p240, %s239, 1
          %s242 = smul.addr %s241, 8
          %s243 = scalar_lea.vmem %s1, %s242
          %s244 = smul.u32 2, %s26
        $region16: #{transformer_encoder_block.7} parent=11 // pred_fallthru
          _
        // Predicated region
        $region17: #{transformer_encoder_block.7} parent=11 // pred_check
          %p245 = pneg %p106
        $region18: #{transformer_encoder_block.7} parent=11 // pred_check_branch
          %247 = sbr.rel (%p245) target = $region20
        $region19: #{transformer_encoder_block.7} parent=11 // pred_region
          %s248 = smul.u32 2, %s26
          %p249 = scmp.lt.s32.totalorder %s248, 1
          %s250 = scalar_select %p249, %s248, 1
          %s251 = scalar_lea.vmem %s2, %s250
          %s252 = smul.u32 2, %s26
        $region20: #{transformer_encoder_block.7} parent=11 // pred_fallthru
          _
        // Predicated region
        $region21: #{transformer_encoder_block.7} parent=11 // pred_check
          %p253 = pneg %p132
        $region22: #{transformer_encoder_block.7} parent=11 // pred_check_branch
          %255 = sbr.rel (%p253) target = $region24
        $region23: #{transformer_encoder_block.7} parent=11 // pred_region
          %s256 = smul.u32 32, %s26
          %p257 = scmp.lt.s32.totalorder %s256, 31
          %s258 = scalar_select %p257, %s256, 31
          %s259 = smul.addr %s258, 8
          %s260 = scalar_lea.vmem %s3, %s259
          %s261 = smul.u32 32, %s26
        $region24: #{transformer_encoder_block.7} parent=11 // pred_fallthru
          _
        // Predicated region
        $region25: #{transformer_encoder_block.7} parent=11 // pred_check
          %p262 = pneg %p153
        $region26: #{transformer_encoder_block.7} parent=11 // pred_check_branch
          %264 = sbr.rel (%p262) target = $region28
        $region27: #{transformer_encoder_block.7} parent=11 // pred_region
          _
        $region28: #{transformer_encoder_block.7} parent=11 // pred_fallthru
          _
        // Predicated region
        $region29: #{transformer_encoder_block.7} parent=11 // pred_check
          %p265 = pneg %p174
        $region30: #{transformer_encoder_block.7} parent=11 // pred_check_branch
          %267 = sbr.rel (%p265) target = $region32
        $region31: #{transformer_encoder_block.7} parent=11 // pred_region
          _
        $region32: #{transformer_encoder_block.7} parent=11 // pred_fallthru
          _
        // Predicated region
        $region33: #{transformer_encoder_block.7} parent=11 // pred_check
          %p268 = pneg %p195
        $region34: #{transformer_encoder_block.7} parent=11 // pred_check_branch
          %270 = sbr.rel (%p268) target = $region36
        $region35: #{transformer_encoder_block.7} parent=11 // pred_region
          _
        $region36: #{transformer_encoder_block.7} parent=11 // pred_fallthru
          _
      $region12: #{transformer_encoder_block.7} parent=5 // pred_fallthru
        _
      %p271 = scmp.lt.s32.totalorder %s16, 2
      // Predicated region
      $region37: #{transformer_encoder_block.7} parent=5 // pred_check
        %p272 = pneg %p271
      $region38: #{transformer_encoder_block.7} parent=5 // pred_check_branch
        %274 = sbr.rel (%p272) target = $region40
      $region39: #{transformer_encoder_block.7} parent=5 // pred_region
        // Predicated region
        $region41: #{transformer_encoder_block.7} parent=39 // pred_check
          %p275 = pneg %p48
        $region42: #{transformer_encoder_block.7} parent=39 // pred_check_branch
          %277 = sbr.rel (%p275) target = $region44
        $region43: #{transformer_encoder_block.7} parent=39 // pred_region
          %p278 = scmp.lt.s32.totalorder %s23, 1
          %s279 = scalar_select %p278, %s23, 1
          %s280 = smul.addr %s279, 8
          %s281 = scalar_lea.vmem %s0, %s280
        $region44: #{transformer_encoder_block.7} parent=39 // pred_fallthru
          _
      $region40: #{transformer_encoder_block.7} parent=5 // pred_fallthru
        _
      %p282 = scmp.le.s32.totalorder 1, %s16
      %p283 = scmp.lt.s32.totalorder %s16, 3
      %p284 = pnand %p282, %p283
      %p285 = pneg %p284
      // Predicated region
      $region45: #{transformer_encoder_block.7} parent=5 // pred_check
        _
      $region46: #{transformer_encoder_block.7} parent=5 // pred_check_branch
        %287 = sbr.rel (%p284) target = $region48
      $region47: #{transformer_encoder_block.7} parent=5 // pred_region
        %s288 = ssub.s32 %s16, 1
        %p289 = scmp.lt.s32.totalorder %s25, 1
        %s290 = scalar_select %p289, %s25, 1
        %s291 = smul.addr %s290, 8
        %s292 = scalar_lea.vmem %s0, %s291
        %p293 = pneg %p54
        %p294 = pneg %p51
        %s295 = smul.u32 2, %s26
        %p296 = scmp.lt.s32.totalorder %s295, 1
        %s297 = scalar_select %p296, %s295, 1
        %s298 = smul.addr %s297, 8
        %s299 = scalar_lea.vmem %s1, %s298
        %p300 = pneg %p80
        %p301 = pneg %p77
        %s302 = smul.u32 2, %s26
        %p303 = scmp.lt.s32.totalorder %s302, 1
        %s304 = scalar_select %p303, %s302, 1
        %s305 = scalar_lea.vmem %s2, %s304
        %p306 = pneg %p106
        %p307 = pneg %p103
        %s308 = smul.u32 32, %s26
        %p309 = scmp.lt.s32.totalorder %s308, 31
        %s310 = scalar_select %p309, %s308, 31
        %s311 = smul.addr %s310, 8
        %s312 = scalar_lea.vmem %s3, %s311
        %p313 = pneg %p132
        %p314 = pneg %p129
        %p315 = pneg %p153
        %p316 = pneg %p150
        %p317 = pneg %p174
        %p318 = pneg %p171
        %p319 = pneg %p195
        %p320 = pneg %p192
        %p321 = pneg %p221
        %p322 = pneg %p218
        %s323 = sand.u32 %s208, 1
        %s324 = scalar_lea.sflag [#allocation4], %s323
        %s325 = sand.u32 %s208, 1
        %s326 = smul.addr %s325, 8
        %s327 = scalar_lea.vmem [#allocation3], %s326
        %p328 = scmp.lt.s32.totalorder %s25, 1
        %s329 = scalar_select %p328, %s25, 1
        %s330 = smul.addr %s329, 8
        %s331 = scalar_lea.vmem %s0, %s330
        %s332 = smul.u32 2, %s26
        %p333 = scmp.lt.s32.totalorder %s332, 1
        %s334 = scalar_select %p333, %s332, 1
        %s335 = smul.addr %s334, 8
        %s336 = scalar_lea.vmem %s1, %s335
        %s337 = smul.u32 2, %s26
        %s338 = smul.u32 2, %s26
        %p339 = scmp.lt.s32.totalorder %s338, 1
        %s340 = scalar_select %p339, %s338, 1
        %s341 = scalar_lea.vmem %s2, %s340
        %s342 = smul.u32 2, %s26
        %s343 = smul.u32 32, %s26
        %p344 = scmp.lt.s32.totalorder %s343, 31
        %s345 = scalar_select %p344, %s343, 31
        %s346 = smul.addr %s345, 8
        %s347 = scalar_lea.vmem %s3, %s346
        %s348 = smul.u32 32, %s26
        %p349 = scmp.eq.s32.totalorder %s26, 0
        // Predicated region
        $region49: #{transformer_encoder_block.7} parent=47 // pred_check
          %p350 = pneg %p349
        $region50: #{transformer_encoder_block.7} parent=47 // pred_check_branch
          %352 = sbr.rel (%p350) target = $region52
        $region51: #{transformer_encoder_block.7} parent=47 // pred_region
          %v353 = vld [vmem:[%s4] sm:$0x1]
          %v355 = vlaneseq
          %v356 = vshrl.u32 %v355, 7
          %v357 = vsub.s32 0, %v356
          %v358 = vrot.slane %v353, %v357
          %360 = vst [vmem:[#allocation2] sm:$0xff] %v358
        $region52: #{transformer_encoder_block.7} parent=47 // pred_fallthru
          _
        %v361 = vld [vmem:[%s331] sm:$0xff]
        %v362 = vld [vmem:[%s336] sm:$0xff]
        %v363 = vld [vmem:[%s336 + $0x8] sm:$0xff]
        %v364 = vld [vmem:[%s336 + $0x10] sm:$0xff]
        %v365 = vld [vmem:[%s336 + $0x18] sm:$0xff]
        %v366 = vld [vmem:[%s336 + $0x20] sm:$0xff]
        %v367 = vld [vmem:[%s336 + $0x28] sm:$0xff]
        %v368 = vld [vmem:[%s336 + $0x30] sm:$0xff]
        %v369 = vld [vmem:[%s336 + $0x38] sm:$0xff]
        %v370 = vld [vmem:[%s336 + $0x40] sm:$0xff]
        %v371 = vld [vmem:[%s336 + $0x48] sm:$0xff]
        %v372 = vld [vmem:[%s336 + $0x50] sm:$0xff]
        %v373 = vld [vmem:[%s336 + $0x58] sm:$0xff]
        %v374 = vld [vmem:[%s336 + $0x60] sm:$0xff]
        %v375 = vld [vmem:[%s336 + $0x68] sm:$0xff]
        %v376 = vld [vmem:[%s336 + $0x70] sm:$0xff]
        %v377 = vld [vmem:[%s336 + $0x78] sm:$0xff]
        %v378 = vld [vmem:[%s336 + $0x80] sm:$0xff]
        %v379 = vld [vmem:[%s336 + $0x88] sm:$0xff]
        %v380 = vld [vmem:[%s336 + $0x90] sm:$0xff]
        %v381 = vld [vmem:[%s336 + $0x98] sm:$0xff]
        %v382 = vld [vmem:[%s336 + $0xa0] sm:$0xff]
        %v383 = vld [vmem:[%s336 + $0xa8] sm:$0xff]
        %v384 = vld [vmem:[%s336 + $0xb0] sm:$0xff]
        %v385 = vld [vmem:[%s336 + $0xb8] sm:$0xff]
        %v386 = vld [vmem:[%s336 + $0xc0] sm:$0xff]
        %v387 = vld [vmem:[%s336 + $0xc8] sm:$0xff]
        %v388 = vld [vmem:[%s336 + $0xd0] sm:$0xff]
        %v389 = vld [vmem:[%s336 + $0xd8] sm:$0xff]
        %v390 = vld [vmem:[%s336 + $0xe0] sm:$0xff]
        %v391 = vld [vmem:[%s336 + $0xe8] sm:$0xff]
        %v392 = vld [vmem:[%s336 + $0xf0] sm:$0xff]
        %v393 = vld [vmem:[%s336 + $0xf8] sm:$0xff]
        %v394 = vld [vmem:[%s341] sm:$0x3]
        %v396 = vlaneseq
        %v397 = vshrl.u32 %v396, 7
        %v398 = vsub.s32 0, %v397
        %v399 = vrot.slane %v394, %v398
        %v400 = vlaneseq
        %v401 = vshrl.u32 %v400, 7
        %v402 = vsub.s32 1, %v401
        %v403 = vrot.slane %v394, %v402
        %406 = vmatprep.subr.mxu0 %v363
        %407 = vmatpush1.msra.mxu0 %v362
        %408 = vmatprep.subr.mxu0 %v365
        %409 = vmatpush1.msra.mxu0 %v364
        %410 = vmatprep.subr.mxu0 %v367
        %411 = vmatpush1.msra.mxu0 %v366
        %412 = vmatprep.subr.mxu0 %v369
        %413 = vmatpush1.msra.mxu0 %v368
        %414 = vmatprep.subr.mxu0 %v371
        %415 = vmatpush1.msra.mxu0 %v370
        %416 = vmatprep.subr.mxu0 %v373
        %417 = vmatpush1.msra.mxu0 %v372
        %418 = vmatprep.subr.mxu0 %v375
        %419 = vmatpush1.msra.mxu0 %v374
        %420 = vmatprep.subr.mxu0 %v377
        %421 = vmatpush1.msra.mxu0 %v376
        %422 = vmatprep.subr.mxu0 %v379
        %423 = vmatpush1.msra.mxu0 %v378
        %424 = vmatprep.subr.mxu0 %v381
        %425 = vmatpush1.msra.mxu0 %v380
        %426 = vmatprep.subr.mxu0 %v383
        %427 = vmatpush1.msra.mxu0 %v382
        %428 = vmatprep.subr.mxu0 %v385
        %429 = vmatpush1.msra.mxu0 %v384
        %430 = vmatprep.subr.mxu0 %v387
        %431 = vmatpush1.msra.mxu0 %v386
        %432 = vmatprep.subr.mxu0 %v389
        %433 = vmatpush1.msra.mxu0 %v388
        %434 = vmatprep.subr.mxu0 %v391
        %435 = vmatpush1.msra.mxu0 %v390
        %436 = vmatprep.subr.mxu0 %v393
        %437 = vmatpush1.msra.mxu0 %v392
        %438 = vmatprep.subr.mxu0 0.0
        %439 = vmatpush1.msra.mxu0 0.0
        %440 = vmatprep.subr.mxu0 0.0
        %441 = vmatpush1.msra.mxu0 0.0
        %442 = vmatprep.subr.mxu0 0.0
        %443 = vmatpush1.msra.mxu0 0.0
        %444 = vmatprep.subr.mxu0 0.0
        %445 = vmatpush1.msra.mxu0 0.0
        %446 = vmatprep.subr.mxu0 0.0
        %447 = vmatpush1.msra.mxu0 0.0
        %448 = vmatprep.subr.mxu0 0.0
        %449 = vmatpush1.msra.mxu0 0.0
        %450 = vmatprep.subr.mxu0 0.0
        %451 = vmatpush1.msra.mxu0 0.0
        %452 = vmatprep.subr.mxu0 0.0
        %453 = vmatpush1.msra.mxu0 0.0
        %454 = vmatprep.subr.mxu0 0.0
        %455 = vmatpush1.msra.mxu0 0.0
        %456 = vmatprep.subr.mxu0 0.0
        %457 = vmatpush1.msra.mxu0 0.0
        %458 = vmatprep.subr.mxu0 0.0
        %459 = vmatpush1.msra.mxu0 0.0
        %460 = vmatprep.subr.mxu0 0.0
        %461 = vmatpush1.msra.mxu0 0.0
        %462 = vmatprep.subr.mxu0 0.0
        %463 = vmatpush1.msra.mxu0 0.0
        %464 = vmatprep.subr.mxu0 0.0
        %465 = vmatpush1.msra.mxu0 0.0
        %466 = vmatprep.subr.mxu0 0.0
        %467 = vmatpush1.msra.mxu0 0.0
        %468 = vmatprep.subr.mxu0 0.0
        %469 = vmatpush1.msra.mxu0 0.0
        %470 = vmatprep.mubr.f32.mxu0 0.0
        %471 = vmatmul.mubr.f32.gmra.mrb[0].mxu0 %v361
        %v472 = vpop.f32.mrb[0].mxu0
        %v473 = vadd.f32 %v399, %v472
        %v474 = vpop.f32.mrb[0].mxu0
        %v475 = vadd.f32 %v403, %v474
        %476 = vdwg.mxu0
        %v477 = vmul.f32 %v473, 0.5
        %v478 = vmul.f32 %v475, 0.5
        %v479 = vmul.f32 %v473, 0.044715
        %v480 = vmul.f32 %v475, 0.044715
        %v481 = vmul.f32 %v479, %v473
        %v482 = vmul.f32 %v480, %v475
        %v483 = vmul.f32 %v481, %v473
        %v484 = vmul.f32 %v482, %v475
        %v485 = vadd.f32 %v473, %v483
        %v486 = vadd.f32 %v475, %v484
        %v487 = vmul.f32 %v485, 0.7978846
        %v488 = vmul.f32 %v486, 0.7978846
        %v489 = vtanh.pop %v487
        %v490 = vtanh.pop %v488
        %v491 = vadd.f32 %v489, 1.0
        %v492 = vadd.f32 %v490, 1.0
        %v493 = vmul.f32 %v477, %v491
        %v494 = vmul.f32 %v478, %v492
        %v495 = vld [vmem:[#allocation2] sm:$0xff]
        %v496 = vld [vmem:[%s347] sm:$0xff]
        %v497 = vld [vmem:[%s347 + $0x8] sm:$0xff]
        %v498 = vld [vmem:[%s347 + $0x10] sm:$0xff]
        %v499 = vld [vmem:[%s347 + $0x18] sm:$0xff]
        %v500 = vld [vmem:[%s347 + $0x20] sm:$0xff]
        %v501 = vld [vmem:[%s347 + $0x28] sm:$0xff]
        %v502 = vld [vmem:[%s347 + $0x30] sm:$0xff]
        %v503 = vld [vmem:[%s347 + $0x38] sm:$0xff]
        %v504 = vld [vmem:[%s347 + $0x40] sm:$0xff]
        %v505 = vld [vmem:[%s347 + $0x48] sm:$0xff]
        %v506 = vld [vmem:[%s347 + $0x50] sm:$0xff]
        %v507 = vld [vmem:[%s347 + $0x58] sm:$0xff]
        %v508 = vld [vmem:[%s347 + $0x60] sm:$0xff]
        %v509 = vld [vmem:[%s347 + $0x68] sm:$0xff]
        %v510 = vld [vmem:[%s347 + $0x70] sm:$0xff]
        %v511 = vld [vmem:[%s347 + $0x78] sm:$0xff]
        %v512 = vld [vmem:[%s347 + $0x80] sm:$0xff]
        %v513 = vld [vmem:[%s347 + $0x88] sm:$0xff]
        %v514 = vld [vmem:[%s347 + $0x90] sm:$0xff]
        %v515 = vld [vmem:[%s347 + $0x98] sm:$0xff]
        %v516 = vld [vmem:[%s347 + $0xa0] sm:$0xff]
        %v517 = vld [vmem:[%s347 + $0xa8] sm:$0xff]
        %v518 = vld [vmem:[%s347 + $0xb0] sm:$0xff]
        %v519 = vld [vmem:[%s347 + $0xb8] sm:$0xff]
        %v520 = vld [vmem:[%s347 + $0xc0] sm:$0xff]
        %v521 = vld [vmem:[%s347 + $0xc8] sm:$0xff]
        %v522 = vld [vmem:[%s347 + $0xd0] sm:$0xff]
        %v523 = vld [vmem:[%s347 + $0xd8] sm:$0xff]
        %v524 = vld [vmem:[%s347 + $0xe0] sm:$0xff]
        %v525 = vld [vmem:[%s347 + $0xe8] sm:$0xff]
        %v526 = vld [vmem:[%s347 + $0xf0] sm:$0xff]
        %v527 = vld [vmem:[%s347 + $0xf8] sm:$0xff]
        %528 = vmatprep.subr.mxu0 0.0
        %529 = vmatpush1.msra.mxu0 %v496
        %530 = vmatprep.subr.mxu0 0.0
        %531 = vmatpush1.msra.mxu0 %v497
        %532 = vmatprep.subr.mxu0 0.0
        %533 = vmatpush1.msra.mxu0 %v498
        %534 = vmatprep.subr.mxu0 0.0
        %535 = vmatpush1.msra.mxu0 %v499
        %536 = vmatprep.subr.mxu0 0.0
        %537 = vmatpush1.msra.mxu0 %v500
        %538 = vmatprep.subr.mxu0 0.0
        %539 = vmatpush1.msra.mxu0 %v501
        %540 = vmatprep.subr.mxu0 0.0
        %541 = vmatpush1.msra.mxu0 %v502
        %542 = vmatprep.subr.mxu0 0.0
        %543 = vmatpush1.msra.mxu0 %v503
        %544 = vmatprep.subr.mxu0 0.0
        %545 = vmatpush1.msra.mxu0 %v504
        %546 = vmatprep.subr.mxu0 0.0
        %547 = vmatpush1.msra.mxu0 %v505
        %548 = vmatprep.subr.mxu0 0.0
        %549 = vmatpush1.msra.mxu0 %v506
        %550 = vmatprep.subr.mxu0 0.0
        %551 = vmatpush1.msra.mxu0 %v507
        %552 = vmatprep.subr.mxu0 0.0
        %553 = vmatpush1.msra.mxu0 %v508
        %554 = vmatprep.subr.mxu0 0.0
        %555 = vmatpush1.msra.mxu0 %v509
        %556 = vmatprep.subr.mxu0 0.0
        %557 = vmatpush1.msra.mxu0 %v510
        %558 = vmatprep.subr.mxu0 0.0
        %559 = vmatpush1.msra.mxu0 %v511
        %560 = vmatprep.subr.mxu0 0.0
        %561 = vmatpush1.msra.mxu0 %v512
        %562 = vmatprep.subr.mxu0 0.0
        %563 = vmatpush1.msra.mxu0 %v513
        %564 = vmatprep.subr.mxu0 0.0
        %565 = vmatpush1.msra.mxu0 %v514
        %566 = vmatprep.subr.mxu0 0.0
        %567 = vmatpush1.msra.mxu0 %v515
        %568 = vmatprep.subr.mxu0 0.0
        %569 = vmatpush1.msra.mxu0 %v516
        %570 = vmatprep.subr.mxu0 0.0
        %571 = vmatpush1.msra.mxu0 %v517
        %572 = vmatprep.subr.mxu0 0.0
        %573 = vmatpush1.msra.mxu0 %v518
        %574 = vmatprep.subr.mxu0 0.0
        %575 = vmatpush1.msra.mxu0 %v519
        %576 = vmatprep.subr.mxu0 0.0
        %577 = vmatpush1.msra.mxu0 %v520
        %578 = vmatprep.subr.mxu0 0.0
        %579 = vmatpush1.msra.mxu0 %v521
        %580 = vmatprep.subr.mxu0 0.0
        %581 = vmatpush1.msra.mxu0 %v522
        %582 = vmatprep.subr.mxu0 0.0
        %583 = vmatpush1.msra.mxu0 %v523
        %584 = vmatprep.subr.mxu0 0.0
        %585 = vmatpush1.msra.mxu0 %v524
        %586 = vmatprep.subr.mxu0 0.0
        %587 = vmatpush1.msra.mxu0 %v525
        %588 = vmatprep.subr.mxu0 0.0
        %589 = vmatpush1.msra.mxu0 %v526
        %590 = vmatprep.subr.mxu0 0.0
        %591 = vmatpush1.msra.mxu0 %v527
        %592 = vmatprep.mubr.f32.mxu0 %v494
        %593 = vmatmul.mubr.f32.gmra.mrb[0].mxu0 %v493
        %v594 = vpop.f32.mrb[0].mxu0
        %v595 = vadd.f32 0.0, %v594
        %v596 = vpop.f32.mrb[0].mxu0
        %597 = vdwg.mxu0
        %v598 = vadd.f32 %v495, %v595
        %599 = vst [vmem:[#allocation2] sm:$0xff] %v598
        // Predicated region
        $region53: #{transformer_encoder_block.7} parent=47 // pred_check
          %p600 = pneg %p349
        $region54: #{transformer_encoder_block.7} parent=47 // pred_check_branch
          %602 = sbr.rel (%p600) target = $region56
        $region55: #{transformer_encoder_block.7} parent=47 // pred_region
          %v603 = vld [vmem:[#allocation2] sm:$0xff]
          %v604 = vld [vmem:[%s331] sm:$0xff]
          %v605 = vadd.f32 %v603, %v604
          %v606 = vld [vmem:[%s5] sm:$0x1]
          %v607 = vld [vmem:[%s6] sm:$0x1]
          %608 = vadd.xlane.f32.xlu0 %v605
          %v609 = vpop.xlane.xlu0 %608
          %v610 = vrcp.pop 128.0
          %v611 = vmul.f32 %v609, %v610
          %v612 = vsub.f32 %v605, %v611
          %v613 = vmul.f32 %v612, %v612
          %614 = vadd.xlane.f32.xlu0 %v613
          %v615 = vpop.xlane.xlu0 %614
          %v616 = vrcp.pop 127.0
          %v617 = vmul.f32 %v615, %v616
          %v619 = vlaneseq
          %v620 = vshrl.u32 %v619, 7
          %v621 = vsub.s32 0, %v620
          %v622 = vrot.slane %v606, %v621
          %v624 = vmul.f32 %v622, %v612
          %v625 = vrsqrt.pop %v617
          %v626 = vmul.f32 %v617, %v625
          %vm627 = vcmp.eq.f32.partialorder %v617, inf
          %v628 = vsel %vm627, %v617, %v626
          %vm629 = vcmp.eq.f32.partialorder %v617, 0.0
          %v630 = vand.u32 %v617, 2147483648
          %v631 = vsel %vm629, %v630, %v628
          %v632 = vadd.f32 %v631, 1e-06
          %v633 = vrcp.pop %v632
          %v634 = vmul.f32 %v624, %v633
          %v636 = vlaneseq
          %v637 = vshrl.u32 %v636, 7
          %v638 = vsub.s32 0, %v637
          %v639 = vrot.slane %v607, %v638
          %v641 = vadd.f32 %v634, %v639
          %642 = vst [vmem:[%s327] sm:$0xff] %v641
        $region56: #{transformer_encoder_block.7} parent=47 // pred_fallthru
          _
        %s643 = sand.u32 %s208, 1
        %s644 = scalar_lea.sflag [#allocation4], %s643
        %s645 = sand.u32 %s208, 1
        %s646 = smul.addr %s645, 8
        %s647 = scalar_lea.vmem [#allocation3], %s646
        // Predicated region
        $region57: #{transformer_encoder_block.7} parent=47 // pred_check
          %p648 = pneg %p218
        $region58: #{transformer_encoder_block.7} parent=47 // pred_check_branch
          %650 = sbr.rel (%p648) target = $region60
        $region59: #{transformer_encoder_block.7} parent=47 // pred_region
          %s652 = ssub.s32 128, 128
          %653 = vsyncadd %s644, %s652
          %s654 = smul.addr %s25, 128
          %s655 = scalar_lea.hbm %s7, %s654
          %s657 = sshll.u32 %s647, 4
          %s658 = int_to_ptr.vmem [resolvable:$true] %s657
          %660 = dma.vmem_to_hbm [thread:$0]  %s658, 128, %s655, %s644
        $region60: #{transformer_encoder_block.7} parent=47 // pred_fallthru
          _
      $region48: #{transformer_encoder_block.7} parent=5 // pred_fallthru
        _
      %p661 = scmp.le.s32.totalorder 2, %s16
      // Predicated region
      $region61: #{transformer_encoder_block.7} parent=5 // pred_check
        %p662 = pneg %p661
      $region62: #{transformer_encoder_block.7} parent=5 // pred_check_branch
        %664 = sbr.rel (%p662) target = $region64
      $region63: #{transformer_encoder_block.7} parent=5 // pred_region
        %s665 = ssub.s32 %s16, 2
        // Predicated region
        $region65: #{transformer_encoder_block.7} parent=63 // pred_check
          %p666 = pneg %p224
        $region66: #{transformer_encoder_block.7} parent=63 // pred_check_branch
          %668 = sbr.rel (%p666) target = $region68
        $region67: #{transformer_encoder_block.7} parent=63 // pred_region
          %s669 = sand.u32 %s209, 1
          %s670 = scalar_lea.sflag [#allocation4], %s669
          %s671 = sand.u32 %s209, 1
          %s672 = smul.addr %s671, 8
          %s673 = scalar_lea.vmem [#allocation3], %s672
          %674 = dma.done %s670, 128
        $region68: #{transformer_encoder_block.7} parent=63 // pred_fallthru
          _
      $region64: #{transformer_encoder_block.7} parent=5 // pred_fallthru
        _
    $region6: #{transformer_encoder_block.7} parent=1 // loop_footer
      %s20 = sadd.s32 1, %s16
    $region7: #{transformer_encoder_block.7} parent=1 // loop_footer_branch
      %15 = sbr.rel target = $region3
    $region8: #{transformer_encoder_block.7} parent=1 // loop_exit
      _
    %675 = vsyncpa [#allocation4], 1
    %s676 = scalar_lea.sflag [#allocation4], 1
    %677 = vsyncpa %s676, 1

// kernel: transformer_encoder_block.4
$region0: #{transformer_encoder_block.4}
  #allocation0 [shape = 'u32[]', space=smem, size = 0x4, offset = 0x4, fixed_abs, tag = 'smem constant byte address 0x4 - core index']
  #allocation1 [shape = 'u32[144,128]{1,0:T(1,128)}', space=vmem, size = 0x12000, scoped, tag = 'internal scratch']
  #allocation2 [shape = 'f32[8,384]{1,0:T(8,128)}', space=vmem, size = 0x3000, scoped, tag = 'scratch operand']
  %s0 = inlined_call_operand.hbm [shape: f32[16,128], index: 0, kind: input, shape index: {}]
  %s1 = inlined_call_operand.hbm [shape: f32[128,384], index: 1, kind: input, shape index: {}]
  %s2 = inlined_call_operand.vmem [shape: f32[1,384], index: 2, kind: input, shape index: {}]
  %s3 = inlined_call_operand.vmem [shape: f32[16,384], index: 3, kind: output, shape index: {}]
  %s4 = sld [smem:[#allocation0]]
  $region61: #{transformer_encoder_block.4} parent=0
    _
  %s6 = ssub.s32 1, %s4
  %s7 = scalar_select 0, %s6, %s4
  $region1: #{transformer_encoder_block.4} parent=0
    #allocation3 [shape = 'u8[8192]{0}', space=vmem, size = 0x2000, scoped, tag = 'input window, operand 0']
    #allocation4 [shape = 's32[2]{0}', space=sflag, size = 0x8, scoped, tag = 'scoped memory for transformer_encoder_block.4']
    #allocation5 [shape = 'u8[196608]{0}', space=vmem, size = 0x30000, scoped, tag = 'input window, operand 1, single buffered']
    #allocation6 [shape = 's32[1]{0}', space=sflag, size = 0x4, scoped, tag = 'scoped memory for transformer_encoder_block.4']
    %8 = vsyncpa [#allocation4], 0
    %s9 = scalar_lea.sflag [#allocation4], 1
    %10 = vsyncpa %s9, 0
    %11 = vsyncpa [#allocation6], 0
    loop: start=0, step=1, limit=4
    $region2: #{transformer_encoder_block.4} parent=1 // loop_pre_header
      _
    $region3: #{transformer_encoder_block.4} parent=1 // loop_header
      %s13 = sphi 0, %s17
      %p14 = scmp.ge.s32.totalorder %s13, 4
      %s20 = sphi 0, %s39
      %s21 = sphi 0, %s35
      %s22 = sphi 0, %s31
      %s23 = sphi 0, %s20
      %s24 = sphi 0, %s21
      %s25 = sphi 0, %s22
      %s26 = sphi 0, %s23
      %s27 = sphi 0, %s24
      %s28 = sphi 0, %s25
      %s44 = sphi 0, %s46
      %s47 = sphi 0, %s44
      %s48 = sphi 0, %s47
      %s64 = sphi 0, %s48
      %s72 = sphi 0, %s74
      %s75 = sphi 0, %s72
      %s76 = sphi 0, %s75
      %s92 = sphi 0, %s76
      %s98 = sphi 0, %s100
      %s101 = sphi 0, %s98
      %s102 = sphi 0, %s101
      %s118 = sphi 0, %s102
      %s126 = sphi 0, %s128
      %s129 = sphi 0, %s126
      %s130 = sphi 0, %s129
      %s146 = sphi 0, %s130
    $region4: #{transformer_encoder_block.4} parent=1 // loop_header_branch
      %16 = sbr.rel (%p14) target = $region8
    $region5: #{transformer_encoder_block.4} parent=1 // loop_body
      %s18 = ssub.s32 %s13, 1
      %s19 = ssub.s32 %s13, 2
      %s29 = sadd.s32 1, %s22
      %p30 = scmp.ge.s32.totalorder %s29, 1
      %s31 = scalar_select %p30, 0, %s29
      %s32 = sadd.s32 1, %s21
      %s33 = scalar_select %p30, %s32, %s21
      %p34 = scmp.ge.s32.totalorder %s33, 1
      %s35 = scalar_select %p34, 0, %s33
      %s36 = sadd.s32 1, %s20
      %s37 = scalar_select %p34, %s36, %s20
      %p38 = scmp.ge.s32.totalorder %s37, 2
      %s39 = scalar_select %p38, 0, %s37
      %s40 = ssub.s32 %s20, %s39
      %s41 = ssub.s32 %s22, %s31
      %s42 = sor.u32 %s40, %s41
      %p43 = scmp.eq.s32.totalorder %s42, 0
      %s45 = sadd.s32 %s44, 1
      %s46 = scalar_select %p43, %s44, %s45
      %p49 = pneg %p43
      %p50 = scmp.eq.s32.totalorder %s13, 1
      %p51 = por %p49, %p50
      %p52 = scmp.ne.s32.totalorder %s44, %s47
      %p53 = scmp.eq.s32.totalorder %s13, 0
      %p54 = por %p52, %p53
      %p55 = scmp.ne.s32.totalorder %s44, %s47
      %p56 = scmp.eq.s32.totalorder %s18, 1
      %p57 = por %p55, %p56
      %p58 = scmp.ne.s32.totalorder %s47, %s48
      %p59 = scmp.eq.s32.totalorder %s18, 0
      %p60 = por %p58, %p59
      %p61 = scmp.ne.s32.totalorder %s47, %s48
      %p62 = scmp.eq.s32.totalorder %s19, 1
      %p63 = por %p61, %p62
      %p65 = scmp.ne.s32.totalorder %s48, %s64
      %p66 = scmp.eq.s32.totalorder %s19, 0
      %p67 = por %p65, %p66
      %s68 = ssub.s32 %s22, %s31
      %s69 = ssub.s32 %s21, %s35
      %s70 = sor.u32 %s68, %s69
      %p71 = scmp.eq.s32.totalorder %s70, 0
      %s73 = sadd.s32 %s72, 1
      %s74 = scalar_select %p71, %s72, %s73
      %p77 = pneg %p71
      %p78 = scmp.eq.s32.totalorder %s13, 1
      %p79 = por %p77, %p78
      %p80 = scmp.ne.s32.totalorder %s72, %s75
      %p81 = scmp.eq.s32.totalorder %s13, 0
      %p82 = por %p80, %p81
      %p83 = scmp.ne.s32.totalorder %s72, %s75
      %p84 = scmp.eq.s32.totalorder %s18, 1
      %p85 = por %p83, %p84
      %p86 = scmp.ne.s32.totalorder %s75, %s76
      %p87 = scmp.eq.s32.totalorder %s18, 0
      %p88 = por %p86, %p87
      %p89 = scmp.ne.s32.totalorder %s75, %s76
      %p90 = scmp.eq.s32.totalorder %s19, 1
      %p91 = por %p89, %p90
      %p93 = scmp.ne.s32.totalorder %s76, %s92
      %p94 = scmp.eq.s32.totalorder %s19, 0
      %p95 = por %p93, %p94
      %s96 = ssub.s32 %s21, %s35
      %p97 = scmp.eq.s32.totalorder %s96, 0
      %s99 = sadd.s32 %s98, 1
      %s100 = scalar_select %p97, %s98, %s99
      %p103 = pneg %p97
      %p104 = scmp.eq.s32.totalorder %s13, 1
      %p105 = por %p103, %p104
      %p106 = scmp.ne.s32.totalorder %s98, %s101
      %p107 = scmp.eq.s32.totalorder %s13, 0
      %p108 = por %p106, %p107
      %p109 = scmp.ne.s32.totalorder %s98, %s101
      %p110 = scmp.eq.s32.totalorder %s18, 1
      %p111 = por %p109, %p110
      %p112 = scmp.ne.s32.totalorder %s101, %s102
      %p113 = scmp.eq.s32.totalorder %s18, 0
      %p114 = por %p112, %p113
      %p115 = scmp.ne.s32.totalorder %s101, %s102
      %p116 = scmp.eq.s32.totalorder %s19, 1
      %p117 = por %p115, %p116
      %p119 = scmp.ne.s32.totalorder %s102, %s118
      %p120 = scmp.eq.s32.totalorder %s19, 0
      %p121 = por %p119, %p120
      %s122 = ssub.s32 %s20, %s39
      %s123 = ssub.s32 %s21, %s35
      %s124 = sor.u32 %s122, %s123
      %p125 = scmp.eq.s32.totalorder %s124, 0
      %s127 = sadd.s32 %s126, 1
      %s128 = scalar_select %p125, %s126, %s127
      %p131 = pneg %p125
      %p132 = scmp.eq.s32.totalorder %s13, 1
      %p133 = por %p131, %p132
      %p134 = scmp.ne.s32.totalorder %s126, %s129
      %p135 = scmp.eq.s32.totalorder %s13, 0
      %p136 = por %p134, %p135
      %p137 = scmp.ne.s32.totalorder %s126, %s129
      %p138 = scmp.eq.s32.totalorder %s18, 1
      %p139 = por %p137, %p138
      %p140 = scmp.ne.s32.totalorder %s129, %s130
      %p141 = scmp.eq.s32.totalorder %s18, 0
      %p142 = por %p140, %p141
      %p143 = scmp.ne.s32.totalorder %s129, %s130
      %p144 = scmp.eq.s32.totalorder %s19, 1
      %p145 = por %p143, %p144
      %p147 = scmp.ne.s32.totalorder %s130, %s146
      %p148 = scmp.eq.s32.totalorder %s19, 0
      %p149 = por %p147, %p148
      %p150 = scmp.le.s32.totalorder 1, %s13
      %p151 = scmp.lt.s32.totalorder %s13, 3
      %p152 = pnand %p150, %p151
      %p153 = pneg %p152
      // Predicated region
      $region9: #{transformer_encoder_block.4} parent=5 // pred_check
        _
      $region10: #{transformer_encoder_block.4} parent=5 // pred_check_branch
        %155 = sbr.rel (%p152) target = $region12
      $region11: #{transformer_encoder_block.4} parent=5 // pred_region
        %s156 = ssub.s32 %s13, 1
        // Predicated region
        $region13: #{transformer_encoder_block.4} parent=11 // pred_check
          %p157 = pneg %p88
        $region14: #{transformer_encoder_block.4} parent=11 // pred_check_branch
          %159 = sbr.rel (%p157) target = $region16
        $region15: #{transformer_encoder_block.4} parent=11 // pred_region
          %s160 = smul.u32 16, %s25
          %s161 = smul.u32 3, %s24
          %s163 = ssub.s32 6144, 6144
          %164 = vsyncadd [#allocation6], %s163
          %s165 = smul.addr %s160, 3
          %s166 = sadd.s32 %s161, %s165
          %s167 = smul.addr %s166, 128
          %s168 = scalar_lea.hbm %s1, %s167
          %s169 = sshll.u32 [#allocation5], 4
          %s170 = int_to_ptr.vmem [resolvable:$true] %s169
          %175 = dma.hbm_to_vmem [thread:$0]  %s168, 6144, %s170, [#allocation6], 384, 384, 24
        $region16: #{transformer_encoder_block.4} parent=11 // pred_fallthru
          _
        // Predicated region
        $region17: #{transformer_encoder_block.4} parent=11 // pred_check
          %p176 = pneg %p114
        $region18: #{transformer_encoder_block.4} parent=11 // pred_check_branch
          %178 = sbr.rel (%p176) target = $region20
        $region19: #{transformer_encoder_block.4} parent=11 // pred_region
          %s179 = smul.u32 3, %s24
          %p180 = scmp.lt.s32.totalorder %s179, 2
          %s181 = scalar_select %p180, %s179, 2
          %s182 = scalar_lea.vmem %s2, %s181
          %s183 = smul.u32 3, %s24
        $region20: #{transformer_encoder_block.4} parent=11 // pred_fallthru
          _
      $region12: #{transformer_encoder_block.4} parent=5 // pred_fallthru
        _
      %p184 = scmp.lt.s32.totalorder %s13, 2
      // Predicated region
      $region21: #{transformer_encoder_block.4} parent=5 // pred_check
        %p185 = pneg %p184
      $region22: #{transformer_encoder_block.4} parent=5 // pred_check_branch
        %187 = sbr.rel (%p185) target = $region24
      $region23: #{transformer_encoder_block.4} parent=5 // pred_region
        // Predicated region
        $region25: #{transformer_encoder_block.4} parent=23 // pred_check
          %p188 = pneg %p54
        $region26: #{transformer_encoder_block.4} parent=23 // pred_check_branch
          %190 = sbr.rel (%p188) target = $region28
        $region27: #{transformer_encoder_block.4} parent=23 // pred_region
          %s191 = sand.u32 %s44, 1
          %s192 = scalar_lea.sflag [#allocation4], %s191
          %s193 = sand.u32 %s44, 1
          %s194 = smul.addr %s193, 8
          %s195 = scalar_lea.vmem [#allocation3], %s194
          %s197 = ssub.s32 128, 128
          %198 = vsyncadd %s192, %s197
          %s199 = sadd.s32 %s22, %s20
          %s200 = smul.addr %s199, 128
          %s201 = scalar_lea.hbm %s0, %s200
          %s203 = sshll.u32 %s195, 4
          %s204 = int_to_ptr.vmem [resolvable:$true] %s203
          %206 = dma.hbm_to_vmem [thread:$0]  %s201, 128, %s204, %s192
        $region28: #{transformer_encoder_block.4} parent=23 // pred_fallthru
          _
      $region24: #{transformer_encoder_block.4} parent=5 // pred_fallthru
        _
      %p207 = scmp.le.s32.totalorder 1, %s13
      %p208 = scmp.lt.s32.totalorder %s13, 3
      %p209 = pnand %p207, %p208
      %p210 = pneg %p209
      // Predicated region
      $region29: #{transformer_encoder_block.4} parent=5 // pred_check
        _
      $region30: #{transformer_encoder_block.4} parent=5 // pred_check_branch
        %212 = sbr.rel (%p209) target = $region32
      $region31: #{transformer_encoder_block.4} parent=5 // pred_region
        %s213 = ssub.s32 %s13, 1
        %s214 = sand.u32 %s47, 1
        %s215 = scalar_lea.sflag [#allocation4], %s214
        %s216 = sand.u32 %s47, 1
        %s217 = smul.addr %s216, 8
        %s218 = scalar_lea.vmem [#allocation3], %s217
        // Predicated region
        $region33: #{transformer_encoder_block.4} parent=31 // pred_check
          %p219 = pneg %p60
        $region34: #{transformer_encoder_block.4} parent=31 // pred_check_branch
          %221 = sbr.rel (%p219) target = $region36
        $region35: #{transformer_encoder_block.4} parent=31 // pred_region
          %222 = dma.done %s215, 128
        $region36: #{transformer_encoder_block.4} parent=31 // pred_fallthru
          _
        // Predicated region
        $region37: #{transformer_encoder_block.4} parent=31 // pred_check
          %p223 = pneg %p88
        $region38: #{transformer_encoder_block.4} parent=31 // pred_check_branch
          %225 = sbr.rel (%p223) target = $region40
        $region39: #{transformer_encoder_block.4} parent=31 // pred_region
          %226 = dma.done [#allocation6], 6144
        $region40: #{transformer_encoder_block.4} parent=31 // pred_fallthru
          _
        %s227 = sand.u32 %s47, 1
        %s228 = scalar_lea.sflag [#allocation4], %s227
        %s229 = sand.u32 %s47, 1
        %s230 = smul.addr %s229, 8
        %s231 = scalar_lea.vmem [#allocation3], %s230
        %p232 = pneg %p60
        %p233 = pneg %p57
        %p234 = pneg %p88
        %p235 = pneg %p85
        %s236 = smul.u32 3, %s24
        %p237 = scmp.lt.s32.totalorder %s236, 2
        %s238 = scalar_select %p237, %s236, 2
        %s239 = scalar_lea.vmem %s2, %s238
        %p240 = pneg %p114
        %p241 = pneg %p111
        %p242 = pneg %p142
        %p243 = pneg %p139
        %s244 = smul.u32 3, %s24
        %p245 = scmp.lt.s32.totalorder %s23, 1
        %s246 = scalar_select %p245, %s23, 1
        %p247 = scmp.lt.s32.totalorder %s244, 2
        %s248 = scalar_select %p247, %s244, 2
        %s249 = smul.addr %s246, 3
        %s250 = sadd.s32 %s248, %s249
        %s251 = smul.addr %s250, 8
        %s252 = scalar_lea.vmem %s3, %s251
        %s253 = smul.u32 16, %s25
        %s254 = smul.u32 3, %s24
        %s255 = smul.u32 3, %s24
        %p256 = scmp.lt.s32.totalorder %s255, 2
        %s257 = scalar_select %p256, %s255, 2
        %s258 = scalar_lea.vmem %s2, %s257
        %s259 = smul.u32 3, %s24
        %s260 = smul.u32 3, %s24
        %p261 = scmp.lt.s32.totalorder %s23, 1
        %s262 = scalar_select %p261, %s23, 1
        %p263 = scmp.lt.s32.totalorder %s260, 2
        %s264 = scalar_select %p263, %s260, 2
        %s265 = smul.addr %s262, 3
        %s266 = sadd.s32 %s264, %s265
        %s267 = smul.addr %s266, 8
        %s268 = scalar_lea.vmem %s3, %s267
        %s269 = smul.u32 3, %s24
        %p270 = scmp.eq.s32.totalorder %s25, 0
        // Predicated region
        $region41: #{transformer_encoder_block.4} parent=31 // pred_check
          %p271 = pneg %p270
        $region42: #{transformer_encoder_block.4} parent=31 // pred_check_branch
          %273 = sbr.rel (%p271) target = $region44
        $region43: #{transformer_encoder_block.4} parent=31 // pred_region
          %v274 = vld [vmem:[%s258] sm:$0x7]
          %v276 = vlaneseq
          %v277 = vshrl.u32 %v276, 7
          %v278 = vsub.s32 0, %v277
          %v279 = vrot.slane %v274, %v278
          %v280 = vlaneseq
          %v281 = vshrl.u32 %v280, 7
          %v282 = vsub.s32 1, %v281
          %v283 = vrot.slane %v274, %v282
          %v284 = vlaneseq
          %v285 = vshrl.u32 %v284, 7
          %v286 = vsub.s32 2, %v285
          %v287 = vrot.slane %v274, %v286
          %291 = vst [vmem:[#allocation2] sm:$0xff] %v279
          %292 = vst [vmem:[#allocation2 + $0x8] sm:$0xff] %v283
          %293 = vst [vmem:[#allocation2 + $0x10] sm:$0xff] %v287
        $region44: #{transformer_encoder_block.4} parent=31 // pred_fallthru
          _
        %v294 = vld [vmem:[#allocation2] sm:$0xff]
        %v295 = vld [vmem:[#allocation2 + $0x8] sm:$0xff]
        %v296 = vld [vmem:[#allocation2 + $0x10] sm:$0xff]
        %v297 = vld [vmem:[%s218] sm:$0xff]
        %v298 = vld [vmem:[#allocation5] sm:$0xff]
        %v299 = vld [vmem:[#allocation5 + $0x8] sm:$0xff]
        %v300 = vld [vmem:[#allocation5 + $0x10] sm:$0xff]
        %v301 = vld [vmem:[#allocation5 + $0x18] sm:$0xff]
        %v302 = vld [vmem:[#allocation5 + $0x20] sm:$0xff]
        %v303 = vld [vmem:[#allocation5 + $0x28] sm:$0xff]
        %v304 = vld [vmem:[#allocation5 + $0x30] sm:$0xff]
        %v305 = vld [vmem:[#allocation5 + $0x38] sm:$0xff]
        %v306 = vld [vmem:[#allocation5 + $0x40] sm:$0xff]
        %v307 = vld [vmem:[#allocation5 + $0x48] sm:$0xff]
        %v308 = vld [vmem:[#allocation5 + $0x50] sm:$0xff]
        %v309 = vld [vmem:[#allocation5 + $0x58] sm:$0xff]
        %v310 = vld [vmem:[#allocation5 + $0x60] sm:$0xff]
        %v311 = vld [vmem:[#allocation5 + $0x68] sm:$0xff]
        %v312 = vld [vmem:[#allocation5 + $0x70] sm:$0xff]
        %v313 = vld [vmem:[#allocation5 + $0x78] sm:$0xff]
        %v314 = vld [vmem:[#allocation5 + $0x80] sm:$0xff]
        %v315 = vld [vmem:[#allocation5 + $0x88] sm:$0xff]
        %v316 = vld [vmem:[#allocation5 + $0x90] sm:$0xff]
        %v317 = vld [vmem:[#allocation5 + $0x98] sm:$0xff]
        %v318 = vld [vmem:[#allocation5 + $0xa0] sm:$0xff]
        %v319 = vld [vmem:[#allocation5 + $0xa8] sm:$0xff]
        %v320 = vld [vmem:[#allocation5 + $0xb0] sm:$0xff]
        %v321 = vld [vmem:[#allocation5 + $0xb8] sm:$0xff]
        %v322 = vld [vmem:[#allocation5 + $0xc0] sm:$0xff]
        %v323 = vld [vmem:[#allocation5 + $0xc8] sm:$0xff]
        %v324 = vld [vmem:[#allocation5 + $0xd0] sm:$0xff]
        %v325 = vld [vmem:[#allocation5 + $0xd8] sm:$0xff]
        %v326 = vld [vmem:[#allocation5 + $0xe0] sm:$0xff]
        %v327 = vld [vmem:[#allocation5 + $0xe8] sm:$0xff]
        %v328 = vld [vmem:[#allocation5 + $0xf0] sm:$0xff]
        %v329 = vld [vmem:[#allocation5 + $0xf8] sm:$0xff]
        %v330 = vld [vmem:[#allocation5 + $0x100] sm:$0xff]
        %v331 = vld [vmem:[#allocation5 + $0x108] sm:$0xff]
        %v332 = vld [vmem:[#allocation5 + $0x110] sm:$0xff]
        %v333 = vld [vmem:[#allocation5 + $0x118] sm:$0xff]
        %v334 = vld [vmem:[#allocation5 + $0x120] sm:$0xff]
        %v335 = vld [vmem:[#allocation5 + $0x128] sm:$0xff]
        %v336 = vld [vmem:[#allocation5 + $0x130] sm:$0xff]
        %v337 = vld [vmem:[#allocation5 + $0x138] sm:$0xff]
        %v338 = vld [vmem:[#allocation5 + $0x140] sm:$0xff]
        %v339 = vld [vmem:[#allocation5 + $0x148] sm:$0xff]
        %v340 = vld [vmem:[#allocation5 + $0x150] sm:$0xff]
        %v341 = vld [vmem:[#allocation5 + $0x158] sm:$0xff]
        %v342 = vld [vmem:[#allocation5 + $0x160] sm:$0xff]
        %v343 = vld [vmem:[#allocation5 + $0x168] sm:$0xff]
        %v344 = vld [vmem:[#allocation5 + $0x170] sm:$0xff]
        %v345 = vld [vmem:[#allocation5 + $0x178] sm:$0xff]
        %346 = vmatprep.subr.mxu0 %v299
        %347 = vmatpush1.msra.mxu0 %v298
        %348 = vmatprep.subr.mxu0 %v302
        %349 = vmatpush1.msra.mxu0 %v301
        %350 = vmatprep.subr.mxu0 %v305
        %351 = vmatpush1.msra.mxu0 %v304
        %352 = vmatprep.subr.mxu0 %v308
        %353 = vmatpush1.msra.mxu0 %v307
        %354 = vmatprep.subr.mxu0 %v311
        %355 = vmatpush1.msra.mxu0 %v310
        %356 = vmatprep.subr.mxu0 %v314
        %357 = vmatpush1.msra.mxu0 %v313
        %358 = vmatprep.subr.mxu0 %v317
        %359 = vmatpush1.msra.mxu0 %v316
        %360 = vmatprep.subr.mxu0 %v320
        %361 = vmatpush1.msra.mxu0 %v319
        %362 = vmatprep.subr.mxu0 %v323
        %363 = vmatpush1.msra.mxu0 %v322
        %364 = vmatprep.subr.mxu0 %v326
        %365 = vmatpush1.msra.mxu0 %v325
        %366 = vmatprep.subr.mxu0 %v329
        %367 = vmatpush1.msra.mxu0 %v328
        %368 = vmatprep.subr.mxu0 %v332
        %369 = vmatpush1.msra.mxu0 %v331
        %370 = vmatprep.subr.mxu0 %v335
        %371 = vmatpush1.msra.mxu0 %v334
        %372 = vmatprep.subr.mxu0 %v338
        %373 = vmatpush1.msra.mxu0 %v337
        %374 = vmatprep.subr.mxu0 %v341
        %375 = vmatpush1.msra.mxu0 %v340
        %376 = vmatprep.subr.mxu0 %v344
        %377 = vmatpush1.msra.mxu0 %v343
        %378 = vmatprep.subr.mxu0 0.0
        %379 = vmatpush1.msra.mxu0 0.0
        %380 = vmatprep.subr.mxu0 0.0
        %381 = vmatpush1.msra.mxu0 0.0
        %382 = vmatprep.subr.mxu0 0.0
        %383 = vmatpush1.msra.mxu0 0.0
        %384 = vmatprep.subr.mxu0 0.0
        %385 = vmatpush1.msra.mxu0 0.0
        %386 = vmatprep.subr.mxu0 0.0
        %387 = vmatpush1.msra.mxu0 0.0
        %388 = vmatprep.subr.mxu0 0.0
        %389 = vmatpush1.msra.mxu0 0.0
        %390 = vmatprep.subr.mxu0 0.0
        %391 = vmatpush1.msra.mxu0 0.0
        %392 = vmatprep.subr.mxu0 0.0
        %393 = vmatpush1.msra.mxu0 0.0
        %394 = vmatprep.subr.mxu0 0.0
        %395 = vmatpush1.msra.mxu0 0.0
        %396 = vmatprep.subr.mxu0 0.0
        %397 = vmatpush1.msra.mxu0 0.0
        %398 = vmatprep.subr.mxu0 0.0
        %399 = vmatpush1.msra.mxu0 0.0
        %400 = vmatprep.subr.mxu0 0.0
        %401 = vmatpush1.msra.mxu0 0.0
        %402 = vmatprep.subr.mxu0 0.0
        %403 = vmatpush1.msra.mxu0 0.0
        %404 = vmatprep.subr.mxu0 0.0
        %405 = vmatpush1.msra.mxu0 0.0
        %406 = vmatprep.subr.mxu0 0.0
        %407 = vmatpush1.msra.mxu0 0.0
        %408 = vmatprep.subr.mxu0 0.0
        %409 = vmatpush1.msra.mxu0 0.0
        %410 = vmatprep.mubr.f32.mxu0 0.0
        %411 = vmatmul.mubr.f32.gmra.mrb[0].mxu0 %v297
        %v412 = vpop.f32.mrb[0].mxu0
        %v413 = vadd.f32 0.0, %v412
        %v414 = vpop.f32.mrb[0].mxu0
        %v415 = vadd.f32 0.0, %v414
        %416 = vdwg.mxu0
        %417 = vmatprep.subr.mxu0 0.0
        %418 = vmatpush1.msra.mxu0 %v300
        %419 = vmatprep.subr.mxu0 0.0
        %420 = vmatpush1.msra.mxu0 %v303
        %421 = vmatprep.subr.mxu0 0.0
        %422 = vmatpush1.msra.mxu0 %v306
        %423 = vmatprep.subr.mxu0 0.0
        %424 = vmatpush1.msra.mxu0 %v309
        %425 = vmatprep.subr.mxu0 0.0
        %426 = vmatpush1.msra.mxu0 %v312
        %427 = vmatprep.subr.mxu0 0.0
        %428 = vmatpush1.msra.mxu0 %v315
        %429 = vmatprep.subr.mxu0 0.0
        %430 = vmatpush1.msra.mxu0 %v318
        %431 = vmatprep.subr.mxu0 0.0
        %432 = vmatpush1.msra.mxu0 %v321
        %433 = vmatprep.subr.mxu0 0.0
        %434 = vmatpush1.msra.mxu0 %v324
        %435 = vmatprep.subr.mxu0 0.0
        %436 = vmatpush1.msra.mxu0 %v327
        %437 = vmatprep.subr.mxu0 0.0
        %438 = vmatpush1.msra.mxu0 %v330
        %439 = vmatprep.subr.mxu0 0.0
        %440 = vmatpush1.msra.mxu0 %v333
        %441 = vmatprep.subr.mxu0 0.0
        %442 = vmatpush1.msra.mxu0 %v336
        %443 = vmatprep.subr.mxu0 0.0
        %444 = vmatpush1.msra.mxu0 %v339
        %445 = vmatprep.subr.mxu0 0.0
        %446 = vmatpush1.msra.mxu0 %v342
        %447 = vmatprep.subr.mxu0 0.0
        %448 = vmatpush1.msra.mxu0 %v345
        %449 = vmatprep.subr.mxu0 0.0
        %450 = vmatpush1.msra.mxu0 0.0
        %451 = vmatprep.subr.mxu0 0.0
        %452 = vmatpush1.msra.mxu0 0.0
        %453 = vmatprep.subr.mxu0 0.0
        %454 = vmatpush1.msra.mxu0 0.0
        %455 = vmatprep.subr.mxu0 0.0
        %456 = vmatpush1.msra.mxu0 0.0
        %457 = vmatprep.subr.mxu0 0.0
        %458 = vmatpush1.msra.mxu0 0.0
        %459 = vmatprep.subr.mxu0 0.0
        %460 = vmatpush1.msra.mxu0 0.0
        %461 = vmatprep.subr.mxu0 0.0
        %462 = vmatpush1.msra.mxu0 0.0
        %463 = vmatprep.subr.mxu0 0.0
        %464 = vmatpush1.msra.mxu0 0.0
        %465 = vmatprep.subr.mxu0 0.0
        %466 = vmatpush1.msra.mxu0 0.0
        %467 = vmatprep.subr.mxu0 0.0
        %468 = vmatpush1.msra.mxu0 0.0
        %469 = vmatprep.subr.mxu0 0.0
        %470 = vmatpush1.msra.mxu0 0.0
        %471 = vmatprep.subr.mxu0 0.0
        %472 = vmatpush1.msra.mxu0 0.0
        %473 = vmatprep.subr.mxu0 0.0
        %474 = vmatpush1.msra.mxu0 0.0
        %475 = vmatprep.subr.mxu0 0.0
        %476 = vmatpush1.msra.mxu0 0.0
        %477 = vmatprep.subr.mxu0 0.0
        %478 = vmatpush1.msra.mxu0 0.0
        %479 = vmatprep.subr.mxu0 0.0
        %480 = vmatpush1.msra.mxu0 0.0
        %481 = vmatprep.mubr.f32.mxu0 0.0
        %482 = vmatmul.mubr.f32.gmra.mrb[0].mxu0 %v297
        %v483 = vpop.f32.mrb[0].mxu0
        %v484 = vadd.f32 0.0, %v483
        %v485 = vpop.f32.mrb[0].mxu0
        %486 = vdwg.mxu0
        %v487 = vadd.f32 %v294, %v413
        %v488 = vadd.f32 %v295, %v415
        %v489 = vadd.f32 %v296, %v484
        %490 = vst [vmem:[#allocation2] sm:$0xff] %v487
        %491 = vst [vmem:[#allocation2 + $0x8] sm:$0xff] %v488
        %492 = vst [vmem:[#allocation2 + $0x10] sm:$0xff] %v489
        // Predicated region
        $region45: #{transformer_encoder_block.4} parent=31 // pred_check
          %p493 = pneg %p270
        $region46: #{transformer_encoder_block.4} parent=31 // pred_check_branch
          %495 = sbr.rel (%p493) target = $region48
        $region47: #{transformer_encoder_block.4} parent=31 // pred_region
          %v496 = vld [vmem:[#allocation2] sm:$0xff]
          %v497 = vld [vmem:[#allocation2 + $0x8] sm:$0xff]
          %v498 = vld [vmem:[#allocation2 + $0x10] sm:$0xff]
          %499 = vst [vmem:[%s268] sm:$0xff] %v496
          %500 = vst [vmem:[%s268 + $0x8] sm:$0xff] %v497
          %501 = vst [vmem:[%s268 + $0x10] sm:$0xff] %v498
        $region48: #{transformer_encoder_block.4} parent=31 // pred_fallthru
          _
        %s502 = smul.u32 3, %s24
        %p503 = scmp.lt.s32.totalorder %s23, 1
        %s504 = scalar_select %p503, %s23, 1
        %p505 = scmp.lt.s32.totalorder %s502, 2
        %s506 = scalar_select %p505, %s502, 2
        %s507 = smul.addr %s504, 3
        %s508 = sadd.s32 %s506, %s507
        %s509 = smul.addr %s508, 8
        %s510 = scalar_lea.vmem %s3, %s509
        // Predicated region
        $region49: #{transformer_encoder_block.4} parent=31 // pred_check
          %p511 = pneg %p139
        $region50: #{transformer_encoder_block.4} parent=31 // pred_check_branch
          %513 = sbr.rel (%p511) target = $region52
        $region51: #{transformer_encoder_block.4} parent=31 // pred_region
          %s514 = smul.u32 3, %s24
        $region52: #{transformer_encoder_block.4} parent=31 // pred_fallthru
          _
      $region32: #{transformer_encoder_block.4} parent=5 // pred_fallthru
        _
      %p515 = scmp.le.s32.totalorder 2, %s13
      // Predicated region
      $region53: #{transformer_encoder_block.4} parent=5 // pred_check
        %p516 = pneg %p515
      $region54: #{transformer_encoder_block.4} parent=5 // pred_check_branch
        %518 = sbr.rel (%p516) target = $region56
      $region55: #{transformer_encoder_block.4} parent=5 // pred_region
        %s519 = ssub.s32 %s13, 2
        // Predicated region
        $region57: #{transformer_encoder_block.4} parent=55 // pred_check
          %p520 = pneg %p145
        $region58: #{transformer_encoder_block.4} parent=55 // pred_check_branch
          %522 = sbr.rel (%p520) target = $region60
        $region59: #{transformer_encoder_block.4} parent=55 // pred_region
          %s523 = smul.u32 3, %s27
          %p524 = scmp.lt.s32.totalorder %s26, 1
          %s525 = scalar_select %p524, %s26, 1
          %p526 = scmp.lt.s32.totalorder %s523, 2
          %s527 = scalar_select %p526, %s523, 2
          %s528 = smul.addr %s525, 3
          %s529 = sadd.s32 %s527, %s528
          %s530 = smul.addr %s529, 8
          %s531 = scalar_lea.vmem %s3, %s530
        $region60: #{transformer_encoder_block.4} parent=55 // pred_fallthru
          _
      $region56: #{transformer_encoder_block.4} parent=5 // pred_fallthru
        _
    $region6: #{transformer_encoder_block.4} parent=1 // loop_footer
      %s17 = sadd.s32 1, %s13
    $region7: #{transformer_encoder_block.4} parent=1 // loop_footer_branch
      %12 = sbr.rel target = $region3
    $region8: #{transformer_encoder_block.4} parent=1 // loop_exit
      _
    %532 = vsyncpa [#allocation4], 1
    %s533 = scalar_lea.sflag [#allocation4], 1
    %534 = vsyncpa %s533, 1
    %535 = vsyncpa [#allocation6], 1

// kernel: transformer_encoder_block.5
$region0: #{transformer_encoder_block.5}
  #allocation0 [shape = 'u32[]', space=smem, size = 0x4, offset = 0x4, fixed_abs, tag = 'smem constant byte address 0x4 - core index']
  #allocation1 [shape = 'u32[144,128]{1,0:T(1,128)}', space=vmem, size = 0x12000, scoped, tag = 'internal scratch']
  #allocation2 [shape = 'f32[4,8,1]{2,1,0:T(8,128)}', space=vmem, size = 0x4000, scoped, tag = 'scratch operand']
  #allocation3 [shape = 'f32[4,8,1]{2,1,0:T(8,128)}', space=vmem, size = 0x4000, scoped, tag = 'scratch operand']
  #allocation4 [shape = 'f32[4,8,32]{2,1,0:T(8,128)}', space=vmem, size = 0x4000, scoped, tag = 'scratch operand']
  %s0 = inlined_call_operand.vmem [shape: f32[16,384], index: 0, kind: input, shape index: {}, may-alias: {0,1,2}]
  %s1 = inlined_call_operand.vmem [shape: f32[16,384], index: 1, kind: input, shape index: {}, may-alias: {0,1,2}]
  %s2 = inlined_call_operand.vmem [shape: f32[16,384], index: 2, kind: input, shape index: {}, may-alias: {0,1,2}]
  %s3 = inlined_call_operand.vmem [shape: f32[16,128], index: 3, kind: output, shape index: {}]
  %s4 = sld [smem:[#allocation0]]
  $region53: #{transformer_encoder_block.5} parent=0
    _
  %s6 = ssub.s32 1, %s4
  %s7 = scalar_select 0, %s6, %s4
  loop: start=0, step=1, limit=4
  $region2: #{transformer_encoder_block.5} parent=0 // loop_pre_header
    _
  $region3: #{transformer_encoder_block.5} parent=0 // loop_header
    %s9 = sphi 0, %s13
    %p10 = scmp.ge.s32.totalorder %s9, 4
    %s16 = sphi 0, %s42
    %s17 = sphi 0, %s38
    %s18 = sphi 0, %s34
    %s19 = sphi 0, %s30
    %s20 = sphi 0, %s16
    %s21 = sphi 0, %s17
    %s22 = sphi 0, %s18
    %s23 = sphi 0, %s19
    %s24 = sphi 0, %s20
    %s25 = sphi 0, %s21
    %s26 = sphi 0, %s22
    %s27 = sphi 0, %s23
    %s49 = sphi 0, %s51
    %s52 = sphi 0, %s49
    %s53 = sphi 0, %s52
    %s69 = sphi 0, %s53
    %s81 = sphi 0, %s83
    %s84 = sphi 0, %s81
    %s85 = sphi 0, %s84
    %s101 = sphi 0, %s85
    %s113 = sphi 0, %s115
    %s116 = sphi 0, %s113
    %s117 = sphi 0, %s116
    %s133 = sphi 0, %s117
    %s143 = sphi 0, %s145
    %s146 = sphi 0, %s143
    %s147 = sphi 0, %s146
    %s163 = sphi 0, %s147
  $region4: #{transformer_encoder_block.5} parent=0 // loop_header_branch
    %12 = sbr.rel (%p10) target = $region8
  $region5: #{transformer_encoder_block.5} parent=0 // loop_body
    %s14 = ssub.s32 %s9, 1
    %s15 = ssub.s32 %s9, 2
    %s28 = sadd.s32 1, %s19
    %p29 = scmp.ge.s32.totalorder %s28, 1
    %s30 = scalar_select %p29, 0, %s28
    %s31 = sadd.s32 1, %s18
    %s32 = scalar_select %p29, %s31, %s18
    %p33 = scmp.ge.s32.totalorder %s32, 1
    %s34 = scalar_select %p33, 0, %s32
    %s35 = sadd.s32 1, %s17
    %s36 = scalar_select %p33, %s35, %s17
    %p37 = scmp.ge.s32.totalorder %s36, 1
    %s38 = scalar_select %p37, 0, %s36
    %s39 = sadd.s32 1, %s16
    %s40 = scalar_select %p37, %s39, %s16
    %p41 = scmp.ge.s32.totalorder %s40, 2
    %s42 = scalar_select %p41, 0, %s40
    %s43 = sadd.s32 %s16, %s18
    %s44 = sadd.s32 %s42, %s34
    %s45 = ssub.s32 %s43, %s44
    %s46 = ssub.s32 %s17, %s38
    %s47 = sor.u32 %s45, %s46
    %p48 = scmp.eq.s32.totalorder %s47, 0
    %s50 = sadd.s32 %s49, 1
    %s51 = scalar_select %p48, %s49, %s50
    %p54 = pneg %p48
    %p55 = scmp.eq.s32.totalorder %s9, 1
    %p56 = por %p54, %p55
    %p57 = scmp.ne.s32.totalorder %s49, %s52
    %p58 = scmp.eq.s32.totalorder %s9, 0
    %p59 = por %p57, %p58
    %p60 = scmp.ne.s32.totalorder %s49, %s52
    %p61 = scmp.eq.s32.totalorder %s14, 1
    %p62 = por %p60, %p61
    %p63 = scmp.ne.s32.totalorder %s52, %s53
    %p64 = scmp.eq.s32.totalorder %s14, 0
    %p65 = por %p63, %p64
    %p66 = scmp.ne.s32.totalorder %s52, %s53
    %p67 = scmp.eq.s32.totalorder %s15, 1
    %p68 = por %p66, %p67
    %p70 = scmp.ne.s32.totalorder %s53, %s69
    %p71 = scmp.eq.s32.totalorder %s15, 0
    %p72 = por %p70, %p71
    %s73 = sadd.s32 %s16, %s19
    %s74 = sadd.s32 %s17, 1
    %s75 = sadd.s32 %s42, %s30
    %s76 = sadd.s32 %s38, 1
    %s77 = ssub.s32 %s73, %s75
    %s78 = ssub.s32 %s74, %s76
    %s79 = sor.u32 %s77, %s78
    %p80 = scmp.eq.s32.totalorder %s79, 0
    %s82 = sadd.s32 %s81, 1
    %s83 = scalar_select %p80, %s81, %s82
    %p86 = pneg %p80
    %p87 = scmp.eq.s32.totalorder %s9, 1
    %p88 = por %p86, %p87
    %p89 = scmp.ne.s32.totalorder %s81, %s84
    %p90 = scmp.eq.s32.totalorder %s9, 0
    %p91 = por %p89, %p90
    %p92 = scmp.ne.s32.totalorder %s81, %s84
    %p93 = scmp.eq.s32.totalorder %s14, 1
    %p94 = por %p92, %p93
    %p95 = scmp.ne.s32.totalorder %s84, %s85
    %p96 = scmp.eq.s32.totalorder %s14, 0
    %p97 = por %p95, %p96
    %p98 = scmp.ne.s32.totalorder %s84, %s85
    %p99 = scmp.eq.s32.totalorder %s15, 1
    %p100 = por %p98, %p99
    %p102 = scmp.ne.s32.totalorder %s85, %s101
    %p103 = scmp.eq.s32.totalorder %s15, 0
    %p104 = por %p102, %p103
    %s105 = sadd.s32 %s16, %s19
    %s106 = sadd.s32 %s17, 2
    %s107 = sadd.s32 %s42, %s30
    %s108 = sadd.s32 %s38, 2
    %s109 = ssub.s32 %s105, %s107
    %s110 = ssub.s32 %s106, %s108
    %s111 = sor.u32 %s109, %s110
    %p112 = scmp.eq.s32.totalorder %s111, 0
    %s114 = sadd.s32 %s113, 1
    %s115 = scalar_select %p112, %s113, %s114
    %p118 = pneg %p112
    %p119 = scmp.eq.s32.totalorder %s9, 1
    %p120 = por %p118, %p119
    %p121 = scmp.ne.s32.totalorder %s113, %s116
    %p122 = scmp.eq.s32.totalorder %s9, 0
    %p123 = por %p121, %p122
    %p124 = scmp.ne.s32.totalorder %s113, %s116
    %p125 = scmp.eq.s32.totalorder %s14, 1
    %p126 = por %p124, %p125
    %p127 = scmp.ne.s32.totalorder %s116, %s117
    %p128 = scmp.eq.s32.totalorder %s14, 0
    %p129 = por %p127, %p128
    %p130 = scmp.ne.s32.totalorder %s116, %s117
    %p131 = scmp.eq.s32.totalorder %s15, 1
    %p132 = por %p130, %p131
    %p134 = scmp.ne.s32.totalorder %s117, %s133
    %p135 = scmp.eq.s32.totalorder %s15, 0
    %p136 = por %p134, %p135
    %s137 = sadd.s32 %s16, %s18
    %s138 = sadd.s32 %s42, %s34
    %s139 = ssub.s32 %s137, %s138
    %s140 = ssub.s32 %s17, %s38
    %s141 = sor.u32 %s139, %s140
    %p142 = scmp.eq.s32.totalorder %s141, 0
    %s144 = sadd.s32 %s143, 1
    %s145 = scalar_select %p142, %s143, %s144
    %p148 = pneg %p142
    %p149 = scmp.eq.s32.totalorder %s9, 1
    %p150 = por %p148, %p149
    %p151 = scmp.ne.s32.totalorder %s143, %s146
    %p152 = scmp.eq.s32.totalorder %s9, 0
    %p153 = por %p151, %p152
    %p154 = scmp.ne.s32.totalorder %s143, %s146
    %p155 = scmp.eq.s32.totalorder %s14, 1
    %p156 = por %p154, %p155
    %p157 = scmp.ne.s32.totalorder %s146, %s147
    %p158 = scmp.eq.s32.totalorder %s14, 0
    %p159 = por %p157, %p158
    %p160 = scmp.ne.s32.totalorder %s146, %s147
    %p161 = scmp.eq.s32.totalorder %s15, 1
    %p162 = por %p160, %p161
    %p164 = scmp.ne.s32.totalorder %s147, %s163
    %p165 = scmp.eq.s32.totalorder %s15, 0
    %p166 = por %p164, %p165
    %p167 = scmp.le.s32.totalorder 1, %s9
    %p168 = scmp.lt.s32.totalorder %s9, 3
    %p169 = pnand %p167, %p168
    %p170 = pneg %p169
    // Predicated region
    $region9: #{transformer_encoder_block.5} parent=5 // pred_check
      _
    $region10: #{transformer_encoder_block.5} parent=5 // pred_check_branch
      %172 = sbr.rel (%p169) target = $region12
    $region11: #{transformer_encoder_block.5} parent=5 // pred_region
      %s173 = ssub.s32 %s9, 1
    $region12: #{transformer_encoder_block.5} parent=5 // pred_fallthru
      _
    %p174 = scmp.lt.s32.totalorder %s9, 2
    // Predicated region
    $region13: #{transformer_encoder_block.5} parent=5 // pred_check
      %p175 = pneg %p174
    $region14: #{transformer_encoder_block.5} parent=5 // pred_check_branch
      %177 = sbr.rel (%p175) target = $region16
    $region15: #{transformer_encoder_block.5} parent=5 // pred_region
      // Predicated region
      $region17: #{transformer_encoder_block.5} parent=15 // pred_check
        %p178 = pneg %p59
      $region18: #{transformer_encoder_block.5} parent=15 // pred_check_branch
        %180 = sbr.rel (%p178) target = $region20
      $region19: #{transformer_encoder_block.5} parent=15 // pred_region
        %s181 = sadd.s32 %s16, %s18
        %p182 = scmp.lt.s32.totalorder %s181, 1
        %s183 = scalar_select %p182, %s181, 1
        %p184 = scmp.lt.s32.totalorder %s17, 2
        %s185 = scalar_select %p184, %s17, 2
        %s186 = smul.addr %s183, 3
        %s187 = sadd.s32 %s185, %s186
        %s188 = smul.addr %s187, 8
        %s189 = scalar_lea.vmem %s0, %s188
        %s190 = sadd.s32 %s16, %s18
      $region20: #{transformer_encoder_block.5} parent=15 // pred_fallthru
        _
      // Predicated region
      $region21: #{transformer_encoder_block.5} parent=15 // pred_check
        %p191 = pneg %p91
      $region22: #{transformer_encoder_block.5} parent=15 // pred_check_branch
        %193 = sbr.rel (%p191) target = $region24
      $region23: #{transformer_encoder_block.5} parent=15 // pred_region
        %s194 = sadd.s32 %s16, %s19
        %s195 = sadd.s32 %s17, 1
        %p196 = scmp.lt.s32.totalorder %s194, 1
        %s197 = scalar_select %p196, %s194, 1
        %p198 = scmp.lt.s32.totalorder %s195, 2
        %s199 = scalar_select %p198, %s195, 2
        %s200 = smul.addr %s197, 3
        %s201 = sadd.s32 %s199, %s200
        %s202 = smul.addr %s201, 8
        %s203 = scalar_lea.vmem %s1, %s202
        %s204 = sadd.s32 %s16, %s19
        %s205 = sadd.s32 %s17, 1
      $region24: #{transformer_encoder_block.5} parent=15 // pred_fallthru
        _
      // Predicated region
      $region25: #{transformer_encoder_block.5} parent=15 // pred_check
        %p206 = pneg %p123
      $region26: #{transformer_encoder_block.5} parent=15 // pred_check_branch
        %208 = sbr.rel (%p206) target = $region28
      $region27: #{transformer_encoder_block.5} parent=15 // pred_region
        %s209 = sadd.s32 %s16, %s19
        %s210 = sadd.s32 %s17, 2
        %p211 = scmp.lt.s32.totalorder %s209, 1
        %s212 = scalar_select %p211, %s209, 1
        %p213 = scmp.lt.s32.totalorder %s210, 2
        %s214 = scalar_select %p213, %s210, 2
        %s215 = smul.addr %s212, 3
        %s216 = sadd.s32 %s214, %s215
        %s217 = smul.addr %s216, 8
        %s218 = scalar_lea.vmem %s2, %s217
        %s219 = sadd.s32 %s16, %s19
        %s220 = sadd.s32 %s17, 2
      $region28: #{transformer_encoder_block.5} parent=15 // pred_fallthru
        _
    $region16: #{transformer_encoder_block.5} parent=5 // pred_fallthru
      _
    %p221 = scmp.le.s32.totalorder 1, %s9
    %p222 = scmp.lt.s32.totalorder %s9, 3
    %p223 = pnand %p221, %p222
    %p224 = pneg %p223
    // Predicated region
    $region29: #{transformer_encoder_block.5} parent=5 // pred_check
      _
    $region30: #{transformer_encoder_block.5} parent=5 // pred_check_branch
      %226 = sbr.rel (%p223) target = $region32
    $region31: #{transformer_encoder_block.5} parent=5 // pred_region
      %s227 = ssub.s32 %s9, 1
      %s228 = sadd.s32 %s20, %s22
      %p229 = scmp.lt.s32.totalorder %s228, 1
      %s230 = scalar_select %p229, %s228, 1
      %p231 = scmp.lt.s32.totalorder %s21, 2
      %s232 = scalar_select %p231, %s21, 2
      %s233 = smul.addr %s230, 3
      %s234 = sadd.s32 %s232, %s233
      %s235 = smul.addr %s234, 8
      %s236 = scalar_lea.vmem %s0, %s235
      %p237 = pneg %p65
      %p238 = pneg %p62
      %s239 = sadd.s32 %s20, %s23
      %s240 = sadd.s32 %s21, 1
      %p241 = scmp.lt.s32.totalorder %s239, 1
      %s242 = scalar_select %p241, %s239, 1
      %p243 = scmp.lt.s32.totalorder %s240, 2
      %s244 = scalar_select %p243, %s240, 2
      %s245 = smul.addr %s242, 3
      %s246 = sadd.s32 %s244, %s245
      %s247 = smul.addr %s246, 8
      %s248 = scalar_lea.vmem %s1, %s247
      %p249 = pneg %p97
      %p250 = pneg %p94
      %s251 = sadd.s32 %s20, %s23
      %s252 = sadd.s32 %s21, 2
      %p253 = scmp.lt.s32.totalorder %s251, 1
      %s254 = scalar_select %p253, %s251, 1
      %p255 = scmp.lt.s32.totalorder %s252, 2
      %s256 = scalar_select %p255, %s252, 2
      %s257 = smul.addr %s254, 3
      %s258 = sadd.s32 %s256, %s257
      %s259 = smul.addr %s258, 8
      %s260 = scalar_lea.vmem %s2, %s259
      %p261 = pneg %p129
      %p262 = pneg %p126
      %p263 = pneg %p159
      %p264 = pneg %p156
      %s265 = sadd.s32 %s20, %s22
      %p266 = scmp.lt.s32.totalorder %s265, 1
      %s267 = scalar_select %p266, %s265, 1
      %p268 = scmp.lt.s32.totalorder %s21, 0
      %s269 = scalar_select %p268, %s21, 0
      %s270 = sadd.s32 %s269, %s267
      %s271 = smul.addr %s270, 8
      %s272 = scalar_lea.vmem %s3, %s271
      %s273 = sadd.s32 %s20, %s22
      %p274 = scmp.lt.s32.totalorder %s273, 1
      %s275 = scalar_select %p274, %s273, 1
      %p276 = scmp.lt.s32.totalorder %s21, 2
      %s277 = scalar_select %p276, %s21, 2
      %s278 = smul.addr %s275, 3
      %s279 = sadd.s32 %s277, %s278
      %s280 = smul.addr %s279, 8
      %s281 = scalar_lea.vmem %s0, %s280
      %s282 = sadd.s32 %s20, %s22
      %s283 = sadd.s32 %s20, %s23
      %s284 = sadd.s32 %s21, 1
      %p285 = scmp.lt.s32.totalorder %s283, 1
      %s286 = scalar_select %p285, %s283, 1
      %p287 = scmp.lt.s32.totalorder %s284, 2
      %s288 = scalar_select %p287, %s284, 2
      %s289 = smul.addr %s286, 3
      %s290 = sadd.s32 %s288, %s289
      %s291 = smul.addr %s290, 8
      %s292 = scalar_lea.vmem %s1, %s291
      %s293 = sadd.s32 %s20, %s23
      %s294 = sadd.s32 %s21, 1
      %s295 = sadd.s32 %s20, %s23
      %s296 = sadd.s32 %s21, 2
      %p297 = scmp.lt.s32.totalorder %s295, 1
      %s298 = scalar_select %p297, %s295, 1
      %p299 = scmp.lt.s32.totalorder %s296, 2
      %s300 = scalar_select %p299, %s296, 2
      %s301 = smul.addr %s298, 3
      %s302 = sadd.s32 %s300, %s301
      %s303 = smul.addr %s302, 8
      %s304 = scalar_lea.vmem %s2, %s303
      %s305 = sadd.s32 %s20, %s23
      %s306 = sadd.s32 %s21, 2
      %s307 = sadd.s32 %s20, %s22
      %p308 = scmp.lt.s32.totalorder %s307, 1
      %s309 = scalar_select %p308, %s307, 1
      %p310 = scmp.lt.s32.totalorder %s21, 0
      %s311 = scalar_select %p310, %s21, 0
      %s312 = sadd.s32 %s311, %s309
      %s313 = smul.addr %s312, 8
      %s314 = scalar_lea.vmem %s3, %s313
      %s315 = sadd.s32 %s20, %s22
      %p316 = scmp.eq.s32.totalorder %s23, 0
      // Predicated region
      $region33: #{transformer_encoder_block.5} parent=31 // pred_check
        %p317 = pneg %p316
      $region34: #{transformer_encoder_block.5} parent=31 // pred_check_branch
        %319 = sbr.rel (%p317) target = $region36
      $region35: #{transformer_encoder_block.5} parent=31 // pred_region
        %vm320 = vcmask 7168
        %321 = vst.msk [vmem:[#allocation2] sm:$0xff] %vm320, -inf
        %322 = vst.msk [vmem:[#allocation2 + $0x8] sm:$0xff] %vm320, -inf
        %323 = vst.msk [vmem:[#allocation2 + $0x10] sm:$0xff] %vm320, -inf
        %324 = vst.msk [vmem:[#allocation2 + $0x18] sm:$0xff] %vm320, -inf
        %325 = vst.msk [vmem:[#allocation3] sm:$0xff] %vm320, 0.0
        %326 = vst.msk [vmem:[#allocation3 + $0x8] sm:$0xff] %vm320, 0.0
        %327 = vst.msk [vmem:[#allocation3 + $0x10] sm:$0xff] %vm320, 0.0
        %328 = vst.msk [vmem:[#allocation3 + $0x18] sm:$0xff] %vm320, 0.0
        %vm329 = vcmask 261120
        %330 = vst.msk [vmem:[#allocation4] sm:$0xff] %vm329, 0.0
        %331 = vst.msk [vmem:[#allocation4 + $0x8] sm:$0xff] %vm329, 0.0
        %332 = vst.msk [vmem:[#allocation4 + $0x10] sm:$0xff] %vm329, 0.0
        %333 = vst.msk [vmem:[#allocation4 + $0x18] sm:$0xff] %vm329, 0.0
      $region36: #{transformer_encoder_block.5} parent=31 // pred_fallthru
        _
      %v334 = vld [vmem:[%s281] sm:$0xff]
      %v335 = vld [vmem:[%s292] sm:$0xff]
      %vm336 = vcmask 261120
      %v338 = vsel %vm336, %v334, 0
      %v341 = vsel %vm336, %v335, 0
      %343 = vmatprep.subr.mxu0 0.0
      %344 = vmatpush1.xpose.msra.mxu0 %v341
      %345 = vmatprep.subr.mxu0 0.0
      %346 = vmatpush1.xpose.msra.mxu0 0.0
      %347 = vmatprep.subr.mxu0 0.0
      %348 = vmatpush1.xpose.msra.mxu0 0.0
      %349 = vmatprep.subr.mxu0 0.0
      %350 = vmatpush1.xpose.msra.mxu0 0.0
      %351 = vmatprep.subr.mxu0 0.0
      %352 = vmatpush1.xpose.msra.mxu0 0.0
      %353 = vmatprep.subr.mxu0 0.0
      %354 = vmatpush1.xpose.msra.mxu0 0.0
      %355 = vmatprep.subr.mxu0 0.0
      %356 = vmatpush1.xpose.msra.mxu0 0.0
      %357 = vmatprep.subr.mxu0 0.0
      %358 = vmatpush1.xpose.msra.mxu0 0.0
      %359 = vmatprep.subr.mxu0 0.0
      %360 = vmatpush1.xpose.msra.mxu0 0.0
      %361 = vmatprep.subr.mxu0 0.0
      %362 = vmatpush1.xpose.msra.mxu0 0.0
      %363 = vmatprep.subr.mxu0 0.0
      %364 = vmatpush1.xpose.msra.mxu0 0.0
      %365 = vmatprep.subr.mxu0 0.0
      %366 = vmatpush1.xpose.msra.mxu0 0.0
      %367 = vmatprep.subr.mxu0 0.0
      %368 = vmatpush1.xpose.msra.mxu0 0.0
      %369 = vmatprep.subr.mxu0 0.0
      %370 = vmatpush1.xpose.msra.mxu0 0.0
      %371 = vmatprep.subr.mxu0 0.0
      %372 = vmatpush1.xpose.msra.mxu0 0.0
      %373 = vmatprep.subr.mxu0 0.0
      %374 = vmatpush1.xpose.msra.mxu0 0.0
      %375 = vmatprep.subr.mxu0 0.0
      %376 = vmatpush1.xpose.msra.mxu0 0.0
      %377 = vmatprep.subr.mxu0 0.0
      %378 = vmatpush1.xpose.msra.mxu0 0.0
      %379 = vmatprep.subr.mxu0 0.0
      %380 = vmatpush1.xpose.msra.mxu0 0.0
      %381 = vmatprep.subr.mxu0 0.0
      %382 = vmatpush1.xpose.msra.mxu0 0.0
      %383 = vmatprep.subr.mxu0 0.0
      %384 = vmatpush1.xpose.msra.mxu0 0.0
      %385 = vmatprep.subr.mxu0 0.0
      %386 = vmatpush1.xpose.msra.mxu0 0.0
      %387 = vmatprep.subr.mxu0 0.0
      %388 = vmatpush1.xpose.msra.mxu0 0.0
      %389 = vmatprep.subr.mxu0 0.0
      %390 = vmatpush1.xpose.msra.mxu0 0.0
      %391 = vmatprep.subr.mxu0 0.0
      %392 = vmatpush1.xpose.msra.mxu0 0.0
      %393 = vmatprep.subr.mxu0 0.0
      %394 = vmatpush1.xpose.msra.mxu0 0.0
      %395 = vmatprep.subr.mxu0 0.0
      %396 = vmatpush1.xpose.msra.mxu0 0.0
      %397 = vmatprep.subr.mxu0 0.0
      %398 = vmatpush1.xpose.msra.mxu0 0.0
      %399 = vmatprep.subr.mxu0 0.0
      %400 = vmatpush1.xpose.msra.mxu0 0.0
      %401 = vmatprep.subr.mxu0 0.0
      %402 = vmatpush1.xpose.msra.mxu0 0.0
      %403 = vmatprep.subr.mxu0 0.0
      %404 = vmatpush1.xpose.msra.mxu0 0.0
      %405 = vmatprep.subr.mxu0 0.0
      %406 = vmatpush1.xpose.msra.mxu0 0.0
      %407 = vmatprep.mubr.f32.mxu0 0.0
      %408 = vmatmul.mubr.f32.gmra.mrb[0].mxu0 %v338
      %v409 = vpop.f32.mrb[0].mxu0
      %v410 = vadd.f32 0.0, %v409
      %v411 = vpop.f32.mrb[0].mxu0
      %412 = vdwg.mxu0
      %v413 = vld [vmem:[#allocation2] sm:$0xff]
      %vm414 = vcmask 64512
      %v415 = vsel %vm414, %v410, -inf
      %416 = vmax.xlane.f32.xlu0 %v415
      %v417 = vpop.xlane.xlu0 %416
      %v418 = vmax.f32 %v413, %v417
      %v419 = vsub.f32 %v413, %v418
      %v420 = vmul.f32 %v419, 1.442695
      %v421 = vpow.pop %v420
      %423 = vset.pattern.permute.xlu0 0
      %424 = vperm.xlu0 %423, %v418
      %v425 = vpop.permute.xlu0 %424
      %v427 = vsub.f32 %v410, %v425
      %v428 = vmul.f32 %v427, 1.442695
      %v429 = vpow.pop %v428
      %v430 = vld [vmem:[#allocation3] sm:$0xff]
      %v431 = vmul.f32 %v421, %v430
      %v432 = vsel %vm414, %v429, 0.0
      %433 = vadd.xlane.f32.xlu0 %v432
      %v434 = vpop.xlane.xlu0 %433
      %v435 = vadd.f32 %v431, %v434
      %vm436 = vcmask 7168
      %437 = vst.msk [vmem:[#allocation3] sm:$0xff] %vm436, %v435
      %v438 = vld [vmem:[#allocation4] sm:$0xff]
      %440 = vset.pattern.permute.xlu0 0
      %441 = vperm.xlu0 %440, %v421
      %v442 = vpop.permute.xlu0 %441
      %v444 = vmul.f32 %v442, %v438
      %v445 = vld [vmem:[%s304] sm:$0xff]
      %v447 = vsel %vm414, %v429, 0
      %449 = vmatprep.subr.mxu0 0.0
      %450 = vmatpush1.msra.mxu0 %v445
      %451 = vmatprep.subr.mxu0 0.0
      %452 = vmatpush1.msra.mxu0 0.0
      %453 = vmatprep.subr.mxu0 0.0
      %454 = vmatpush1.msra.mxu0 0.0
      %455 = vmatprep.subr.mxu0 0.0
      %456 = vmatpush1.msra.mxu0 0.0
      %457 = vmatprep.subr.mxu0 0.0
      %458 = vmatpush1.msra.mxu0 0.0
      %459 = vmatprep.subr.mxu0 0.0
      %460 = vmatpush1.msra.mxu0 0.0
      %461 = vmatprep.subr.mxu0 0.0
      %462 = vmatpush1.msra.mxu0 0.0
      %463 = vmatprep.subr.mxu0 0.0
      %464 = vmatpush1.msra.mxu0 0.0
      %465 = vmatprep.subr.mxu0 0.0
      %466 = vmatpush1.msra.mxu0 0.0
      %467 = vmatprep.subr.mxu0 0.0
      %468 = vmatpush1.msra.mxu0 0.0
      %469 = vmatprep.subr.mxu0 0.0
      %470 = vmatpush1.msra.mxu0 0.0
      %471 = vmatprep.subr.mxu0 0.0
      %472 = vmatpush1.msra.mxu0 0.0
      %473 = vmatprep.subr.mxu0 0.0
      %474 = vmatpush1.msra.mxu0 0.0
      %475 = vmatprep.subr.mxu0 0.0
      %476 = vmatpush1.msra.mxu0 0.0
      %477 = vmatprep.subr.mxu0 0.0
      %478 = vmatpush1.msra.mxu0 0.0
      %479 = vmatprep.subr.mxu0 0.0
      %480 = vmatpush1.msra.mxu0 0.0
      %481 = vmatprep.subr.mxu0 0.0
      %482 = vmatpush1.msra.mxu0 0.0
      %483 = vmatprep.subr.mxu0 0.0
      %484 = vmatpush1.msra.mxu0 0.0
      %485 = vmatprep.subr.mxu0 0.0
      %486 = vmatpush1.msra.mxu0 0.0
      %487 = vmatprep.subr.mxu0 0.0
      %488 = vmatpush1.msra.mxu0 0.0
      %489 = vmatprep.subr.mxu0 0.0
      %490 = vmatpush1.msra.mxu0 0.0
      %491 = vmatprep.subr.mxu0 0.0
      %492 = vmatpush1.msra.mxu0 0.0
      %493 = vmatprep.subr.mxu0 0.0
      %494 = vmatpush1.msra.mxu0 0.0
      %495 = vmatprep.subr.mxu0 0.0
      %496 = vmatpush1.msra.mxu0 0.0
      %497 = vmatprep.subr.mxu0 0.0
      %498 = vmatpush1.msra.mxu0 0.0
      %499 = vmatprep.subr.mxu0 0.0
      %500 = vmatpush1.msra.mxu0 0.0
      %501 = vmatprep.subr.mxu0 0.0
      %502 = vmatpush1.msra.mxu0 0.0
      %503 = vmatprep.subr.mxu0 0.0
      %504 = vmatpush1.msra.mxu0 0.0
      %505 = vmatprep.subr.mxu0 0.0
      %506 = vmatpush1.msra.mxu0 0.0
      %507 = vmatprep.subr.mxu0 0.0
      %508 = vmatpush1.msra.mxu0 0.0
      %509 = vmatprep.subr.mxu0 0.0
      %510 = vmatpush1.msra.mxu0 0.0
      %511 = vmatprep.subr.mxu0 0.0
      %512 = vmatpush1.msra.mxu0 0.0
      %513 = vmatprep.mubr.f32.mxu0 0.0
      %514 = vmatmul.mubr.f32.gmra.mrb[0].mxu0 %v447
      %v515 = vpop.f32.mrb[0].mxu0
      %v516 = vadd.f32 0.0, %v515
      %v517 = vpop.f32.mrb[0].mxu0
      %518 = vdwg.mxu0
      %v519 = vadd.f32 %v444, %v516
      %520 = vst.msk [vmem:[#allocation4] sm:$0xff] %vm336, %v519
      %521 = vst.msk [vmem:[#allocation2] sm:$0xff] %vm436, %v418
      %v522 = vld [vmem:[%s281] sm:$0xff]
      %v523 = vld [vmem:[%s292] sm:$0xff]
      %525 = vrot.lane.b32.xlu0 %v522, 96
      %v526 = vpop.permute.xlu0 %525
      %528 = vrot.lane.b32.xlu0 %v523, 96
      %v529 = vpop.permute.xlu0 %528
      %v530 = vsel %vm336, %v526, 0
      %v532 = vsel %vm336, %v529, 0
      %534 = vmatprep.subr.mxu0 0.0
      %535 = vmatpush1.xpose.msra.mxu0 %v532
      %536 = vmatprep.subr.mxu0 0.0
      %537 = vmatpush1.xpose.msra.mxu0 0.0
      %538 = vmatprep.subr.mxu0 0.0
      %539 = vmatpush1.xpose.msra.mxu0 0.0
      %540 = vmatprep.subr.mxu0 0.0
      %541 = vmatpush1.xpose.msra.mxu0 0.0
      %542 = vmatprep.subr.mxu0 0.0
      %543 = vmatpush1.xpose.msra.mxu0 0.0
      %544 = vmatprep.subr.mxu0 0.0
      %545 = vmatpush1.xpose.msra.mxu0 0.0
      %546 = vmatprep.subr.mxu0 0.0
      %547 = vmatpush1.xpose.msra.mxu0 0.0
      %548 = vmatprep.subr.mxu0 0.0
      %549 = vmatpush1.xpose.msra.mxu0 0.0
      %550 = vmatprep.subr.mxu0 0.0
      %551 = vmatpush1.xpose.msra.mxu0 0.0
      %552 = vmatprep.subr.mxu0 0.0
      %553 = vmatpush1.xpose.msra.mxu0 0.0
      %554 = vmatprep.subr.mxu0 0.0
      %555 = vmatpush1.xpose.msra.mxu0 0.0
      %556 = vmatprep.subr.mxu0 0.0
      %557 = vmatpush1.xpose.msra.mxu0 0.0
      %558 = vmatprep.subr.mxu0 0.0
      %559 = vmatpush1.xpose.msra.mxu0 0.0
      %560 = vmatprep.subr.mxu0 0.0
      %561 = vmatpush1.xpose.msra.mxu0 0.0
      %562 = vmatprep.subr.mxu0 0.0
      %563 = vmatpush1.xpose.msra.mxu0 0.0
      %564 = vmatprep.subr.mxu0 0.0
      %565 = vmatpush1.xpose.msra.mxu0 0.0
      %566 = vmatprep.subr.mxu0 0.0
      %567 = vmatpush1.xpose.msra.mxu0 0.0
      %568 = vmatprep.subr.mxu0 0.0
      %569 = vmatpush1.xpose.msra.mxu0 0.0
      %570 = vmatprep.subr.mxu0 0.0
      %571 = vmatpush1.xpose.msra.mxu0 0.0
      %572 = vmatprep.subr.mxu0 0.0
      %573 = vmatpush1.xpose.msra.mxu0 0.0
      %574 = vmatprep.subr.mxu0 0.0
      %575 = vmatpush1.xpose.msra.mxu0 0.0
      %576 = vmatprep.subr.mxu0 0.0
      %577 = vmatpush1.xpose.msra.mxu0 0.0
      %578 = vmatprep.subr.mxu0 0.0
      %579 = vmatpush1.xpose.msra.mxu0 0.0
      %580 = vmatprep.subr.mxu0 0.0
      %581 = vmatpush1.xpose.msra.mxu0 0.0
      %582 = vmatprep.subr.mxu0 0.0
      %583 = vmatpush1.xpose.msra.mxu0 0.0
      %584 = vmatprep.subr.mxu0 0.0
      %585 = vmatpush1.xpose.msra.mxu0 0.0
      %586 = vmatprep.subr.mxu0 0.0
      %587 = vmatpush1.xpose.msra.mxu0 0.0
      %588 = vmatprep.subr.mxu0 0.0
      %589 = vmatpush1.xpose.msra.mxu0 0.0
      %590 = vmatprep.subr.mxu0 0.0
      %591 = vmatpush1.xpose.msra.mxu0 0.0
      %592 = vmatprep.subr.mxu0 0.0
      %593 = vmatpush1.xpose.msra.mxu0 0.0
      %594 = vmatprep.subr.mxu0 0.0
      %595 = vmatpush1.xpose.msra.mxu0 0.0
      %596 = vmatprep.subr.mxu0 0.0
      %597 = vmatpush1.xpose.msra.mxu0 0.0
      %598 = vmatprep.mubr.f32.mxu0 0.0
      %599 = vmatmul.mubr.f32.gmra.mrb[0].mxu0 %v530
      %v600 = vpop.f32.mrb[0].mxu0
      %v601 = vadd.f32 0.0, %v600
      %v602 = vpop.f32.mrb[0].mxu0
      %603 = vdwg.mxu0
      %s604 = scalar_lea.vmem [#allocation2], 8
      %v605 = vld [vmem:[%s604] sm:$0xff]
      %v606 = vsel %vm414, %v601, -inf
      %607 = vmax.xlane.f32.xlu0 %v606
      %v608 = vpop.xlane.xlu0 %607
      %v609 = vmax.f32 %v605, %v608
      %v610 = vsub.f32 %v605, %v609
      %v611 = vmul.f32 %v610, 1.442695
      %v612 = vpow.pop %v611
      %614 = vset.pattern.permute.xlu0 0
      %615 = vperm.xlu0 %614, %v609
      %v616 = vpop.permute.xlu0 %615
      %v618 = vsub.f32 %v601, %v616
      %v619 = vmul.f32 %v618, 1.442695
      %v620 = vpow.pop %v619
      %s621 = scalar_lea.vmem [#allocation3], 8
      %v622 = vld [vmem:[%s621] sm:$0xff]
      %v623 = vmul.f32 %v612, %v622
      %v624 = vsel %vm414, %v620, 0.0
      %625 = vadd.xlane.f32.xlu0 %v624
      %v626 = vpop.xlane.xlu0 %625
      %v627 = vadd.f32 %v623, %v626
      %628 = vst.msk [vmem:[%s621] sm:$0xff] %vm436, %v627
      %s629 = scalar_lea.vmem [#allocation4], 8
      %v630 = vld [vmem:[%s629] sm:$0xff]
      %632 = vset.pattern.permute.xlu0 0
      %633 = vperm.xlu0 %632, %v612
      %v634 = vpop.permute.xlu0 %633
      %v636 = vmul.f32 %v634, %v630
      %v637 = vld [vmem:[%s304] sm:$0xff]
      %639 = vrot.lane.b32.xlu0 %v637, 96
      %v640 = vpop.permute.xlu0 %639
      %v643 = vsel %vm414, %v620, 0
      %645 = vmatprep.subr.mxu0 0.0
      %646 = vmatpush1.msra.mxu0 %v640
      %647 = vmatprep.subr.mxu0 0.0
      %648 = vmatpush1.msra.mxu0 0.0
      %649 = vmatprep.subr.mxu0 0.0
      %650 = vmatpush1.msra.mxu0 0.0
      %651 = vmatprep.subr.mxu0 0.0
      %652 = vmatpush1.msra.mxu0 0.0
      %653 = vmatprep.subr.mxu0 0.0
      %654 = vmatpush1.msra.mxu0 0.0
      %655 = vmatprep.subr.mxu0 0.0
      %656 = vmatpush1.msra.mxu0 0.0
      %657 = vmatprep.subr.mxu0 0.0
      %658 = vmatpush1.msra.mxu0 0.0
      %659 = vmatprep.subr.mxu0 0.0
      %660 = vmatpush1.msra.mxu0 0.0
      %661 = vmatprep.subr.mxu0 0.0
      %662 = vmatpush1.msra.mxu0 0.0
      %663 = vmatprep.subr.mxu0 0.0
      %664 = vmatpush1.msra.mxu0 0.0
      %665 = vmatprep.subr.mxu0 0.0
      %666 = vmatpush1.msra.mxu0 0.0
      %667 = vmatprep.subr.mxu0 0.0
      %668 = vmatpush1.msra.mxu0 0.0
      %669 = vmatprep.subr.mxu0 0.0
      %670 = vmatpush1.msra.mxu0 0.0
      %671 = vmatprep.subr.mxu0 0.0
      %672 = vmatpush1.msra.mxu0 0.0
      %673 = vmatprep.subr.mxu0 0.0
      %674 = vmatpush1.msra.mxu0 0.0
      %675 = vmatprep.subr.mxu0 0.0
      %676 = vmatpush1.msra.mxu0 0.0
      %677 = vmatprep.subr.mxu0 0.0
      %678 = vmatpush1.msra.mxu0 0.0
      %679 = vmatprep.subr.mxu0 0.0
      %680 = vmatpush1.msra.mxu0 0.0
      %681 = vmatprep.subr.mxu0 0.0
      %682 = vmatpush1.msra.mxu0 0.0
      %683 = vmatprep.subr.mxu0 0.0
      %684 = vmatpush1.msra.mxu0 0.0
      %685 = vmatprep.subr.mxu0 0.0
      %686 = vmatpush1.msra.mxu0 0.0
      %687 = vmatprep.subr.mxu0 0.0
      %688 = vmatpush1.msra.mxu0 0.0
      %689 = vmatprep.subr.mxu0 0.0
      %690 = vmatpush1.msra.mxu0 0.0
      %691 = vmatprep.subr.mxu0 0.0
      %692 = vmatpush1.msra.mxu0 0.0
      %693 = vmatprep.subr.mxu0 0.0
      %694 = vmatpush1.msra.mxu0 0.0
      %695 = vmatprep.subr.mxu0 0.0
      %696 = vmatpush1.msra.mxu0 0.0
      %697 = vmatprep.subr.mxu0 0.0
      %698 = vmatpush1.msra.mxu0 0.0
      %699 = vmatprep.subr.mxu0 0.0
      %700 = vmatpush1.msra.mxu0 0.0
      %701 = vmatprep.subr.mxu0 0.0
      %702 = vmatpush1.msra.mxu0 0.0
      %703 = vmatprep.subr.mxu0 0.0
      %704 = vmatpush1.msra.mxu0 0.0
      %705 = vmatprep.subr.mxu0 0.0
      %706 = vmatpush1.msra.mxu0 0.0
      %707 = vmatprep.subr.mxu0 0.0
      %708 = vmatpush1.msra.mxu0 0.0
      %709 = vmatprep.mubr.f32.mxu0 0.0
      %710 = vmatmul.mubr.f32.gmra.mrb[0].mxu0 %v643
      %v711 = vpop.f32.mrb[0].mxu0
      %v712 = vadd.f32 0.0, %v711
      %v713 = vpop.f32.mrb[0].mxu0
      %714 = vdwg.mxu0
      %v715 = vadd.f32 %v636, %v712
      %716 = vst.msk [vmem:[%s629] sm:$0xff] %vm336, %v715
      %717 = vst.msk [vmem:[%s604] sm:$0xff] %vm436, %v609
      %v718 = vld [vmem:[%s281] sm:$0xff]
      %v719 = vld [vmem:[%s292] sm:$0xff]
      %721 = vrot.lane.b32.xlu0 %v718, 64
      %v722 = vpop.permute.xlu0 %721
      %724 = vrot.lane.b32.xlu0 %v719, 64
      %v725 = vpop.permute.xlu0 %724
      %v726 = vsel %vm336, %v722, 0
      %v728 = vsel %vm336, %v725, 0
      %730 = vmatprep.subr.mxu0 0.0
      %731 = vmatpush1.xpose.msra.mxu0 %v728
      %732 = vmatprep.subr.mxu0 0.0
      %733 = vmatpush1.xpose.msra.mxu0 0.0
      %734 = vmatprep.subr.mxu0 0.0
      %735 = vmatpush1.xpose.msra.mxu0 0.0
      %736 = vmatprep.subr.mxu0 0.0
      %737 = vmatpush1.xpose.msra.mxu0 0.0
      %738 = vmatprep.subr.mxu0 0.0
      %739 = vmatpush1.xpose.msra.mxu0 0.0
      %740 = vmatprep.subr.mxu0 0.0
      %741 = vmatpush1.xpose.msra.mxu0 0.0
      %742 = vmatprep.subr.mxu0 0.0
      %743 = vmatpush1.xpose.msra.mxu0 0.0
      %744 = vmatprep.subr.mxu0 0.0
      %745 = vmatpush1.xpose.msra.mxu0 0.0
      %746 = vmatprep.subr.mxu0 0.0
      %747 = vmatpush1.xpose.msra.mxu0 0.0
      %748 = vmatprep.subr.mxu0 0.0
      %749 = vmatpush1.xpose.msra.mxu0 0.0
      %750 = vmatprep.subr.mxu0 0.0
      %751 = vmatpush1.xpose.msra.mxu0 0.0
      %752 = vmatprep.subr.mxu0 0.0
      %753 = vmatpush1.xpose.msra.mxu0 0.0
      %754 = vmatprep.subr.mxu0 0.0
      %755 = vmatpush1.xpose.msra.mxu0 0.0
      %756 = vmatprep.subr.mxu0 0.0
      %757 = vmatpush1.xpose.msra.mxu0 0.0
      %758 = vmatprep.subr.mxu0 0.0
      %759 = vmatpush1.xpose.msra.mxu0 0.0
      %760 = vmatprep.subr.mxu0 0.0
      %761 = vmatpush1.xpose.msra.mxu0 0.0
      %762 = vmatprep.subr.mxu0 0.0
      %763 = vmatpush1.xpose.msra.mxu0 0.0
      %764 = vmatprep.subr.mxu0 0.0
      %765 = vmatpush1.xpose.msra.mxu0 0.0
      %766 = vmatprep.subr.mxu0 0.0
      %767 = vmatpush1.xpose.msra.mxu0 0.0
      %768 = vmatprep.subr.mxu0 0.0
      %769 = vmatpush1.xpose.msra.mxu0 0.0
      %770 = vmatprep.subr.mxu0 0.0
      %771 = vmatpush1.xpose.msra.mxu0 0.0
      %772 = vmatprep.subr.mxu0 0.0
      %773 = vmatpush1.xpose.msra.mxu0 0.0
      %774 = vmatprep.subr.mxu0 0.0
      %775 = vmatpush1.xpose.msra.mxu0 0.0
      %776 = vmatprep.subr.mxu0 0.0
      %777 = vmatpush1.xpose.msra.mxu0 0.0
      %778 = vmatprep.subr.mxu0 0.0
      %779 = vmatpush1.xpose.msra.mxu0 0.0
      %780 = vmatprep.subr.mxu0 0.0
      %781 = vmatpush1.xpose.msra.mxu0 0.0
      %782 = vmatprep.subr.mxu0 0.0
      %783 = vmatpush1.xpose.msra.mxu0 0.0
      %784 = vmatprep.subr.mxu0 0.0
      %785 = vmatpush1.xpose.msra.mxu0 0.0
      %786 = vmatprep.subr.mxu0 0.0
      %787 = vmatpush1.xpose.msra.mxu0 0.0
      %788 = vmatprep.subr.mxu0 0.0
      %789 = vmatpush1.xpose.msra.mxu0 0.0
      %790 = vmatprep.subr.mxu0 0.0
      %791 = vmatpush1.xpose.msra.mxu0 0.0
      %792 = vmatprep.subr.mxu0 0.0
      %793 = vmatpush1.xpose.msra.mxu0 0.0
      %794 = vmatprep.mubr.f32.mxu0 0.0
      %795 = vmatmul.mubr.f32.gmra.mrb[0].mxu0 %v726
      %v796 = vpop.f32.mrb[0].mxu0
      %v797 = vadd.f32 0.0, %v796
      %v798 = vpop.f32.mrb[0].mxu0
      %799 = vdwg.mxu0
      %s800 = scalar_lea.vmem [#allocation2], 16
      %v801 = vld [vmem:[%s800] sm:$0xff]
      %v802 = vsel %vm414, %v797, -inf
      %803 = vmax.xlane.f32.xlu0 %v802
      %v804 = vpop.xlane.xlu0 %803
      %v805 = vmax.f32 %v801, %v804
      %v806 = vsub.f32 %v801, %v805
      %v807 = vmul.f32 %v806, 1.442695
      %v808 = vpow.pop %v807
      %810 = vset.pattern.permute.xlu0 0
      %811 = vperm.xlu0 %810, %v805
      %v812 = vpop.permute.xlu0 %811
      %v814 = vsub.f32 %v797, %v812
      %v815 = vmul.f32 %v814, 1.442695
      %v816 = vpow.pop %v815
      %s817 = scalar_lea.vmem [#allocation3], 16
      %v818 = vld [vmem:[%s817] sm:$0xff]
      %v819 = vmul.f32 %v808, %v818
      %v820 = vsel %vm414, %v816, 0.0
      %821 = vadd.xlane.f32.xlu0 %v820
      %v822 = vpop.xlane.xlu0 %821
      %v823 = vadd.f32 %v819, %v822
      %824 = vst.msk [vmem:[%s817] sm:$0xff] %vm436, %v823
      %s825 = scalar_lea.vmem [#allocation4], 16
      %v826 = vld [vmem:[%s825] sm:$0xff]
      %828 = vset.pattern.permute.xlu0 0
      %829 = vperm.xlu0 %828, %v808
      %v830 = vpop.permute.xlu0 %829
      %v832 = vmul.f32 %v830, %v826
      %v833 = vld [vmem:[%s304] sm:$0xff]
      %835 = vrot.lane.b32.xlu0 %v833, 64
      %v836 = vpop.permute.xlu0 %835
      %v839 = vsel %vm414, %v816, 0
      %841 = vmatprep.subr.mxu0 0.0
      %842 = vmatpush1.msra.mxu0 %v836
      %843 = vmatprep.subr.mxu0 0.0
      %844 = vmatpush1.msra.mxu0 0.0
      %845 = vmatprep.subr.mxu0 0.0
      %846 = vmatpush1.msra.mxu0 0.0
      %847 = vmatprep.subr.mxu0 0.0
      %848 = vmatpush1.msra.mxu0 0.0
      %849 = vmatprep.subr.mxu0 0.0
      %850 = vmatpush1.msra.mxu0 0.0
      %851 = vmatprep.subr.mxu0 0.0
      %852 = vmatpush1.msra.mxu0 0.0
      %853 = vmatprep.subr.mxu0 0.0
      %854 = vmatpush1.msra.mxu0 0.0
      %855 = vmatprep.subr.mxu0 0.0
      %856 = vmatpush1.msra.mxu0 0.0
      %857 = vmatprep.subr.mxu0 0.0
      %858 = vmatpush1.msra.mxu0 0.0
      %859 = vmatprep.subr.mxu0 0.0
      %860 = vmatpush1.msra.mxu0 0.0
      %861 = vmatprep.subr.mxu0 0.0
      %862 = vmatpush1.msra.mxu0 0.0
      %863 = vmatprep.subr.mxu0 0.0
      %864 = vmatpush1.msra.mxu0 0.0
      %865 = vmatprep.subr.mxu0 0.0
      %866 = vmatpush1.msra.mxu0 0.0
      %867 = vmatprep.subr.mxu0 0.0
      %868 = vmatpush1.msra.mxu0 0.0
      %869 = vmatprep.subr.mxu0 0.0
      %870 = vmatpush1.msra.mxu0 0.0
      %871 = vmatprep.subr.mxu0 0.0
      %872 = vmatpush1.msra.mxu0 0.0
      %873 = vmatprep.subr.mxu0 0.0
      %874 = vmatpush1.msra.mxu0 0.0
      %875 = vmatprep.subr.mxu0 0.0
      %876 = vmatpush1.msra.mxu0 0.0
      %877 = vmatprep.subr.mxu0 0.0
      %878 = vmatpush1.msra.mxu0 0.0
      %879 = vmatprep.subr.mxu0 0.0
      %880 = vmatpush1.msra.mxu0 0.0
      %881 = vmatprep.subr.mxu0 0.0
      %882 = vmatpush1.msra.mxu0 0.0
      %883 = vmatprep.subr.mxu0 0.0
      %884 = vmatpush1.msra.mxu0 0.0
      %885 = vmatprep.subr.mxu0 0.0
      %886 = vmatpush1.msra.mxu0 0.0
      %887 = vmatprep.subr.mxu0 0.0
      %888 = vmatpush1.msra.mxu0 0.0
      %889 = vmatprep.subr.mxu0 0.0
      %890 = vmatpush1.msra.mxu0 0.0
      %891 = vmatprep.subr.mxu0 0.0
      %892 = vmatpush1.msra.mxu0 0.0
      %893 = vmatprep.subr.mxu0 0.0
      %894 = vmatpush1.msra.mxu0 0.0
      %895 = vmatprep.subr.mxu0 0.0
      %896 = vmatpush1.msra.mxu0 0.0
      %897 = vmatprep.subr.mxu0 0.0
      %898 = vmatpush1.msra.mxu0 0.0
      %899 = vmatprep.subr.mxu0 0.0
      %900 = vmatpush1.msra.mxu0 0.0
      %901 = vmatprep.subr.mxu0 0.0
      %902 = vmatpush1.msra.mxu0 0.0
      %903 = vmatprep.subr.mxu0 0.0
      %904 = vmatpush1.msra.mxu0 0.0
      %905 = vmatprep.mubr.f32.mxu0 0.0
      %906 = vmatmul.mubr.f32.gmra.mrb[0].mxu0 %v839
      %v907 = vpop.f32.mrb[0].mxu0
      %v908 = vadd.f32 0.0, %v907
      %v909 = vpop.f32.mrb[0].mxu0
      %910 = vdwg.mxu0
      %v911 = vadd.f32 %v832, %v908
      %912 = vst.msk [vmem:[%s825] sm:$0xff] %vm336, %v911
      %913 = vst.msk [vmem:[%s800] sm:$0xff] %vm436, %v805
      %v914 = vld [vmem:[%s281] sm:$0xff]
      %v915 = vld [vmem:[%s292] sm:$0xff]
      %917 = vrot.lane.b32.xlu0 %v914, 32
      %v918 = vpop.permute.xlu0 %917
      %920 = vrot.lane.b32.xlu0 %v915, 32
      %v921 = vpop.permute.xlu0 %920
      %v922 = vsel %vm336, %v918, 0
      %v924 = vsel %vm336, %v921, 0
      %926 = vmatprep.subr.mxu0 0.0
      %927 = vmatpush1.xpose.msra.mxu0 %v924
      %928 = vmatprep.subr.mxu0 0.0
      %929 = vmatpush1.xpose.msra.mxu0 0.0
      %930 = vmatprep.subr.mxu0 0.0
      %931 = vmatpush1.xpose.msra.mxu0 0.0
      %932 = vmatprep.subr.mxu0 0.0
      %933 = vmatpush1.xpose.msra.mxu0 0.0
      %934 = vmatprep.subr.mxu0 0.0
      %935 = vmatpush1.xpose.msra.mxu0 0.0
      %936 = vmatprep.subr.mxu0 0.0
      %937 = vmatpush1.xpose.msra.mxu0 0.0
      %938 = vmatprep.subr.mxu0 0.0
      %939 = vmatpush1.xpose.msra.mxu0 0.0
      %940 = vmatprep.subr.mxu0 0.0
      %941 = vmatpush1.xpose.msra.mxu0 0.0
      %942 = vmatprep.subr.mxu0 0.0
      %943 = vmatpush1.xpose.msra.mxu0 0.0
      %944 = vmatprep.subr.mxu0 0.0
      %945 = vmatpush1.xpose.msra.mxu0 0.0
      %946 = vmatprep.subr.mxu0 0.0
      %947 = vmatpush1.xpose.msra.mxu0 0.0
      %948 = vmatprep.subr.mxu0 0.0
      %949 = vmatpush1.xpose.msra.mxu0 0.0
      %950 = vmatprep.subr.mxu0 0.0
      %951 = vmatpush1.xpose.msra.mxu0 0.0
      %952 = vmatprep.subr.mxu0 0.0
      %953 = vmatpush1.xpose.msra.mxu0 0.0
      %954 = vmatprep.subr.mxu0 0.0
      %955 = vmatpush1.xpose.msra.mxu0 0.0
      %956 = vmatprep.subr.mxu0 0.0
      %957 = vmatpush1.xpose.msra.mxu0 0.0
      %958 = vmatprep.subr.mxu0 0.0
      %959 = vmatpush1.xpose.msra.mxu0 0.0
      %960 = vmatprep.subr.mxu0 0.0
      %961 = vmatpush1.xpose.msra.mxu0 0.0
      %962 = vmatprep.subr.mxu0 0.0
      %963 = vmatpush1.xpose.msra.mxu0 0.0
      %964 = vmatprep.subr.mxu0 0.0
      %965 = vmatpush1.xpose.msra.mxu0 0.0
      %966 = vmatprep.subr.mxu0 0.0
      %967 = vmatpush1.xpose.msra.mxu0 0.0
      %968 = vmatprep.subr.mxu0 0.0
      %969 = vmatpush1.xpose.msra.mxu0 0.0
      %970 = vmatprep.subr.mxu0 0.0
      %971 = vmatpush1.xpose.msra.mxu0 0.0
      %972 = vmatprep.subr.mxu0 0.0
      %973 = vmatpush1.xpose.msra.mxu0 0.0
      %974 = vmatprep.subr.mxu0 0.0
      %975 = vmatpush1.xpose.msra.mxu0 0.0
      %976 = vmatprep.subr.mxu0 0.0
      %977 = vmatpush1.xpose.msra.mxu0 0.0
      %978 = vmatprep.subr.mxu0 0.0
      %979 = vmatpush1.xpose.msra.mxu0 0.0
      %980 = vmatprep.subr.mxu0 0.0
      %981 = vmatpush1.xpose.msra.mxu0 0.0
      %982 = vmatprep.subr.mxu0 0.0
      %983 = vmatpush1.xpose.msra.mxu0 0.0
      %984 = vmatprep.subr.mxu0 0.0
      %985 = vmatpush1.xpose.msra.mxu0 0.0
      %986 = vmatprep.subr.mxu0 0.0
      %987 = vmatpush1.xpose.msra.mxu0 0.0
      %988 = vmatprep.subr.mxu0 0.0
      %989 = vmatpush1.xpose.msra.mxu0 0.0
      %990 = vmatprep.mubr.f32.mxu0 0.0
      %991 = vmatmul.mubr.f32.gmra.mrb[0].mxu0 %v922
      %v992 = vpop.f32.mrb[0].mxu0
      %v993 = vadd.f32 0.0, %v992
      %v994 = vpop.f32.mrb[0].mxu0
      %995 = vdwg.mxu0
      %s996 = scalar_lea.vmem [#allocation2], 24
      %v997 = vld [vmem:[%s996] sm:$0xff]
      %v998 = vsel %vm414, %v993, -inf
      %999 = vmax.xlane.f32.xlu0 %v998
      %v1000 = vpop.xlane.xlu0 %999
      %v1001 = vmax.f32 %v997, %v1000
      %v1002 = vsub.f32 %v997, %v1001
      %v1003 = vmul.f32 %v1002, 1.442695
      %v1004 = vpow.pop %v1003
      %1006 = vset.pattern.permute.xlu0 0
      %1007 = vperm.xlu0 %1006, %v1001
      %v1008 = vpop.permute.xlu0 %1007
      %v1010 = vsub.f32 %v993, %v1008
      %v1011 = vmul.f32 %v1010, 1.442695
      %v1012 = vpow.pop %v1011
      %s1013 = scalar_lea.vmem [#allocation3], 24
      %v1014 = vld [vmem:[%s1013] sm:$0xff]
      %v1015 = vmul.f32 %v1004, %v1014
      %v1016 = vsel %vm414, %v1012, 0.0
      %1017 = vadd.xlane.f32.xlu0 %v1016
      %v1018 = vpop.xlane.xlu0 %1017
      %v1019 = vadd.f32 %v1015, %v1018
      %1020 = vst.msk [vmem:[%s1013] sm:$0xff] %vm436, %v1019
      %s1021 = scalar_lea.vmem [#allocation4], 24
      %v1022 = vld [vmem:[%s1021] sm:$0xff]
      %1024 = vset.pattern.permute.xlu0 0
      %1025 = vperm.xlu0 %1024, %v1004
      %v1026 = vpop.permute.xlu0 %1025
      %v1028 = vmul.f32 %v1026, %v1022
      %v1029 = vld [vmem:[%s304] sm:$0xff]
      %1031 = vrot.lane.b32.xlu0 %v1029, 32
      %v1032 = vpop.permute.xlu0 %1031
      %v1035 = vsel %vm414, %v1012, 0
      %1037 = vmatprep.subr.mxu0 0.0
      %1038 = vmatpush1.msra.mxu0 %v1032
      %1039 = vmatprep.subr.mxu0 0.0
      %1040 = vmatpush1.msra.mxu0 0.0
      %1041 = vmatprep.subr.mxu0 0.0
      %1042 = vmatpush1.msra.mxu0 0.0
      %1043 = vmatprep.subr.mxu0 0.0
      %1044 = vmatpush1.msra.mxu0 0.0
      %1045 = vmatprep.subr.mxu0 0.0
      %1046 = vmatpush1.msra.mxu0 0.0
      %1047 = vmatprep.subr.mxu0 0.0
      %1048 = vmatpush1.msra.mxu0 0.0
      %1049 = vmatprep.subr.mxu0 0.0
      %1050 = vmatpush1.msra.mxu0 0.0
      %1051 = vmatprep.subr.mxu0 0.0
      %1052 = vmatpush1.msra.mxu0 0.0
      %1053 = vmatprep.subr.mxu0 0.0
      %1054 = vmatpush1.msra.mxu0 0.0
      %1055 = vmatprep.subr.mxu0 0.0
      %1056 = vmatpush1.msra.mxu0 0.0
      %1057 = vmatprep.subr.mxu0 0.0
      %1058 = vmatpush1.msra.mxu0 0.0
      %1059 = vmatprep.subr.mxu0 0.0
      %1060 = vmatpush1.msra.mxu0 0.0
      %1061 = vmatprep.subr.mxu0 0.0
      %1062 = vmatpush1.msra.mxu0 0.0
      %1063 = vmatprep.subr.mxu0 0.0
      %1064 = vmatpush1.msra.mxu0 0.0
      %1065 = vmatprep.subr.mxu0 0.0
      %1066 = vmatpush1.msra.mxu0 0.0
      %1067 = vmatprep.subr.mxu0 0.0
      %1068 = vmatpush1.msra.mxu0 0.0
      %1069 = vmatprep.subr.mxu0 0.0
      %1070 = vmatpush1.msra.mxu0 0.0
      %1071 = vmatprep.subr.mxu0 0.0
      %1072 = vmatpush1.msra.mxu0 0.0
      %1073 = vmatprep.subr.mxu0 0.0
      %1074 = vmatpush1.msra.mxu0 0.0
      %1075 = vmatprep.subr.mxu0 0.0
      %1076 = vmatpush1.msra.mxu0 0.0
      %1077 = vmatprep.subr.mxu0 0.0
      %1078 = vmatpush1.msra.mxu0 0.0
      %1079 = vmatprep.subr.mxu0 0.0
      %1080 = vmatpush1.msra.mxu0 0.0
      %1081 = vmatprep.subr.mxu0 0.0
      %1082 = vmatpush1.msra.mxu0 0.0
      %1083 = vmatprep.subr.mxu0 0.0
      %1084 = vmatpush1.msra.mxu0 0.0
      %1085 = vmatprep.subr.mxu0 0.0
      %1086 = vmatpush1.msra.mxu0 0.0
      %1087 = vmatprep.subr.mxu0 0.0
      %1088 = vmatpush1.msra.mxu0 0.0
      %1089 = vmatprep.subr.mxu0 0.0
      %1090 = vmatpush1.msra.mxu0 0.0
      %1091 = vmatprep.subr.mxu0 0.0
      %1092 = vmatpush1.msra.mxu0 0.0
      %1093 = vmatprep.subr.mxu0 0.0
      %1094 = vmatpush1.msra.mxu0 0.0
      %1095 = vmatprep.subr.mxu0 0.0
      %1096 = vmatpush1.msra.mxu0 0.0
      %1097 = vmatprep.subr.mxu0 0.0
      %1098 = vmatpush1.msra.mxu0 0.0
      %1099 = vmatprep.subr.mxu0 0.0
      %1100 = vmatpush1.msra.mxu0 0.0
      %1101 = vmatprep.mubr.f32.mxu0 0.0
      %1102 = vmatmul.mubr.f32.gmra.mrb[0].mxu0 %v1035
      %v1103 = vpop.f32.mrb[0].mxu0
      %v1104 = vadd.f32 0.0, %v1103
      %v1105 = vpop.f32.mrb[0].mxu0
      %1106 = vdwg.mxu0
      %v1107 = vadd.f32 %v1028, %v1104
      %1108 = vst.msk [vmem:[%s1021] sm:$0xff] %vm336, %v1107
      %1109 = vst.msk [vmem:[%s996] sm:$0xff] %vm436, %v1001
      // Predicated region
      $region37: #{transformer_encoder_block.5} parent=31 // pred_check
        %p1110 = pneg %p316
      $region38: #{transformer_encoder_block.5} parent=31 // pred_check_branch
        %1112 = sbr.rel (%p1110) target = $region40
      $region39: #{transformer_encoder_block.5} parent=31 // pred_region
        %v1113 = vld [vmem:[#allocation3] sm:$0xff]
        %v1114 = vrcp.pop %v1113
        %v1115 = vld [vmem:[#allocation4] sm:$0xff]
        %1117 = vset.pattern.permute.xlu0 0
        %1118 = vperm.xlu0 %1117, %v1114
        %v1119 = vpop.permute.xlu0 %1118
        %v1121 = vmul.f32 %v1115, %v1119
        %1122 = vst.msk [vmem:[%s314] sm:$0xff] %vm336, %v1121
        %v1123 = vld [vmem:[%s621] sm:$0xff]
        %v1124 = vrcp.pop %v1123
        %v1125 = vld [vmem:[%s629] sm:$0xff]
        %1127 = vset.pattern.permute.xlu0 0
        %1128 = vperm.xlu0 %1127, %v1124
        %v1129 = vpop.permute.xlu0 %1128
        %v1131 = vmul.f32 %v1125, %v1129
        %1133 = vrot.lane.b32.xlu0 %v1131, 32
        %v1134 = vpop.permute.xlu0 %1133
        %vm1136 = vcmask 523520
        %1137 = vst.msk [vmem:[%s314] sm:$0xff] %vm1136, %v1134
        %v1138 = vld [vmem:[%s817] sm:$0xff]
        %v1139 = vrcp.pop %v1138
        %v1140 = vld [vmem:[%s825] sm:$0xff]
        %1142 = vset.pattern.permute.xlu0 0
        %1143 = vperm.xlu0 %1142, %v1139
        %v1144 = vpop.permute.xlu0 %1143
        %v1146 = vmul.f32 %v1140, %v1144
        %1148 = vrot.lane.b32.xlu0 %v1146, 64
        %v1149 = vpop.permute.xlu0 %1148
        %vm1151 = vcmask 785920
        %1152 = vst.msk [vmem:[%s314] sm:$0xff] %vm1151, %v1149
        %v1153 = vld [vmem:[%s1013] sm:$0xff]
        %v1154 = vrcp.pop %v1153
        %v1155 = vld [vmem:[%s1021] sm:$0xff]
        %1157 = vset.pattern.permute.xlu0 0
        %1158 = vperm.xlu0 %1157, %v1154
        %v1159 = vpop.permute.xlu0 %1158
        %v1161 = vmul.f32 %v1155, %v1159
        %1163 = vrot.lane.b32.xlu0 %v1161, 96
        %v1164 = vpop.permute.xlu0 %1163
        %vm1166 = vcmask 1048320
        %1167 = vst.msk [vmem:[%s314] sm:$0xff] %vm1166, %v1164
      $region40: #{transformer_encoder_block.5} parent=31 // pred_fallthru
        _
      %s1168 = sadd.s32 %s20, %s22
      %p1169 = scmp.lt.s32.totalorder %s1168, 1
      %s1170 = scalar_select %p1169, %s1168, 1
      %p1171 = scmp.lt.s32.totalorder %s21, 0
      %s1172 = scalar_select %p1171, %s21, 0
      %s1173 = sadd.s32 %s1172, %s1170
      %s1174 = smul.addr %s1173, 8
      %s1175 = scalar_lea.vmem %s3, %s1174
      // Predicated region
      $region41: #{transformer_encoder_block.5} parent=31 // pred_check
        %p1176 = pneg %p156
      $region42: #{transformer_encoder_block.5} parent=31 // pred_check_branch
        %1178 = sbr.rel (%p1176) target = $region44
      $region43: #{transformer_encoder_block.5} parent=31 // pred_region
        %s1179 = sadd.s32 %s20, %s22
      $region44: #{transformer_encoder_block.5} parent=31 // pred_fallthru
        _
    $region32: #{transformer_encoder_block.5} parent=5 // pred_fallthru
      _
    %p1180 = scmp.le.s32.totalorder 2, %s9
    // Predicated region
    $region45: #{transformer_encoder_block.5} parent=5 // pred_check
      %p1181 = pneg %p1180
    $region46: #{transformer_encoder_block.5} parent=5 // pred_check_branch
      %1183 = sbr.rel (%p1181) target = $region48
    $region47: #{transformer_encoder_block.5} parent=5 // pred_region
      %s1184 = ssub.s32 %s9, 2
      // Predicated region
      $region49: #{transformer_encoder_block.5} parent=47 // pred_check
        %p1185 = pneg %p162
      $region50: #{transformer_encoder_block.5} parent=47 // pred_check_branch
        %1187 = sbr.rel (%p1185) target = $region52
      $region51: #{transformer_encoder_block.5} parent=47 // pred_region
        %s1188 = sadd.s32 %s24, %s26
        %p1189 = scmp.lt.s32.totalorder %s1188, 1
        %s1190 = scalar_select %p1189, %s1188, 1
        %p1191 = scmp.lt.s32.totalorder %s25, 0
        %s1192 = scalar_select %p1191, %s25, 0
        %s1193 = sadd.s32 %s1192, %s1190
        %s1194 = smul.addr %s1193, 8
        %s1195 = scalar_lea.vmem %s3, %s1194
      $region52: #{transformer_encoder_block.5} parent=47 // pred_fallthru
        _
    $region48: #{transformer_encoder_block.5} parent=5 // pred_fallthru
      _
  $region6: #{transformer_encoder_block.5} parent=0 // loop_footer
    %s13 = sadd.s32 1, %s9
  $region7: #{transformer_encoder_block.5} parent=0 // loop_footer_branch
    %8 = sbr.rel target = $region3
  $region8: #{transformer_encoder_block.5} parent=0 // loop_exit
    _

</llo_original>
